<compile_context>
chip_gen: v5e
topology: v5e:2x2
jax: 0.10.0
libtpu: 0.0.40
codegen_flags: <defaults>
</compile_context>

<pallas_src>
import functools

import jax
import jax.numpy as jnp
from jax import lax
from jax.experimental import pallas as pl
from jax.experimental.pallas import tpu as pltpu


# ---------------------------------------------------------------------------
# Kernel 1: SRU (GroupNorm + gating + channel shuffle) fused with cv1 / cv2.
# One grid step per batch element (GroupNorm needs full per-batch spatial
# statistics).  The shuffle xs = cat(x1[:, :h]+x2[:, h:], x1[:, h:]+x2[:, :h])
# and the split xs -> (xup, xlow) are folded into the 4 weight matrices
# wa_up / wb_up / wa_lo / wb_lo, so the epilogue is just 4 MXU matmuls.
# ---------------------------------------------------------------------------
def _sru_cv_kernel(x_ref, gnw_ref, gnb_ref, wn_ref, gmat_ref,
                   wa_up_ref, wb_up_ref, wa_lo_ref, wb_lo_ref,
                   xup2p_ref, xlow2_ref, *, eps, threshold):
    x = x_ref[0].astype(jnp.float32)                         # (HW, C)
    hw = x.shape[0]

    # Group stats: one small (2,C)x(C,C) dot (gmat averages within a group).
    ss = jnp.concatenate(
        [jnp.sum(x, axis=0, keepdims=True),
         jnp.sum(x * x, axis=0, keepdims=True)], axis=0) * (1.0 / hw)  # (2, C)
    stats = jnp.dot(ss, gmat_ref[...], preferred_element_type=jnp.float32)
    mean_c = stats[0:1, :]
    var_c = jnp.maximum(stats[1:2, :] - mean_c * mean_c, 0.0)  # clamp >= 0
    inv_c = lax.rsqrt(var_c + eps)

    y = (x - mean_c) * (inv_c * gnw_ref[...]) + gnb_ref[...]   # GroupNorm(x)
    gate = jax.nn.sigmoid(wn_ref[...] * y)
    hi = gate > threshold
    md = wa_up_ref.dtype
    x1 = (x * jnp.where(hi, 1.0, gate)).astype(md)
    x2 = (x * jnp.where(hi, 0.0, gate)).astype(md)

    xup2 = (jnp.dot(x1, wa_up_ref[...], preferred_element_type=jnp.float32)
            + jnp.dot(x2, wb_up_ref[...], preferred_element_type=jnp.float32))
    xlow2 = (jnp.dot(x1, wa_lo_ref[...], preferred_element_type=jnp.float32)
             + jnp.dot(x2, wb_lo_ref[...], preferred_element_type=jnp.float32))

    # Emit xup2 already row-padded (zero image rows top & bottom) for kernel 2.
    pad0 = (xup2p_ref.shape[1] - hw) // 2
    xup2p_ref[0] = jnp.zeros(xup2p_ref.shape[1:], xup2p_ref.dtype)
    xup2p_ref[0, pad0:pad0 + hw, :] = xup2.astype(xup2p_ref.dtype)
    xlow2_ref[0] = xlow2.astype(xlow2_ref.dtype)


# ---------------------------------------------------------------------------
# Kernel 2: y1 = grouped kxk conv (dense block-diagonal weight) + pwc1 + bias.
# Row-tiled over the output; the whole row-padded xup2 image for a batch stays
# resident in VMEM (its block index does not change along the tile axis), and
# the k*k taps are accumulated as shifted matmuls using pl.ds offsets along the
# flattened HW axis with static column masks at image-width boundaries.
# pwc1 is pre-folded into the centre tap.
# ---------------------------------------------------------------------------
def _y1_kernel(xp_ref, wtap_ref, bias_ref, y1_ref, *, W, TH, k):
    p = k // 2
    n = TH * W
    c = y1_ref.shape[-1]
    md = wtap_ref.dtype
    r0 = pl.program_id(1) * TH                               # first output row
    col = lax.broadcasted_iota(jnp.int32, (n, 1), 0) % W     # output column id

    acc = jnp.zeros((n, c), jnp.float32) + bias_ref[...]
    for dy in range(k):                                      # static k*k unroll
        for dx in range(k):
            start = (r0 + dy + 1) * W + (dx - p)             # row-padded offset
            slab = xp_ref[0, pl.ds(start, n), :]             # (n, ca_e)
            lo, hi = p - dx, W + p - dx                      # valid out columns
            if lo > 0 or hi < W:
                valid = jnp.logical_and(col >= lo, col < hi)
                slab = jnp.where(valid, slab, jnp.zeros_like(slab))
            acc = acc + jnp.dot(slab.astype(md), wtap_ref[dy * k + dx],
                                preferred_element_type=jnp.float32)
    y1_ref[0] = acc.astype(y1_ref.dtype)


# ---------------------------------------------------------------------------
# Kernel 3: y2 construction + softmax fuse.  y2 = [xlow2 | xlow2 @ pwc2^T] is
# a single matmul against an eye-augmented weight (no concat, no HBM y2).
# softmax over the {y1, y2} pair collapses to a sigmoid of the pooled diff.
# ---------------------------------------------------------------------------
def _fuse_kernel(y1_ref, xlow2_ref, wy2_ref, o_ref):
    y1 = y1_ref[0].astype(jnp.float32)                       # (HW, C)
    xl = xlow2_ref[0]
    y2 = jnp.dot(xl.astype(wy2_ref.dtype), wy2_ref[...],
                 preferred_element_type=jnp.float32)          # (HW, C)
    s1 = jnp.mean(y1, axis=0, keepdims=True)                  # adaptive avg pool
    s2 = jnp.mean(y2, axis=0, keepdims=True)
    b1 = jax.nn.sigmoid(s1 - s2)                              # softmax pair
    o_ref[0] = (y1 * b1 + y2 * (1.0 - b1)).astype(o_ref.dtype)


# ---------------------------------------------------------------------------
# One-time weight preparation (outside the hot forward path).
# ---------------------------------------------------------------------------
def prepare_scconv_weights(params, *, c, k=3, e=0.5, a=0.5, g=(4, 2),
                           compute_dtype=jnp.float32):
    G, g2 = g
    ca = int(c * a)
    c1a = c - ca
    ca_e = int(ca * e)
    c1a_e = int(c1a * e)
    h = c // 2
    cpg = c // G
    f32 = jnp.float32
    md = compute_dtype

    gn_w = params['gn_w'].reshape(1, c).astype(f32)
    gn_b = params['gn_b'].reshape(1, c).astype(f32)
    wn = gn_w / jnp.sum(gn_w)

    # (C, C) group-averaging matrix: 1/cpg within a group (spatial 1/HW is
    # applied in-kernel so this is shape-independent).
    ci = jnp.arange(c)
    gmat = ((ci[:, None] // cpg) == (ci[None, :] // cpg)).astype(f32) / cpg

    # Channel shuffle + split folded into cv1/cv2 weights:
    #   xs = x1 + rot(x2, h);  xup2 = xs[:, :ca] @ W1T;  xlow2 = xs[:, ca:] @ W2T
    W1T = params['w_cv1'].T.astype(f32)                       # (ca, ca_e)
    W2T = params['w_cv2'].T.astype(f32)                       # (c1a, c1a_e)
    wa_up = jnp.concatenate([W1T, jnp.zeros((c - ca, ca_e), f32)], axis=0)
    wa_lo = jnp.concatenate([jnp.zeros((ca, c1a_e), f32), W2T], axis=0)
    wb_up = jnp.roll(wa_up, shift=h, axis=0)
    wb_lo = jnp.roll(wa_lo, shift=h, axis=0)

    # Grouped kxk conv -> dense block-diagonal per-tap weights (ca_e, C);
    # pwc1 folded into the centre tap.
    cout_pg = c // g2
    cin_pg = ca_e // g2
    w_full = jnp.zeros((c, ca_e, k, k), f32)
    for gi in range(g2):
        w_full = w_full.at[gi * cout_pg:(gi + 1) * cout_pg,
                           gi * cin_pg:(gi + 1) * cin_pg].set(
            params['w_gwc'][gi * cout_pg:(gi + 1) * cout_pg].astype(f32))
    w_taps = jnp.transpose(w_full, (2, 3, 1, 0)).reshape(k * k, ca_e, c)
    centre = (k // 2) * k + (k // 2)
    w_taps = w_taps.at[centre].add(params['w_pwc1'].T.astype(f32))

    # y2 = [xlow2 | xlow2 @ pwc2^T] == xlow2 @ [I | pwc2^T]
    w_y2 = jnp.concatenate([jnp.eye(c1a_e, dtype=f32),
                            params['w_pwc2'].T.astype(f32)], axis=1)

    return {
        'gn_w': gn_w, 'gn_b': gn_b, 'wn': wn, 'gmat': gmat,
        'wa_up': wa_up.astype(md), 'wb_up': wb_up.astype(md),
        'wa_lo': wa_lo.astype(md), 'wb_lo': wb_lo.astype(md),
        'w_taps': w_taps.astype(md),
        'b_gwc': params['b_gwc'].reshape(1, c).astype(f32),
        'w_y2': w_y2.astype(md),
    }


def _pick_tile_h(H, W, target_rows):
    """Largest TH dividing H with TH*W <= target_rows and (TH*W) % 8 == 0."""
    if H * W <= target_rows:
        return H
    for d in range(H, 0, -1):
        if H % d == 0 and d * W <= target_rows and (d * W) % 8 == 0:
            return d
    return H


# ---------------------------------------------------------------------------
# Full SCConv forward.  x is NCHW (like the PyTorch module); channels-last /
# flattened-spatial transposes at the boundary are pure layout glue.
# ---------------------------------------------------------------------------
def scconv_forward(x_nchw, prep, *, threshold=0.5, eps=1e-5, tile_rows=512):
    B, C, H, W = x_nchw.shape
    assert C % 2 == 0
    HW = H * W
    ca_e = prep['wa_up'].shape[1]
    c1a_e = prep['wa_lo'].shape[1]
    act_dtype = prep['wa_up'].dtype
    k = int(round(prep['w_taps'].shape[0] ** 0.5))
    pad_rows = k // 2 + 1
    Lp = (H + 2 * pad_rows) * W

    x = jnp.transpose(x_nchw, (0, 2, 3, 1)).reshape(B, HW, C)

    # ---- K1: SRU + cv1/cv2 (xs never hits HBM; xup2 emitted row-padded) ----
    kern1 = functools.partial(_sru_cv_kernel, eps=eps, threshold=threshold)
    xup2p, xlow2 = pl.pallas_call(
        kern1,
        out_shape=(jax.ShapeDtypeStruct((B, Lp, ca_e), act_dtype),
                   jax.ShapeDtypeStruct((B, HW, c1a_e), act_dtype)),
        grid=(B,),
        in_specs=[pl.BlockSpec((1, HW, C), lambda b: (b, 0, 0)),
                  pl.BlockSpec((1, C), lambda b: (0, 0)),        # gn_w
                  pl.BlockSpec((1, C), lambda b: (0, 0)),        # gn_b
                  pl.BlockSpec((1, C), lambda b: (0, 0)),        # wn
                  pl.BlockSpec((C, C), lambda b: (0, 0)),        # gmat
                  pl.BlockSpec((C, ca_e), lambda b: (0, 0)),     # wa_up
                  pl.BlockSpec((C, ca_e), lambda b: (0, 0)),     # wb_up
                  pl.BlockSpec((C, c1a_e), lambda b: (0, 0)),    # wa_lo
                  pl.BlockSpec((C, c1a_e), lambda b: (0, 0))],   # wb_lo
        out_specs=(pl.BlockSpec((1, Lp, ca_e), lambda b: (b, 0, 0)),
                   pl.BlockSpec((1, HW, c1a_e), lambda b: (b, 0, 0))),
        compiler_params=pltpu.CompilerParams(dimension_semantics=("parallel",)),
    )(x, prep['gn_w'], prep['gn_b'], prep['wn'], prep['gmat'],
      prep['wa_up'], prep['wb_up'], prep['wa_lo'], prep['wb_lo'])

    # ---- K2: grouped kxk conv + pwc1 + bias, row-tiled, no im2col ----
    TH = _pick_tile_h(H, W, tile_rows)
    n_tiles = H // TH
    kern2 = functools.partial(_y1_kernel, W=W, TH=TH, k=k)
    y1 = pl.pallas_call(
        kern2,
        out_shape=jax.ShapeDtypeStruct((B, HW, C), act_dtype),
        grid=(B, n_tiles),
        in_specs=[pl.BlockSpec((1, Lp, ca_e), lambda b, t: (b, 0, 0)),
                  pl.BlockSpec((k * k, ca_e, C), lambda b, t: (0, 0, 0)),
                  pl.BlockSpec((1, C), lambda b, t: (0, 0))],
        out_specs=pl.BlockSpec((1, TH * W, C), lambda b, t: (b, t, 0)),
        compiler_params=pltpu.CompilerParams(
            dimension_semantics=("parallel", "parallel")),
    )(xup2p, prep['w_taps'], prep['b_gwc'])

    # ---- K3: y2 (pwc2 + concat as one matmul) + pooled-softmax fuse ----
    out = pl.pallas_call(
        _fuse_kernel,
        out_shape=jax.ShapeDtypeStruct((B, HW, C), x_nchw.dtype),
        grid=(B,),
        in_specs=[pl.BlockSpec((1, HW, C), lambda b: (b, 0, 0)),
                  pl.BlockSpec((1, HW, c1a_e), lambda b: (b, 0, 0)),
                  pl.BlockSpec((c1a_e, C), lambda b: (0, 0))],
        out_specs=pl.BlockSpec((1, HW, C), lambda b: (b, 0, 0)),
        compiler_params=pltpu.CompilerParams(dimension_semantics=("parallel",)),
    )(y1, xlow2, prep['w_y2'])

    return jnp.transpose(out.reshape(B, H, W, C), (0, 3, 1, 2))


# ---------------------------------------------------------------------------
# Deterministic parameter init (shapes from the PyTorch module __init__)
# ---------------------------------------------------------------------------
def init_params(key, c, k=3, e=0.5, a=0.5, g2=2):
    ca = int(c * a)
    c1a = c - ca
    ca_e = int(ca * e)
    c1a_e = int(c1a * e)
    ks = jax.random.split(key, 8)
    return {
        'gn_w': jax.random.uniform(ks[0], (c,), jnp.float32, 0.5, 1.5),
        'gn_b': 0.1 * jax.random.normal(ks[1], (c,), jnp.float32),
        'w_cv1': 0.2 * jax.random.normal(ks[2], (ca_e, ca), jnp.float32),
        'w_cv2': 0.2 * jax.random.normal(ks[3], (c1a_e, c1a), jnp.float32),
        'w_gwc': 0.2 * jax.random.normal(ks[4], (c, ca_e // g2, k, k),
                                         jnp.float32),
        'b_gwc': 0.1 * jax.random.normal(ks[5], (c,), jnp.float32),
        'w_pwc1': 0.2 * jax.random.normal(ks[6], (c, ca_e), jnp.float32),
        'w_pwc2': 0.2 * jax.random.normal(ks[7], (c - c1a_e, c1a_e),
                                          jnp.float32),
    }


# ---------------------------------------------------------------------------
# Pure-JAX reference (mirrors the PyTorch forward, NCHW)
# ---------------------------------------------------------------------------
def scconv_reference(x, p, *, k=3, e=0.5, a=0.5, threshold=0.5, g=(4, 2)):
    B, C, H, W = x.shape
    G = g[0]
    eps = 1e-5
    xr = x.reshape(B, G, -1)
    mean = xr.mean(axis=2, keepdims=True)
    var = ((xr - mean) ** 2).mean(axis=2, keepdims=True)
    y = ((xr - mean) / jnp.sqrt(var + eps)).reshape(B, C, H, W)
    y = y * p['gn_w'][None, :, None, None] + p['gn_b'][None, :, None, None]
    wn = (p['gn_w'] / p['gn_w'].sum())[None, :, None, None]
    gate = jax.nn.sigmoid(wn * y)
    x1 = x * jnp.where(gate > threshold, 1.0, gate)
    x2 = x * jnp.where(gate > threshold, 0.0, gate)
    half = C // 2
    xs = jnp.concatenate([x1[:, :half] + x2[:, half:],
                          x1[:, half:] + x2[:, :half]], axis=1)

    ca = int(C * a)
    xup, xlow = xs[:, :ca], xs[:, ca:]
    xup2 = jnp.einsum('oc,bchw->bohw', p['w_cv1'], xup)
    xlow2 = jnp.einsum('oc,bchw->bohw', p['w_cv2'], xlow)
    gwc = lax.conv_general_dilated(
        xup2, p['w_gwc'], (1, 1), ((1, 1), (1, 1)),
        dimension_numbers=('NCHW', 'OIHW', 'NCHW'),
        feature_group_count=g[1]) + p['b_gwc'][None, :, None, None]
    y1 = gwc + jnp.einsum('oc,bchw->bohw', p['w_pwc1'], xup2)
    y2 = jnp.concatenate(
        [xlow2, jnp.einsum('oc,bchw->bohw', p['w_pwc2'], xlow2)], axis=1)
    s1 = y1.mean(axis=(2, 3))
    s2 = y2.mean(axis=(2, 3))
    b = jax.nn.softmax(jnp.stack([s1, s2], axis=1), axis=1)
    b1 = b[:, 0][:, :, None, None]
    b2 = b[:, 1][:, :, None, None]
    return y1 * b1 + y2 * b2


if __name__ == "__main__":
    key = jax.random.PRNGKey(0)
    k_x, k_p = jax.random.split(key)
    B, C, H, W = 2, 16, 16, 16            # C must be even & divisible by g[0]
    x = jax.random.normal(k_x, (B, C, H, W), jnp.float32)
    params = init_params(k_p, C)
    ref = scconv_reference(x, params)

    # f32 path (tile_rows=128 -> 2 spatial row-tiles per batch, so the tiled
    # y1 kernel's dynamic offsets / boundary masks are actually exercised).
    prep_f32 = prepare_scconv_weights(params, c=C, compute_dtype=jnp.float32)
    fwd = jax.jit(functools.partial(scconv_forward, tile_rows=128))
    out = jax.block_until_ready(fwd(x, prep_f32))
    assert out.shape == (B, C, H, W)
    err = float(jnp.max(jnp.abs(out - ref)))
    assert err < 2e-3, f"f32 max abs diff vs reference: {err}"

    # bf16 MXU-operand path (v6e/v7x feedback): f32 accumulation, re-derived
    # (looser) tolerance since operands lose mantissa bits.
    prep_bf16 = prepare_scconv_weights(params, c=C, compute_dtype=jnp.bfloat16)
    out_bf = jax.block_until_ready(fwd(x, prep_bf16))
    tol_bf = 5e-3 + 3e-2 * float(jnp.max(jnp.abs(ref)))
    err_bf = float(jnp.max(jnp.abs(out_bf - ref)))
    assert err_bf < tol_bf, f"bf16 max abs diff vs reference: {err_bf} > {tol_bf}"

    print("KERNEL_OK")
</pallas_src>

<mosaic_0001>
module attributes {stable_mosaic.version = 11 : i64} {
  func.func @_y1_kernel(%arg0: i32, %arg1: i32, %arg2: memref<1x320x4xf32, #tpu.memory_space<vmem>>, %arg3: memref<9x4x16xf32, #tpu.memory_space<vmem>>, %arg4: memref<1x16xf32, #tpu.memory_space<vmem>>, %arg5: memref<1x128x16xf32, #tpu.memory_space<vmem>>) attributes {dimension_semantics = [#tpu.dimension_semantics<parallel>, #tpu.dimension_semantics<parallel>], iteration_bounds = array<i64: 2, 2>, scalar_prefetch = 0 : i64, scratch_operands = 0 : i64, tpu.core_type = #tpu.core_type<tc>, window_params = [{transform_indices = @transform_0, window_bounds = array<i64: 1, 320, 4>}, {pipeline_mode = #tpu.pipeline_mode<synchronous>, transform_indices = @transform_1, window_bounds = array<i64: 9, 4, 16>}, {pipeline_mode = #tpu.pipeline_mode<synchronous>, transform_indices = @transform_2, window_bounds = array<i64: 1, 16>}, {transform_indices = @transform_3, window_bounds = array<i64: 1, 128, 16>}]} {
    %c8_i32 = arith.constant 8 : i32
    %0 = arith.muli %arg1, %c8_i32 : i32
    %1 = tpu.iota {dimensions = array<i32: 0>} : vector<128x1xi32>
    %c16_i32 = arith.constant 16 : i32
    %c0_i32 = arith.constant 0 : i32
    %2 = arith.cmpi eq, %c16_i32, %c0_i32 : i32
    %c1_i32 = arith.constant 1 : i32
    %3 = arith.select %2, %c1_i32, %c16_i32 : i32
    %4 = vector.broadcast %3 : i32 to vector<128x1xi32>
    %5 = arith.remsi %1, %4 : vector<128x1xi32>
    %c0_i32_0 = arith.constant 0 : i32
    %6 = vector.broadcast %c0_i32_0 : i32 to vector<128x1xi32>
    %7 = arith.cmpi ne, %5, %6 : vector<128x1xi32>
    %c0_i32_1 = arith.constant 0 : i32
    %8 = vector.broadcast %c0_i32_1 : i32 to vector<128x1xi32>
    %9 = arith.cmpi slt, %5, %8 : vector<128x1xi32>
    %c0_i32_2 = arith.constant 0 : i32
    %10 = arith.cmpi slt, %3, %c0_i32_2 : i32
    %11 = vector.broadcast %10 : i1 to vector<128x1xi1>
    %12 = vector.broadcast %11 : vector<128x1xi1> to vector<128x1xi1>
    %13 = arith.xori %9, %12 : vector<128x1xi1>
    %14 = arith.andi %13, %7 : vector<128x1xi1>
    %15 = vector.broadcast %3 : i32 to vector<128x1xi32>
    %16 = arith.addi %5, %15 : vector<128x1xi32>
    %17 = arith.select %14, %16, %5 : vector<128x1xi1>, vector<128x1xi32>
    %cst = arith.constant 0.000000e+00 : f32
    %18 = vector.broadcast %cst : f32 to vector<128x16xf32>
    %c0 = arith.constant 0 : index
    %c0_3 = arith.constant 0 : index
    %19 = vector.load %arg4[%c0, %c0_3] : memref<1x16xf32, #tpu.memory_space<vmem>>, vector<1x16xf32>
    %20 = vector.broadcast %19 : vector<1x16xf32> to vector<128x16xf32>
    %21 = arith.addf %18, %20 : vector<128x16xf32>
    %c0_i32_4 = arith.constant 0 : i32
    %22 = arith.addi %0, %c0_i32_4 : i32
    %c1_i32_5 = arith.constant 1 : i32
    %23 = arith.addi %22, %c1_i32_5 : i32
    %c16_i32_6 = arith.constant 16 : i32
    %24 = arith.muli %23, %c16_i32_6 : i32
    %c-1_i32 = arith.constant -1 : i32
    %25 = arith.addi %24, %c-1_i32 : i32
    %c0_7 = arith.constant 0 : index
    %26 = arith.index_cast %25 : i32 to index
    %c0_8 = arith.constant 0 : index
    %27 = vector.load %arg2[%c0_7, %26, %c0_8] : memref<1x320x4xf32, #tpu.memory_space<vmem>>, vector<1x128x4xf32>
    %28 = vector.shape_cast %27 : vector<1x128x4xf32> to vector<128x4xf32>
    %c1_i32_9 = arith.constant 1 : i32
    %29 = vector.broadcast %c1_i32_9 : i32 to vector<128x1xi32>
    %30 = arith.cmpi sge, %17, %29 : vector<128x1xi32>
    %c17_i32 = arith.constant 17 : i32
    %31 = vector.broadcast %c17_i32 : i32 to vector<128x1xi32>
    %32 = arith.cmpi slt, %17, %31 : vector<128x1xi32>
    %33 = arith.andi %30, %32 : vector<128x1xi1>
    %cst_10 = arith.constant 0.000000e+00 : f32
    %34 = vector.broadcast %cst_10 : f32 to vector<128x4xf32>
    %35 = vector.shape_cast %33 : vector<128x1xi1> to vector<128x1xi1>
    %36 = vector.broadcast %35 : vector<128x1xi1> to vector<128x4xi1>
    %37 = arith.select %36, %28, %34 : vector<128x4xi1>, vector<128x4xf32>
    %c0_11 = arith.constant 0 : index
    %c0_12 = arith.constant 0 : index
    %c0_13 = arith.constant 0 : index
    %38 = vector.load %arg3[%c0_11, %c0_12, %c0_13] : memref<9x4x16xf32, #tpu.memory_space<vmem>>, vector<1x4x16xf32>
    %39 = vector.shape_cast %38 : vector<1x4x16xf32> to vector<4x16xf32>
    %cst_14 = arith.constant dense<0.000000e+00> : vector<128x16xf32>
    %40 = tpu.matmul %37, %39, %cst_14 {dimension_numbers = #tpu.dot_dimension_numbers<[1], [0], [0], [1], [0, 0, 1, 1], [], []>} : vector<128x4xf32>, vector<4x16xf32>, vector<128x16xf32> -> vector<128x16xf32>
    %41 = arith.addf %21, %40 : vector<128x16xf32>
    %c0_i32_15 = arith.constant 0 : i32
    %42 = arith.addi %0, %c0_i32_15 : i32
    %c1_i32_16 = arith.constant 1 : i32
    %43 = arith.addi %42, %c1_i32_16 : i32
    %c16_i32_17 = arith.constant 16 : i32
    %44 = arith.muli %43, %c16_i32_17 : i32
    %c0_i32_18 = arith.constant 0 : i32
    %45 = arith.addi %44, %c0_i32_18 : i32
    %c0_19 = arith.constant 0 : index
    %46 = arith.index_cast %45 : i32 to index
    %c0_20 = arith.constant 0 : index
    %47 = vector.load %arg2[%c0_19, %46, %c0_20] : memref<1x320x4xf32, #tpu.memory_space<vmem>>, vector<1x128x4xf32>
    %48 = vector.shape_cast %47 : vector<1x128x4xf32> to vector<128x4xf32>
    %c1 = arith.constant 1 : index
    %c0_21 = arith.constant 0 : index
    %c0_22 = arith.constant 0 : index
    %49 = vector.load %arg3[%c1, %c0_21, %c0_22] : memref<9x4x16xf32, #tpu.memory_space<vmem>>, vector<1x4x16xf32>
    %50 = vector.shape_cast %49 : vector<1x4x16xf32> to vector<4x16xf32>
    %cst_23 = arith.constant dense<0.000000e+00> : vector<128x16xf32>
    %51 = tpu.matmul %48, %50, %cst_23 {dimension_numbers = #tpu.dot_dimension_numbers<[1], [0], [0], [1], [0, 0, 1, 1], [], []>} : vector<128x4xf32>, vector<4x16xf32>, vector<128x16xf32> -> vector<128x16xf32>
    %52 = arith.addf %41, %51 : vector<128x16xf32>
    %c0_i32_24 = arith.constant 0 : i32
    %53 = arith.addi %0, %c0_i32_24 : i32
    %c1_i32_25 = arith.constant 1 : i32
    %54 = arith.addi %53, %c1_i32_25 : i32
    %c16_i32_26 = arith.constant 16 : i32
    %55 = arith.muli %54, %c16_i32_26 : i32
    %c1_i32_27 = arith.constant 1 : i32
    %56 = arith.addi %55, %c1_i32_27 : i32
    %c0_28 = arith.constant 0 : index
    %57 = arith.index_cast %56 : i32 to index
    %c0_29 = arith.constant 0 : index
    %58 = vector.load %arg2[%c0_28, %57, %c0_29] : memref<1x320x4xf32, #tpu.memory_space<vmem>>, vector<1x128x4xf32>
    %59 = vector.shape_cast %58 : vector<1x128x4xf32> to vector<128x4xf32>
    %c-1_i32_30 = arith.constant -1 : i32
    %60 = vector.broadcast %c-1_i32_30 : i32 to vector<128x1xi32>
    %61 = arith.cmpi sge, %17, %60 : vector<128x1xi32>
    %c15_i32 = arith.constant 15 : i32
    %62 = vector.broadcast %c15_i32 : i32 to vector<128x1xi32>
    %63 = arith.cmpi slt, %17, %62 : vector<128x1xi32>
    %64 = arith.andi %61, %63 : vector<128x1xi1>
    %cst_31 = arith.constant 0.000000e+00 : f32
    %65 = vector.broadcast %cst_31 : f32 to vector<128x4xf32>
    %66 = vector.shape_cast %64 : vector<128x1xi1> to vector<128x1xi1>
    %67 = vector.broadcast %66 : vector<128x1xi1> to vector<128x4xi1>
    %68 = arith.select %67, %59, %65 : vector<128x4xi1>, vector<128x4xf32>
    %c2 = arith.constant 2 : index
    %c0_32 = arith.constant 0 : index
    %c0_33 = arith.constant 0 : index
    %69 = vector.load %arg3[%c2, %c0_32, %c0_33] : memref<9x4x16xf32, #tpu.memory_space<vmem>>, vector<1x4x16xf32>
    %70 = vector.shape_cast %69 : vector<1x4x16xf32> to vector<4x16xf32>
    %cst_34 = arith.constant dense<0.000000e+00> : vector<128x16xf32>
    %71 = tpu.matmul %68, %70, %cst_34 {dimension_numbers = #tpu.dot_dimension_numbers<[1], [0], [0], [1], [0, 0, 1, 1], [], []>} : vector<128x4xf32>, vector<4x16xf32>, vector<128x16xf32> -> vector<128x16xf32>
    %72 = arith.addf %52, %71 : vector<128x16xf32>
    %c1_i32_35 = arith.constant 1 : i32
    %73 = arith.addi %0, %c1_i32_35 : i32
    %c1_i32_36 = arith.constant 1 : i32
    %74 = arith.addi %73, %c1_i32_36 : i32
    %c16_i32_37 = arith.constant 16 : i32
    %75 = arith.muli %74, %c16_i32_37 : i32
    %c-1_i32_38 = arith.constant -1 : i32
    %76 = arith.addi %75, %c-1_i32_38 : i32
    %c0_39 = arith.constant 0 : index
    %77 = arith.index_cast %76 : i32 to index
    %c0_40 = arith.constant 0 : index
    %78 = vector.load %arg2[%c0_39, %77, %c0_40] : memref<1x320x4xf32, #tpu.memory_space<vmem>>, vector<1x128x4xf32>
    %79 = vector.shape_cast %78 : vector<1x128x4xf32> to vector<128x4xf32>
    %c1_i32_41 = arith.constant 1 : i32
    %80 = vector.broadcast %c1_i32_41 : i32 to vector<128x1xi32>
    %81 = arith.cmpi sge, %17, %80 : vector<128x1xi32>
    %c17_i32_42 = arith.constant 17 : i32
    %82 = vector.broadcast %c17_i32_42 : i32 to vector<128x1xi32>
    %83 = arith.cmpi slt, %17, %82 : vector<128x1xi32>
    %84 = arith.andi %81, %83 : vector<128x1xi1>
    %cst_43 = arith.constant 0.000000e+00 : f32
    %85 = vector.broadcast %cst_43 : f32 to vector<128x4xf32>
    %86 = vector.shape_cast %84 : vector<128x1xi1> to vector<128x1xi1>
    %87 = vector.broadcast %86 : vector<128x1xi1> to vector<128x4xi1>
    %88 = arith.select %87, %79, %85 : vector<128x4xi1>, vector<128x4xf32>
    %c3 = arith.constant 3 : index
    %c0_44 = arith.constant 0 : index
    %c0_45 = arith.constant 0 : index
    %89 = vector.load %arg3[%c3, %c0_44, %c0_45] : memref<9x4x16xf32, #tpu.memory_space<vmem>>, vector<1x4x16xf32>
    %90 = vector.shape_cast %89 : vector<1x4x16xf32> to vector<4x16xf32>
    %cst_46 = arith.constant dense<0.000000e+00> : vector<128x16xf32>
    %91 = tpu.matmul %88, %90, %cst_46 {dimension_numbers = #tpu.dot_dimension_numbers<[1], [0], [0], [1], [0, 0, 1, 1], [], []>} : vector<128x4xf32>, vector<4x16xf32>, vector<128x16xf32> -> vector<128x16xf32>
    %92 = arith.addf %72, %91 : vector<128x16xf32>
    %c1_i32_47 = arith.constant 1 : i32
    %93 = arith.addi %0, %c1_i32_47 : i32
    %c1_i32_48 = arith.constant 1 : i32
    %94 = arith.addi %93, %c1_i32_48 : i32
    %c16_i32_49 = arith.constant 16 : i32
    %95 = arith.muli %94, %c16_i32_49 : i32
    %c0_i32_50 = arith.constant 0 : i32
    %96 = arith.addi %95, %c0_i32_50 : i32
    %c0_51 = arith.constant 0 : index
    %97 = arith.index_cast %96 : i32 to index
    %c0_52 = arith.constant 0 : index
    %98 = vector.load %arg2[%c0_51, %97, %c0_52] : memref<1x320x4xf32, #tpu.memory_space<vmem>>, vector<1x128x4xf32>
    %99 = vector.shape_cast %98 : vector<1x128x4xf32> to vector<128x4xf32>
    %c4 = arith.constant 4 : index
    %c0_53 = arith.constant 0 : index
    %c0_54 = arith.constant 0 : index
    %100 = vector.load %arg3[%c4, %c0_53, %c0_54] : memref<9x4x16xf32, #tpu.memory_space<vmem>>, vector<1x4x16xf32>
    %101 = vector.shape_cast %100 : vector<1x4x16xf32> to vector<4x16xf32>
    %cst_55 = arith.constant dense<0.000000e+00> : vector<128x16xf32>
    %102 = tpu.matmul %99, %101, %cst_55 {dimension_numbers = #tpu.dot_dimension_numbers<[1], [0], [0], [1], [0, 0, 1, 1], [], []>} : vector<128x4xf32>, vector<4x16xf32>, vector<128x16xf32> -> vector<128x16xf32>
    %103 = arith.addf %92, %102 : vector<128x16xf32>
    %c1_i32_56 = arith.constant 1 : i32
    %104 = arith.addi %0, %c1_i32_56 : i32
    %c1_i32_57 = arith.constant 1 : i32
    %105 = arith.addi %104, %c1_i32_57 : i32
    %c16_i32_58 = arith.constant 16 : i32
    %106 = arith.muli %105, %c16_i32_58 : i32
    %c1_i32_59 = arith.constant 1 : i32
    %107 = arith.addi %106, %c1_i32_59 : i32
    %c0_60 = arith.constant 0 : index
    %108 = arith.index_cast %107 : i32 to index
    %c0_61 = arith.constant 0 : index
    %109 = vector.load %arg2[%c0_60, %108, %c0_61] : memref<1x320x4xf32, #tpu.memory_space<vmem>>, vector<1x128x4xf32>
    %110 = vector.shape_cast %109 : vector<1x128x4xf32> to vector<128x4xf32>
    %c-1_i32_62 = arith.constant -1 : i32
    %111 = vector.broadcast %c-1_i32_62 : i32 to vector<128x1xi32>
    %112 = arith.cmpi sge, %17, %111 : vector<128x1xi32>
    %c15_i32_63 = arith.constant 15 : i32
    %113 = vector.broadcast %c15_i32_63 : i32 to vector<128x1xi32>
    %114 = arith.cmpi slt, %17, %113 : vector<128x1xi32>
    %115 = arith.andi %112, %114 : vector<128x1xi1>
    %cst_64 = arith.constant 0.000000e+00 : f32
    %116 = vector.broadcast %cst_64 : f32 to vector<128x4xf32>
    %117 = vector.shape_cast %115 : vector<128x1xi1> to vector<128x1xi1>
    %118 = vector.broadcast %117 : vector<128x1xi1> to vector<128x4xi1>
    %119 = arith.select %118, %110, %116 : vector<128x4xi1>, vector<128x4xf32>
    %c5 = arith.constant 5 : index
    %c0_65 = arith.constant 0 : index
    %c0_66 = arith.constant 0 : index
    %120 = vector.load %arg3[%c5, %c0_65, %c0_66] : memref<9x4x16xf32, #tpu.memory_space<vmem>>, vector<1x4x16xf32>
    %121 = vector.shape_cast %120 : vector<1x4x16xf32> to vector<4x16xf32>
    %cst_67 = arith.constant dense<0.000000e+00> : vector<128x16xf32>
    %122 = tpu.matmul %119, %121, %cst_67 {dimension_numbers = #tpu.dot_dimension_numbers<[1], [0], [0], [1], [0, 0, 1, 1], [], []>} : vector<128x4xf32>, vector<4x16xf32>, vector<128x16xf32> -> vector<128x16xf32>
    %123 = arith.addf %103, %122 : vector<128x16xf32>
    %c2_i32 = arith.constant 2 : i32
    %124 = arith.addi %0, %c2_i32 : i32
    %c1_i32_68 = arith.constant 1 : i32
    %125 = arith.addi %124, %c1_i32_68 : i32
    %c16_i32_69 = arith.constant 16 : i32
    %126 = arith.muli %125, %c16_i32_69 : i32
    %c-1_i32_70 = arith.constant -1 : i32
    %127 = arith.addi %126, %c-1_i32_70 : i32
    %c0_71 = arith.constant 0 : index
    %128 = arith.index_cast %127 : i32 to index
    %c0_72 = arith.constant 0 : index
    %129 = vector.load %arg2[%c0_71, %128, %c0_72] : memref<1x320x4xf32, #tpu.memory_space<vmem>>, vector<1x128x4xf32>
    %130 = vector.shape_cast %129 : vector<1x128x4xf32> to vector<128x4xf32>
    %c1_i32_73 = arith.constant 1 : i32
    %131 = vector.broadcast %c1_i32_73 : i32 to vector<128x1xi32>
    %132 = arith.cmpi sge, %17, %131 : vector<128x1xi32>
    %c17_i32_74 = arith.constant 17 : i32
    %133 = vector.broadcast %c17_i32_74 : i32 to vector<128x1xi32>
    %134 = arith.cmpi slt, %17, %133 : vector<128x1xi32>
    %135 = arith.andi %132, %134 : vector<128x1xi1>
    %cst_75 = arith.constant 0.000000e+00 : f32
    %136 = vector.broadcast %cst_75 : f32 to vector<128x4xf32>
    %137 = vector.shape_cast %135 : vector<128x1xi1> to vector<128x1xi1>
    %138 = vector.broadcast %137 : vector<128x1xi1> to vector<128x4xi1>
    %139 = arith.select %138, %130, %136 : vector<128x4xi1>, vector<128x4xf32>
    %c6 = arith.constant 6 : index
    %c0_76 = arith.constant 0 : index
    %c0_77 = arith.constant 0 : index
    %140 = vector.load %arg3[%c6, %c0_76, %c0_77] : memref<9x4x16xf32, #tpu.memory_space<vmem>>, vector<1x4x16xf32>
    %141 = vector.shape_cast %140 : vector<1x4x16xf32> to vector<4x16xf32>
    %cst_78 = arith.constant dense<0.000000e+00> : vector<128x16xf32>
    %142 = tpu.matmul %139, %141, %cst_78 {dimension_numbers = #tpu.dot_dimension_numbers<[1], [0], [0], [1], [0, 0, 1, 1], [], []>} : vector<128x4xf32>, vector<4x16xf32>, vector<128x16xf32> -> vector<128x16xf32>
    %143 = arith.addf %123, %142 : vector<128x16xf32>
    %c2_i32_79 = arith.constant 2 : i32
    %144 = arith.addi %0, %c2_i32_79 : i32
    %c1_i32_80 = arith.constant 1 : i32
    %145 = arith.addi %144, %c1_i32_80 : i32
    %c16_i32_81 = arith.constant 16 : i32
    %146 = arith.muli %145, %c16_i32_81 : i32
    %c0_i32_82 = arith.constant 0 : i32
    %147 = arith.addi %146, %c0_i32_82 : i32
    %c0_83 = arith.constant 0 : index
    %148 = arith.index_cast %147 : i32 to index
    %c0_84 = arith.constant 0 : index
    %149 = vector.load %arg2[%c0_83, %148, %c0_84] : memref<1x320x4xf32, #tpu.memory_space<vmem>>, vector<1x128x4xf32>
    %150 = vector.shape_cast %149 : vector<1x128x4xf32> to vector<128x4xf32>
    %c7 = arith.constant 7 : index
    %c0_85 = arith.constant 0 : index
    %c0_86 = arith.constant 0 : index
    %151 = vector.load %arg3[%c7, %c0_85, %c0_86] : memref<9x4x16xf32, #tpu.memory_space<vmem>>, vector<1x4x16xf32>
    %152 = vector.shape_cast %151 : vector<1x4x16xf32> to vector<4x16xf32>
    %cst_87 = arith.constant dense<0.000000e+00> : vector<128x16xf32>
    %153 = tpu.matmul %150, %152, %cst_87 {dimension_numbers = #tpu.dot_dimension_numbers<[1], [0], [0], [1], [0, 0, 1, 1], [], []>} : vector<128x4xf32>, vector<4x16xf32>, vector<128x16xf32> -> vector<128x16xf32>
    %154 = arith.addf %143, %153 : vector<128x16xf32>
    %c2_i32_88 = arith.constant 2 : i32
    %155 = arith.addi %0, %c2_i32_88 : i32
    %c1_i32_89 = arith.constant 1 : i32
    %156 = arith.addi %155, %c1_i32_89 : i32
    %c16_i32_90 = arith.constant 16 : i32
    %157 = arith.muli %156, %c16_i32_90 : i32
    %c1_i32_91 = arith.constant 1 : i32
    %158 = arith.addi %157, %c1_i32_91 : i32
    %c0_92 = arith.constant 0 : index
    %159 = arith.index_cast %158 : i32 to index
    %c0_93 = arith.constant 0 : index
    %160 = vector.load %arg2[%c0_92, %159, %c0_93] : memref<1x320x4xf32, #tpu.memory_space<vmem>>, vector<1x128x4xf32>
    %161 = vector.shape_cast %160 : vector<1x128x4xf32> to vector<128x4xf32>
    %c-1_i32_94 = arith.constant -1 : i32
    %162 = vector.broadcast %c-1_i32_94 : i32 to vector<128x1xi32>
    %163 = arith.cmpi sge, %17, %162 : vector<128x1xi32>
    %c15_i32_95 = arith.constant 15 : i32
    %164 = vector.broadcast %c15_i32_95 : i32 to vector<128x1xi32>
    %165 = arith.cmpi slt, %17, %164 : vector<128x1xi32>
    %166 = arith.andi %163, %165 : vector<128x1xi1>
    %cst_96 = arith.constant 0.000000e+00 : f32
    %167 = vector.broadcast %cst_96 : f32 to vector<128x4xf32>
    %168 = vector.shape_cast %166 : vector<128x1xi1> to vector<128x1xi1>
    %169 = vector.broadcast %168 : vector<128x1xi1> to vector<128x4xi1>
    %170 = arith.select %169, %161, %167 : vector<128x4xi1>, vector<128x4xf32>
    %c8 = arith.constant 8 : index
    %c0_97 = arith.constant 0 : index
    %c0_98 = arith.constant 0 : index
    %171 = vector.load %arg3[%c8, %c0_97, %c0_98] : memref<9x4x16xf32, #tpu.memory_space<vmem>>, vector<1x4x16xf32>
    %172 = vector.shape_cast %171 : vector<1x4x16xf32> to vector<4x16xf32>
    %cst_99 = arith.constant dense<0.000000e+00> : vector<128x16xf32>
    %173 = tpu.matmul %170, %172, %cst_99 {dimension_numbers = #tpu.dot_dimension_numbers<[1], [0], [0], [1], [0, 0, 1, 1], [], []>} : vector<128x4xf32>, vector<4x16xf32>, vector<128x16xf32> -> vector<128x16xf32>
    %174 = arith.addf %154, %173 : vector<128x16xf32>
    %c0_100 = arith.constant 0 : index
    %c0_101 = arith.constant 0 : index
    %c0_102 = arith.constant 0 : index
    %175 = vector.load %arg5[%c0_100, %c0_101, %c0_102] : memref<1x128x16xf32, #tpu.memory_space<vmem>>, vector<1x128x16xf32>
    %176 = vector.shape_cast %175 : vector<1x128x16xf32> to vector<128x16xf32>
    %177 = vector.shape_cast %174 : vector<128x16xf32> to vector<1x128x16xf32>
    tpu.vector_store %arg5[%c0_100, %c0_101, %c0_102], %177 {strides = array<i32>} : memref<1x128x16xf32, #tpu.memory_space<vmem>>, vector<1x128x16xf32>,
    return
  }
  func.func @transform_0(%arg0: i32, %arg1: i32) -> (i32, i32, i32) {
    %c0_i32 = arith.constant 0 : i32
    %c0_i32_0 = arith.constant 0 : i32
    %c0_i32_1 = arith.constant 0 : i32
    return %arg0, %c0_i32, %c0_i32_0 : i32, i32, i32
  }
  func.func @transform_1(%arg0: i32, %arg1: i32) -> (i32, i32, i32) {
    %c0_i32 = arith.constant 0 : i32
    %c0_i32_0 = arith.constant 0 : i32
    %c0_i32_1 = arith.constant 0 : i32
    %c0_i32_2 = arith.constant 0 : i32
    return %c0_i32, %c0_i32_0, %c0_i32_1 : i32, i32, i32
  }
  func.func @transform_2(%arg0: i32, %arg1: i32) -> (i32, i32) {
    %c0_i32 = arith.constant 0 : i32
    %c0_i32_0 = arith.constant 0 : i32
    %c0_i32_1 = arith.constant 0 : i32
    return %c0_i32, %c0_i32_0 : i32, i32
  }
  func.func @transform_3(%arg0: i32, %arg1: i32) -> (i32, i32, i32) {
    %c0_i32 = arith.constant 0 : i32
    %c0_i32_0 = arith.constant 0 : i32
    return %arg0, %arg1, %c0_i32 : i32, i32, i32
  }
}

module attributes {stable_mosaic.version = 11 : i64} {
  func.func @_sru_cv_kernel(%arg0: i32, %arg1: memref<1x256x16xf32, #tpu.memory_space<vmem>>, %arg2: memref<1x16xf32, #tpu.memory_space<vmem>>, %arg3: memref<1x16xf32, #tpu.memory_space<vmem>>, %arg4: memref<1x16xf32, #tpu.memory_space<vmem>>, %arg5: memref<16x16xf32, #tpu.memory_space<vmem>>, %arg6: memref<16x4xf32, #tpu.memory_space<vmem>>, %arg7: memref<16x4xf32, #tpu.memory_space<vmem>>, %arg8: memref<16x4xf32, #tpu.memory_space<vmem>>, %arg9: memref<16x4xf32, #tpu.memory_space<vmem>>, %arg10: memref<1x320x4xf32, #tpu.memory_space<vmem>>, %arg11: memref<1x256x4xf32, #tpu.memory_space<vmem>>) attributes {dimension_semantics = [#tpu.dimension_semantics<parallel>], iteration_bounds = array<i64: 2>, scalar_prefetch = 0 : i64, scratch_operands = 0 : i64, tpu.core_type = #tpu.core_type<tc>, window_params = [{transform_indices = @transform_0, window_bounds = array<i64: 1, 256, 16>}, {pipeline_mode = #tpu.pipeline_mode<synchronous>, transform_indices = @transform_1, window_bounds = array<i64: 1, 16>}, {pipeline_mode = #tpu.pipeline_mode<synchronous>, transform_indices = @transform_2, window_bounds = array<i64: 1, 16>}, {pipeline_mode = #tpu.pipeline_mode<synchronous>, transform_indices = @transform_3, window_bounds = array<i64: 1, 16>}, {pipeline_mode = #tpu.pipeline_mode<synchronous>, transform_indices = @transform_4, window_bounds = array<i64: 16, 16>}, {pipeline_mode = #tpu.pipeline_mode<synchronous>, transform_indices = @transform_5, window_bounds = array<i64: 16, 4>}, {pipeline_mode = #tpu.pipeline_mode<synchronous>, transform_indices = @transform_6, window_bounds = array<i64: 16, 4>}, {pipeline_mode = #tpu.pipeline_mode<synchronous>, transform_indices = @transform_7, window_bounds = array<i64: 16, 4>}, {pipeline_mode = #tpu.pipeline_mode<synchronous>, transform_indices = @transform_8, window_bounds = array<i64: 16, 4>}, {transform_indices = @transform_9, window_bounds = array<i64: 1, 320, 4>}, {transform_indices = @transform_10, window_bounds = array<i64: 1, 256, 4>}]} {
    %c0 = arith.constant 0 : index
    %c0_0 = arith.constant 0 : index
    %c0_1 = arith.constant 0 : index
    %0 = vector.load %arg1[%c0, %c0_0, %c0_1] : memref<1x256x16xf32, #tpu.memory_space<vmem>>, vector<1x256x16xf32>
    %1 = vector.shape_cast %0 : vector<1x256x16xf32> to vector<256x16xf32>
    %cst = arith.constant dense<0.000000e+00> : vector<16xf32>
    %2 = vector.multi_reduction <add>, %1, %cst [0] : vector<256x16xf32> to vector<16xf32>
    %3 = vector.shape_cast %2 : vector<16xf32> to vector<1x16xf32>
    %4 = arith.mulf %1, %1 : vector<256x16xf32>
    %cst_2 = arith.constant dense<0.000000e+00> : vector<16xf32>
    %5 = vector.multi_reduction <add>, %4, %cst_2 [0] : vector<256x16xf32> to vector<16xf32>
    %6 = vector.shape_cast %5 : vector<16xf32> to vector<1x16xf32>
    %7 = tpu.concatenate %3, %6 in 0 : vector<1x16xf32>, vector<1x16xf32> -> vector<2x16xf32>
    %cst_3 = arith.constant 3.906250e-03 : f32
    %8 = vector.broadcast %cst_3 : f32 to vector<2x16xf32>
    %9 = arith.mulf %7, %8 : vector<2x16xf32>
    %c0_4 = arith.constant 0 : index
    %c0_5 = arith.constant 0 : index
    %10 = vector.load %arg5[%c0_4, %c0_5] : memref<16x16xf32, #tpu.memory_space<vmem>>, vector<16x16xf32>
    %cst_6 = arith.constant dense<0.000000e+00> : vector<2x16xf32>
    %11 = tpu.matmul %9, %10, %cst_6 {dimension_numbers = #tpu.dot_dimension_numbers<[1], [0], [0], [1], [0, 0, 1, 1], [], []>} : vector<2x16xf32>, vector<16x16xf32>, vector<2x16xf32> -> vector<2x16xf32>
    %12 = vector.extract_strided_slice %11 {offsets = [0, 0], sizes = [1, 16], strides = [1, 1]} : vector<2x16xf32> to vector<1x16xf32>
    %13 = vector.extract_strided_slice %11 {offsets = [1, 0], sizes = [1, 16], strides = [1, 1]} : vector<2x16xf32> to vector<1x16xf32>
    %14 = arith.mulf %12, %12 : vector<1x16xf32>
    %15 = arith.subf %13, %14 : vector<1x16xf32>
    %cst_7 = arith.constant 0.000000e+00 : f32
    %16 = vector.broadcast %cst_7 : f32 to vector<1x16xf32>
    %17 = arith.maximumf %15, %16 : vector<1x16xf32>
    %cst_8 = arith.constant 9.99999974E-6 : f32
    %18 = vector.broadcast %cst_8 : f32 to vector<1x16xf32>
    %19 = arith.addf %17, %18 : vector<1x16xf32>
    %20 = math.rsqrt %19 : vector<1x16xf32>
    %21 = vector.broadcast %12 : vector<1x16xf32> to vector<256x16xf32>
    %22 = arith.subf %1, %21 : vector<256x16xf32>
    %c0_9 = arith.constant 0 : index
    %c0_10 = arith.constant 0 : index
    %23 = vector.load %arg2[%c0_9, %c0_10] : memref<1x16xf32, #tpu.memory_space<vmem>>, vector<1x16xf32>
    %24 = arith.mulf %20, %23 : vector<1x16xf32>
    %25 = vector.broadcast %24 : vector<1x16xf32> to vector<256x16xf32>
    %26 = arith.mulf %22, %25 : vector<256x16xf32>
    %c0_11 = arith.constant 0 : index
    %c0_12 = arith.constant 0 : index
    %27 = vector.load %arg3[%c0_11, %c0_12] : memref<1x16xf32, #tpu.memory_space<vmem>>, vector<1x16xf32>
    %28 = vector.broadcast %27 : vector<1x16xf32> to vector<256x16xf32>
    %29 = arith.addf %26, %28 : vector<256x16xf32>
    %c0_13 = arith.constant 0 : index
    %c0_14 = arith.constant 0 : index
    %30 = vector.load %arg4[%c0_13, %c0_14] : memref<1x16xf32, #tpu.memory_space<vmem>>, vector<1x16xf32>
    %31 = vector.broadcast %30 : vector<1x16xf32> to vector<256x16xf32>
    %32 = arith.mulf %31, %29 : vector<256x16xf32>
    %33 = arith.negf %32 : vector<256x16xf32>
    %34 = math.exp %33 : vector<256x16xf32>
    %cst_15 = arith.constant 1.000000e+00 : f32
    %35 = vector.broadcast %cst_15 : f32 to vector<256x16xf32>
    %36 = arith.addf %35, %34 : vector<256x16xf32>
    %37 = arith.divf %35, %36 : vector<256x16xf32>
    %cst_16 = arith.constant 5.000000e-01 : f32
    %38 = vector.broadcast %cst_16 : f32 to vector<256x16xf32>
    %39 = arith.cmpf ogt, %37, %38 : vector<256x16xf32>
    %cst_17 = arith.constant 1.000000e+00 : f32
    %40 = vector.broadcast %cst_17 : f32 to vector<256x16xf32>
    %41 = arith.select %39, %40, %37 : vector<256x16xi1>, vector<256x16xf32>
    %42 = arith.mulf %1, %41 : vector<256x16xf32>
    %cst_18 = arith.constant 0.000000e+00 : f32
    %43 = vector.broadcast %cst_18 : f32 to vector<256x16xf32>
    %44 = arith.select %39, %43, %37 : vector<256x16xi1>, vector<256x16xf32>
    %45 = arith.mulf %1, %44 : vector<256x16xf32>
    %c0_19 = arith.constant 0 : index
    %c0_20 = arith.constant 0 : index
    %46 = vector.load %arg6[%c0_19, %c0_20] : memref<16x4xf32, #tpu.memory_space<vmem>>, vector<16x4xf32>
    %cst_21 = arith.constant dense<0.000000e+00> : vector<256x4xf32>
    %47 = tpu.matmul %42, %46, %cst_21 {dimension_numbers = #tpu.dot_dimension_numbers<[1], [0], [0], [1], [0, 0, 1, 1], [], []>} : vector<256x16xf32>, vector<16x4xf32>, vector<256x4xf32> -> vector<256x4xf32>
    %c0_22 = arith.constant 0 : index
    %c0_23 = arith.constant 0 : index
    %48 = vector.load %arg7[%c0_22, %c0_23] : memref<16x4xf32, #tpu.memory_space<vmem>>, vector<16x4xf32>
    %cst_24 = arith.constant dense<0.000000e+00> : vector<256x4xf32>
    %49 = tpu.matmul %45, %48, %cst_24 {dimension_numbers = #tpu.dot_dimension_numbers<[1], [0], [0], [1], [0, 0, 1, 1], [], []>} : vector<256x16xf32>, vector<16x4xf32>, vector<256x4xf32> -> vector<256x4xf32>
    %50 = arith.addf %47, %49 : vector<256x4xf32>
    %c0_25 = arith.constant 0 : index
    %c0_26 = arith.constant 0 : index
    %51 = vector.load %arg8[%c0_25, %c0_26] : memref<16x4xf32, #tpu.memory_space<vmem>>, vector<16x4xf32>
    %cst_27 = arith.constant dense<0.000000e+00> : vector<256x4xf32>
    %52 = tpu.matmul %42, %51, %cst_27 {dimension_numbers = #tpu.dot_dimension_numbers<[1], [0], [0], [1], [0, 0, 1, 1], [], []>} : vector<256x16xf32>, vector<16x4xf32>, vector<256x4xf32> -> vector<256x4xf32>
    %c0_28 = arith.constant 0 : index
    %c0_29 = arith.constant 0 : index
    %53 = vector.load %arg9[%c0_28, %c0_29] : memref<16x4xf32, #tpu.memory_space<vmem>>, vector<16x4xf32>
    %cst_30 = arith.constant dense<0.000000e+00> : vector<256x4xf32>
    %54 = tpu.matmul %45, %53, %cst_30 {dimension_numbers = #tpu.dot_dimension_numbers<[1], [0], [0], [1], [0, 0, 1, 1], [], []>} : vector<256x16xf32>, vector<16x4xf32>, vector<256x4xf32> -> vector<256x4xf32>
    %55 = arith.addf %52, %54 : vector<256x4xf32>
    %cst_31 = arith.constant 0.000000e+00 : f32
    %56 = vector.broadcast %cst_31 : f32 to vector<320x4xf32>
    %c0_32 = arith.constant 0 : index
    %c0_33 = arith.constant 0 : index
    %c0_34 = arith.constant 0 : index
    %57 = vector.load %arg10[%c0_32, %c0_33, %c0_34] : memref<1x320x4xf32, #tpu.memory_space<vmem>>, vector<1x320x4xf32>
    %58 = vector.shape_cast %57 : vector<1x320x4xf32> to vector<320x4xf32>
    %59 = vector.shape_cast %56 : vector<320x4xf32> to vector<1x320x4xf32>
    tpu.vector_store %arg10[%c0_32, %c0_33, %c0_34], %59 {strides = array<i32>} : memref<1x320x4xf32, #tpu.memory_space<vmem>>, vector<1x320x4xf32>,
    %c0_35 = arith.constant 0 : index
    %c32 = arith.constant 32 : index
    %c0_36 = arith.constant 0 : index
    %60 = vector.load %arg10[%c0_35, %c32, %c0_36] : memref<1x320x4xf32, #tpu.memory_space<vmem>>, vector<1x256x4xf32>
    %61 = vector.shape_cast %60 : vector<1x256x4xf32> to vector<256x4xf32>
    %62 = vector.shape_cast %50 : vector<256x4xf32> to vector<1x256x4xf32>
    tpu.vector_store %arg10[%c0_35, %c32, %c0_36], %62 {strides = array<i32>} : memref<1x320x4xf32, #tpu.memory_space<vmem>>, vector<1x256x4xf32>,
    %c0_37 = arith.constant 0 : index
    %c0_38 = arith.constant 0 : index
    %c0_39 = arith.constant 0 : index
    %63 = vector.load %arg11[%c0_37, %c0_38, %c0_39] : memref<1x256x4xf32, #tpu.memory_space<vmem>>, vector<1x256x4xf32>
    %64 = vector.shape_cast %63 : vector<1x256x4xf32> to vector<256x4xf32>
    %65 = vector.shape_cast %55 : vector<256x4xf32> to vector<1x256x4xf32>
    tpu.vector_store %arg11[%c0_37, %c0_38, %c0_39], %65 {strides = array<i32>} : memref<1x256x4xf32, #tpu.memory_space<vmem>>, vector<1x256x4xf32>,
    return
  }
  func.func @transform_0(%arg0: i32) -> (i32, i32, i32) {
    %c0_i32 = arith.constant 0 : i32
    %c0_i32_0 = arith.constant 0 : i32
    %c0_i32_1 = arith.constant 0 : i32
    return %arg0, %c0_i32, %c0_i32_0 : i32, i32, i32
  }
  func.func @transform_1(%arg0: i32) -> (i32, i32) {
    %c0_i32 = arith.constant 0 : i32
    %c0_i32_0 = arith.constant 0 : i32
    %c0_i32_1 = arith.constant 0 : i32
    return %c0_i32, %c0_i32_0 : i32, i32
  }
  func.func @transform_2(%arg0: i32) -> (i32, i32) {
    %c0_i32 = arith.constant 0 : i32
    %c0_i32_0 = arith.constant 0 : i32
    %c0_i32_1 = arith.constant 0 : i32
    return %c0_i32, %c0_i32_0 : i32, i32
  }
  func.func @transform_3(%arg0: i32) -> (i32, i32) {
    %c0_i32 = arith.constant 0 : i32
    %c0_i32_0 = arith.constant 0 : i32
    %c0_i32_1 = arith.constant 0 : i32
    return %c0_i32, %c0_i32_0 : i32, i32
  }
  func.func @transform_4(%arg0: i32) -> (i32, i32) {
    %c0_i32 = arith.constant 0 : i32
    %c0_i32_0 = arith.constant 0 : i32
    %c0_i32_1 = arith.constant 0 : i32
    return %c0_i32, %c0_i32_0 : i32, i32
  }
  func.func @transform_5(%arg0: i32) -> (i32, i32) {
    %c0_i32 = arith.constant 0 : i32
    %c0_i32_0 = arith.constant 0 : i32
    %c0_i32_1 = arith.constant 0 : i32
    return %c0_i32, %c0_i32_0 : i32, i32
  }
  func.func @transform_6(%arg0: i32) -> (i32, i32) {
    %c0_i32 = arith.constant 0 : i32
    %c0_i32_0 = arith.constant 0 : i32
    %c0_i32_1 = arith.constant 0 : i32
    return %c0_i32, %c0_i32_0 : i32, i32
  }
  func.func @transform_7(%arg0: i32) -> (i32, i32) {
    %c0_i32 = arith.constant 0 : i32
    %c0_i32_0 = arith.constant 0 : i32
    %c0_i32_1 = arith.constant 0 : i32
    return %c0_i32, %c0_i32_0 : i32, i32
  }
  func.func @transform_8(%arg0: i32) -> (i32, i32) {
    %c0_i32 = arith.constant 0 : i32
    %c0_i32_0 = arith.constant 0 : i32
    %c0_i32_1 = arith.constant 0 : i32
    return %c0_i32, %c0_i32_0 : i32, i32
  }
  func.func @transform_9(%arg0: i32) -> (i32, i32, i32) {
    %c0_i32 = arith.constant 0 : i32
    %c0_i32_0 = arith.constant 0 : i32
    %c0_i32_1 = arith.constant 0 : i32
    return %arg0, %c0_i32, %c0_i32_0 : i32, i32, i32
  }
  func.func @transform_10(%arg0: i32) -> (i32, i32, i32) {
    %c0_i32 = arith.constant 0 : i32
    %c0_i32_0 = arith.constant 0 : i32
    %c0_i32_1 = arith.constant 0 : i32
    return %arg0, %c0_i32, %c0_i32_0 : i32, i32, i32
  }
}

module attributes {stable_mosaic.version = 11 : i64} {
  func.func @_fuse_kernel(%arg0: i32, %arg1: memref<1x256x16xf32, #tpu.memory_space<vmem>>, %arg2: memref<1x256x4xf32, #tpu.memory_space<vmem>>, %arg3: memref<4x16xf32, #tpu.memory_space<vmem>>, %arg4: memref<1x256x16xf32, #tpu.memory_space<vmem>>) attributes {dimension_semantics = [#tpu.dimension_semantics<parallel>], iteration_bounds = array<i64: 2>, scalar_prefetch = 0 : i64, scratch_operands = 0 : i64, tpu.core_type = #tpu.core_type<tc>, window_params = [{transform_indices = @transform_0, window_bounds = array<i64: 1, 256, 16>}, {transform_indices = @transform_1, window_bounds = array<i64: 1, 256, 4>}, {pipeline_mode = #tpu.pipeline_mode<synchronous>, transform_indices = @transform_2, window_bounds = array<i64: 4, 16>}, {transform_indices = @transform_3, window_bounds = array<i64: 1, 256, 16>}]} {
    %c0 = arith.constant 0 : index
    %c0_0 = arith.constant 0 : index
    %c0_1 = arith.constant 0 : index
    %0 = vector.load %arg1[%c0, %c0_0, %c0_1] : memref<1x256x16xf32, #tpu.memory_space<vmem>>, vector<1x256x16xf32>
    %1 = vector.shape_cast %0 : vector<1x256x16xf32> to vector<256x16xf32>
    %c0_2 = arith.constant 0 : index
    %c0_3 = arith.constant 0 : index
    %c0_4 = arith.constant 0 : index
    %2 = vector.load %arg2[%c0_2, %c0_3, %c0_4] : memref<1x256x4xf32, #tpu.memory_space<vmem>>, vector<1x256x4xf32>
    %3 = vector.shape_cast %2 : vector<1x256x4xf32> to vector<256x4xf32>
    %c0_5 = arith.constant 0 : index
    %c0_6 = arith.constant 0 : index
    %4 = vector.load %arg3[%c0_5, %c0_6] : memref<4x16xf32, #tpu.memory_space<vmem>>, vector<4x16xf32>
    %cst = arith.constant dense<0.000000e+00> : vector<256x16xf32>
    %5 = tpu.matmul %3, %4, %cst {dimension_numbers = #tpu.dot_dimension_numbers<[1], [0], [0], [1], [0, 0, 1, 1], [], []>} : vector<256x4xf32>, vector<4x16xf32>, vector<256x16xf32> -> vector<256x16xf32>
    %cst_7 = arith.constant dense<0.000000e+00> : vector<16xf32>
    %6 = vector.multi_reduction <add>, %1, %cst_7 [0] : vector<256x16xf32> to vector<16xf32>
    %7 = vector.shape_cast %6 : vector<16xf32> to vector<1x16xf32>
    %cst_8 = arith.constant 2.560000e+02 : f32
    %8 = vector.broadcast %cst_8 : f32 to vector<1x16xf32>
    %9 = arith.divf %7, %8 : vector<1x16xf32>
    %cst_9 = arith.constant dense<0.000000e+00> : vector<16xf32>
    %10 = vector.multi_reduction <add>, %5, %cst_9 [0] : vector<256x16xf32> to vector<16xf32>
    %11 = vector.shape_cast %10 : vector<16xf32> to vector<1x16xf32>
    %cst_10 = arith.constant 2.560000e+02 : f32
    %12 = vector.broadcast %cst_10 : f32 to vector<1x16xf32>
    %13 = arith.divf %11, %12 : vector<1x16xf32>
    %14 = arith.subf %9, %13 : vector<1x16xf32>
    %15 = arith.negf %14 : vector<1x16xf32>
    %16 = math.exp %15 : vector<1x16xf32>
    %cst_11 = arith.constant 1.000000e+00 : f32
    %17 = vector.broadcast %cst_11 : f32 to vector<1x16xf32>
    %18 = arith.addf %17, %16 : vector<1x16xf32>
    %19 = arith.divf %17, %18 : vector<1x16xf32>
    %20 = vector.broadcast %19 : vector<1x16xf32> to vector<256x16xf32>
    %21 = arith.mulf %1, %20 : vector<256x16xf32>
    %cst_12 = arith.constant 1.000000e+00 : f32
    %22 = vector.broadcast %cst_12 : f32 to vector<1x16xf32>
    %23 = arith.subf %22, %19 : vector<1x16xf32>
    %24 = vector.broadcast %23 : vector<1x16xf32> to vector<256x16xf32>
    %25 = arith.mulf %5, %24 : vector<256x16xf32>
    %26 = arith.addf %21, %25 : vector<256x16xf32>
    %c0_13 = arith.constant 0 : index
    %c0_14 = arith.constant 0 : index
    %c0_15 = arith.constant 0 : index
    %27 = vector.load %arg4[%c0_13, %c0_14, %c0_15] : memref<1x256x16xf32, #tpu.memory_space<vmem>>, vector<1x256x16xf32>
    %28 = vector.shape_cast %27 : vector<1x256x16xf32> to vector<256x16xf32>
    %29 = vector.shape_cast %26 : vector<256x16xf32> to vector<1x256x16xf32>
    tpu.vector_store %arg4[%c0_13, %c0_14, %c0_15], %29 {strides = array<i32>} : memref<1x256x16xf32, #tpu.memory_space<vmem>>, vector<1x256x16xf32>,
    return
  }
  func.func @transform_0(%arg0: i32) -> (i32, i32, i32) {
    %c0_i32 = arith.constant 0 : i32
    %c0_i32_0 = arith.constant 0 : i32
    %c0_i32_1 = arith.constant 0 : i32
    return %arg0, %c0_i32, %c0_i32_0 : i32, i32, i32
  }
  func.func @transform_1(%arg0: i32) -> (i32, i32, i32) {
    %c0_i32 = arith.constant 0 : i32
    %c0_i32_0 = arith.constant 0 : i32
    %c0_i32_1 = arith.constant 0 : i32
    return %arg0, %c0_i32, %c0_i32_0 : i32, i32, i32
  }
  func.func @transform_2(%arg0: i32) -> (i32, i32) {
    %c0_i32 = arith.constant 0 : i32
    %c0_i32_0 = arith.constant 0 : i32
    %c0_i32_1 = arith.constant 0 : i32
    return %c0_i32, %c0_i32_0 : i32, i32
  }
  func.func @transform_3(%arg0: i32) -> (i32, i32, i32) {
    %c0_i32 = arith.constant 0 : i32
    %c0_i32_0 = arith.constant 0 : i32
    %c0_i32_1 = arith.constant 0 : i32
    return %arg0, %c0_i32, %c0_i32_0 : i32, i32, i32
  }
}

</mosaic_0001>

<llo_original>
// kernel: scconv_forward.5
$region0: #{scconv_forward.5}
  #allocation0 [shape = 'u32[]', space=smem, size = 0x4, offset = 0x4, fixed_abs, tag = 'smem constant byte address 0x4 - core index']
  #allocation1 [shape = 'u32[72,128]{1,0:T(1,128)}', space=vmem, size = 0x9000, scoped, tag = 'internal scratch']
  %s0 = inlined_call_operand.vmem [shape: f32[2,256,16], index: 0, kind: input, shape index: {}]
  %s1 = inlined_call_operand.vmem [shape: f32[2,256,4], index: 1, kind: input, shape index: {}]
  %s2 = inlined_call_operand.vmem [shape: f32[4,16], index: 2, kind: input, shape index: {}]
  %s3 = inlined_call_operand.vmem [shape: f32[2,256,16], index: 3, kind: output, shape index: {}]
  %s4 = sld [smem:[#allocation0]]
  $region45: #{scconv_forward.5} parent=0
    _
  %s6 = ssub.s32 1, %s4
  %s7 = scalar_select 0, %s6, %s4
  loop: start=0, step=1, limit=4
  $region2: #{scconv_forward.5} parent=0 // loop_pre_header
    _
  $region3: #{scconv_forward.5} parent=0 // loop_header
    %s9 = sphi 0, %s13
    %p10 = scmp.ge.s32.totalorder %s9, 4
    %s19 = sphi 0, %s21
    %s22 = sphi 0, %s19
    %s23 = sphi 0, %s22
    %s39 = sphi 0, %s23
    %s45 = sphi 0, %s47
    %s48 = sphi 0, %s45
    %s49 = sphi 0, %s48
    %s65 = sphi 0, %s49
    %s69 = sphi 0, %s69
    %s71 = sphi 0, %s69
    %s72 = sphi 0, %s71
    %s86 = sphi 0, %s72
    %s92 = sphi 0, %s94
    %s95 = sphi 0, %s92
    %s96 = sphi 0, %s95
    %s112 = sphi 0, %s96
  $region4: #{scconv_forward.5} parent=0 // loop_header_branch
    %12 = sbr.rel (%p10) target = $region8
  $region5: #{scconv_forward.5} parent=0 // loop_body
    %s14 = ssub.s32 %s9, 1
    %s15 = ssub.s32 %s9, 2
    %s16 = sadd.s32 %s9, 1
    %s17 = ssub.s32 %s9, %s16
    %p18 = scmp.eq.s32.totalorder %s17, 0
    %s20 = sadd.s32 %s19, 1
    %s21 = scalar_select %p18, %s19, %s20
    %p24 = pneg %p18
    %p25 = scmp.eq.s32.totalorder %s9, 1
    %p26 = por %p24, %p25
    %p27 = scmp.ne.s32.totalorder %s19, %s22
    %p28 = scmp.eq.s32.totalorder %s9, 0
    %p29 = por %p27, %p28
    %p30 = scmp.ne.s32.totalorder %s19, %s22
    %p31 = scmp.eq.s32.totalorder %s14, 1
    %p32 = por %p30, %p31
    %p33 = scmp.ne.s32.totalorder %s22, %s23
    %p34 = scmp.eq.s32.totalorder %s14, 0
    %p35 = por %p33, %p34
    %p36 = scmp.ne.s32.totalorder %s22, %s23
    %p37 = scmp.eq.s32.totalorder %s15, 1
    %p38 = por %p36, %p37
    %p40 = scmp.ne.s32.totalorder %s23, %s39
    %p41 = scmp.eq.s32.totalorder %s15, 0
    %p42 = por %p40, %p41
    %s43 = ssub.s32 %s9, %s16
    %p44 = scmp.eq.s32.totalorder %s43, 0
    %s46 = sadd.s32 %s45, 1
    %s47 = scalar_select %p44, %s45, %s46
    %p50 = pneg %p44
    %p51 = scmp.eq.s32.totalorder %s9, 1
    %p52 = por %p50, %p51
    %p53 = scmp.ne.s32.totalorder %s45, %s48
    %p54 = scmp.eq.s32.totalorder %s9, 0
    %p55 = por %p53, %p54
    %p56 = scmp.ne.s32.totalorder %s45, %s48
    %p57 = scmp.eq.s32.totalorder %s14, 1
    %p58 = por %p56, %p57
    %p59 = scmp.ne.s32.totalorder %s48, %s49
    %p60 = scmp.eq.s32.totalorder %s14, 0
    %p61 = por %p59, %p60
    %p62 = scmp.ne.s32.totalorder %s48, %s49
    %p63 = scmp.eq.s32.totalorder %s15, 1
    %p64 = por %p62, %p63
    %p66 = scmp.ne.s32.totalorder %s49, %s65
    %p67 = scmp.eq.s32.totalorder %s15, 0
    %p68 = por %p66, %p67
    %s70 = sadd.s32 %s69, 1
    %p73 = scmp.eq.s32.totalorder %s9, 1
    %p74 = scmp.ne.s32.totalorder %s69, %s71
    %p75 = scmp.eq.s32.totalorder %s9, 0
    %p76 = por %p74, %p75
    %p77 = scmp.ne.s32.totalorder %s69, %s71
    %p78 = scmp.eq.s32.totalorder %s14, 1
    %p79 = por %p77, %p78
    %p80 = scmp.ne.s32.totalorder %s71, %s72
    %p81 = scmp.eq.s32.totalorder %s14, 0
    %p82 = por %p80, %p81
    %p83 = scmp.ne.s32.totalorder %s71, %s72
    %p84 = scmp.eq.s32.totalorder %s15, 1
    %p85 = por %p83, %p84
    %p87 = scmp.ne.s32.totalorder %s72, %s86
    %p88 = scmp.eq.s32.totalorder %s15, 0
    %p89 = por %p87, %p88
    %s90 = ssub.s32 %s9, %s16
    %p91 = scmp.eq.s32.totalorder %s90, 0
    %s93 = sadd.s32 %s92, 1
    %s94 = scalar_select %p91, %s92, %s93
    %p97 = pneg %p91
    %p98 = scmp.eq.s32.totalorder %s9, 1
    %p99 = por %p97, %p98
    %p100 = scmp.ne.s32.totalorder %s92, %s95
    %p101 = scmp.eq.s32.totalorder %s9, 0
    %p102 = por %p100, %p101
    %p103 = scmp.ne.s32.totalorder %s92, %s95
    %p104 = scmp.eq.s32.totalorder %s14, 1
    %p105 = por %p103, %p104
    %p106 = scmp.ne.s32.totalorder %s95, %s96
    %p107 = scmp.eq.s32.totalorder %s14, 0
    %p108 = por %p106, %p107
    %p109 = scmp.ne.s32.totalorder %s95, %s96
    %p110 = scmp.eq.s32.totalorder %s15, 1
    %p111 = por %p109, %p110
    %p113 = scmp.ne.s32.totalorder %s96, %s112
    %p114 = scmp.eq.s32.totalorder %s15, 0
    %p115 = por %p113, %p114
    %p116 = scmp.le.s32.totalorder 1, %s9
    %p117 = scmp.lt.s32.totalorder %s9, 3
    %p118 = pnand %p116, %p117
    %p119 = pneg %p118
    // Predicated region
    $region9: #{scconv_forward.5} parent=5 // pred_check
      _
    $region10: #{scconv_forward.5} parent=5 // pred_check_branch
      %121 = sbr.rel (%p118) target = $region12
    $region11: #{scconv_forward.5} parent=5 // pred_region
      %s122 = ssub.s32 %s9, 1
      // Predicated region
      $region13: #{scconv_forward.5} parent=11 // pred_check
        %p123 = pneg %p82
      $region14: #{scconv_forward.5} parent=11 // pred_check_branch
        %125 = sbr.rel (%p123) target = $region16
      $region15: #{scconv_forward.5} parent=11 // pred_region
        _
      $region16: #{scconv_forward.5} parent=11 // pred_fallthru
        _
    $region12: #{scconv_forward.5} parent=5 // pred_fallthru
      _
    %p126 = scmp.lt.s32.totalorder %s9, 2
    // Predicated region
    $region17: #{scconv_forward.5} parent=5 // pred_check
      %p127 = pneg %p126
    $region18: #{scconv_forward.5} parent=5 // pred_check_branch
      %129 = sbr.rel (%p127) target = $region20
    $region19: #{scconv_forward.5} parent=5 // pred_region
      // Predicated region
      $region21: #{scconv_forward.5} parent=19 // pred_check
        %p130 = pneg %p29
      $region22: #{scconv_forward.5} parent=19 // pred_check_branch
        %132 = sbr.rel (%p130) target = $region24
      $region23: #{scconv_forward.5} parent=19 // pred_region
        %p133 = scmp.lt.s32.totalorder %s9, 1
        %s134 = scalar_select %p133, %s9, 1
        %s135 = smul.addr %s134, 32
        %s136 = smul.addr %s135, 8
        %s137 = scalar_lea.vmem %s0, %s136
      $region24: #{scconv_forward.5} parent=19 // pred_fallthru
        _
      // Predicated region
      $region25: #{scconv_forward.5} parent=19 // pred_check
        %p138 = pneg %p55
      $region26: #{scconv_forward.5} parent=19 // pred_check_branch
        %140 = sbr.rel (%p138) target = $region28
      $region27: #{scconv_forward.5} parent=19 // pred_region
        %p141 = scmp.lt.s32.totalorder %s9, 1
        %s142 = scalar_select %p141, %s9, 1
        %s143 = smul.addr %s142, 32
        %s144 = smul.addr %s143, 8
        %s145 = scalar_lea.vmem %s1, %s144
      $region28: #{scconv_forward.5} parent=19 // pred_fallthru
        _
    $region20: #{scconv_forward.5} parent=5 // pred_fallthru
      _
    %p146 = scmp.le.s32.totalorder 1, %s9
    %p147 = scmp.lt.s32.totalorder %s9, 3
    %p148 = pnand %p146, %p147
    %p149 = pneg %p148
    // Predicated region
    $region29: #{scconv_forward.5} parent=5 // pred_check
      _
    $region30: #{scconv_forward.5} parent=5 // pred_check_branch
      %151 = sbr.rel (%p148) target = $region32
    $region31: #{scconv_forward.5} parent=5 // pred_region
      %s152 = ssub.s32 %s9, 1
      %p153 = scmp.lt.s32.totalorder %s14, 1
      %s154 = scalar_select %p153, %s14, 1
      %s155 = smul.addr %s154, 32
      %s156 = smul.addr %s155, 8
      %s157 = scalar_lea.vmem %s0, %s156
      %p158 = pneg %p35
      %p159 = pneg %p32
      %p160 = scmp.lt.s32.totalorder %s14, 1
      %s161 = scalar_select %p160, %s14, 1
      %s162 = smul.addr %s161, 32
      %s163 = smul.addr %s162, 8
      %s164 = scalar_lea.vmem %s1, %s163
      %p165 = pneg %p61
      %p166 = pneg %p58
      %p167 = pneg %p82
      %p168 = pneg %p79
      %p169 = pneg %p108
      %p170 = pneg %p105
      %p171 = scmp.lt.s32.totalorder %s14, 1
      %s172 = scalar_select %p171, %s14, 1
      %s173 = smul.addr %s172, 32
      %s174 = smul.addr %s173, 8
      %s175 = scalar_lea.vmem %s3, %s174
      %p176 = scmp.lt.s32.totalorder %s14, 1
      %s177 = scalar_select %p176, %s14, 1
      %s178 = smul.addr %s177, 32
      %s179 = smul.addr %s178, 8
      %s180 = scalar_lea.vmem %s0, %s179
      %p181 = scmp.lt.s32.totalorder %s14, 1
      %s182 = scalar_select %p181, %s14, 1
      %s183 = smul.addr %s182, 32
      %s184 = smul.addr %s183, 8
      %s185 = scalar_lea.vmem %s1, %s184
      %p186 = scmp.lt.s32.totalorder %s14, 1
      %s187 = scalar_select %p186, %s14, 1
      %s188 = smul.addr %s187, 32
      %s189 = smul.addr %s188, 8
      %s190 = scalar_lea.vmem %s3, %s189
      %v191 = vld [vmem:[%s180] sm:$0xff]
      %v192 = vld [vmem:[%s180 + $0x8] sm:$0xff]
      %v193 = vld [vmem:[%s180 + $0x10] sm:$0xff]
      %v194 = vld [vmem:[%s180 + $0x18] sm:$0xff]
      %v195 = vld [vmem:[%s180 + $0x20] sm:$0xff]
      %v196 = vld [vmem:[%s180 + $0x28] sm:$0xff]
      %v197 = vld [vmem:[%s180 + $0x30] sm:$0xff]
      %v198 = vld [vmem:[%s180 + $0x38] sm:$0xff]
      %v199 = vld [vmem:[%s180 + $0x40] sm:$0xff]
      %v200 = vld [vmem:[%s180 + $0x48] sm:$0xff]
      %v201 = vld [vmem:[%s180 + $0x50] sm:$0xff]
      %v202 = vld [vmem:[%s180 + $0x58] sm:$0xff]
      %v203 = vld [vmem:[%s180 + $0x60] sm:$0xff]
      %v204 = vld [vmem:[%s180 + $0x68] sm:$0xff]
      %v205 = vld [vmem:[%s180 + $0x70] sm:$0xff]
      %v206 = vld [vmem:[%s180 + $0x78] sm:$0xff]
      %v207 = vld [vmem:[%s180 + $0x80] sm:$0xff]
      %v208 = vld [vmem:[%s180 + $0x88] sm:$0xff]
      %v209 = vld [vmem:[%s180 + $0x90] sm:$0xff]
      %v210 = vld [vmem:[%s180 + $0x98] sm:$0xff]
      %v211 = vld [vmem:[%s180 + $0xa0] sm:$0xff]
      %v212 = vld [vmem:[%s180 + $0xa8] sm:$0xff]
      %v213 = vld [vmem:[%s180 + $0xb0] sm:$0xff]
      %v214 = vld [vmem:[%s180 + $0xb8] sm:$0xff]
      %v215 = vld [vmem:[%s180 + $0xc0] sm:$0xff]
      %v216 = vld [vmem:[%s180 + $0xc8] sm:$0xff]
      %v217 = vld [vmem:[%s180 + $0xd0] sm:$0xff]
      %v218 = vld [vmem:[%s180 + $0xd8] sm:$0xff]
      %v219 = vld [vmem:[%s180 + $0xe0] sm:$0xff]
      %v220 = vld [vmem:[%s180 + $0xe8] sm:$0xff]
      %v221 = vld [vmem:[%s180 + $0xf0] sm:$0xff]
      %v222 = vld [vmem:[%s180 + $0xf8] sm:$0xff]
      %v223 = vld [vmem:[%s185] sm:$0xff]
      %v224 = vld [vmem:[%s185 + $0x8] sm:$0xff]
      %v225 = vld [vmem:[%s185 + $0x10] sm:$0xff]
      %v226 = vld [vmem:[%s185 + $0x18] sm:$0xff]
      %v227 = vld [vmem:[%s185 + $0x20] sm:$0xff]
      %v228 = vld [vmem:[%s185 + $0x28] sm:$0xff]
      %v229 = vld [vmem:[%s185 + $0x30] sm:$0xff]
      %v230 = vld [vmem:[%s185 + $0x38] sm:$0xff]
      %v231 = vld [vmem:[%s185 + $0x40] sm:$0xff]
      %v232 = vld [vmem:[%s185 + $0x48] sm:$0xff]
      %v233 = vld [vmem:[%s185 + $0x50] sm:$0xff]
      %v234 = vld [vmem:[%s185 + $0x58] sm:$0xff]
      %v235 = vld [vmem:[%s185 + $0x60] sm:$0xff]
      %v236 = vld [vmem:[%s185 + $0x68] sm:$0xff]
      %v237 = vld [vmem:[%s185 + $0x70] sm:$0xff]
      %v238 = vld [vmem:[%s185 + $0x78] sm:$0xff]
      %v239 = vld [vmem:[%s185 + $0x80] sm:$0xff]
      %v240 = vld [vmem:[%s185 + $0x88] sm:$0xff]
      %v241 = vld [vmem:[%s185 + $0x90] sm:$0xff]
      %v242 = vld [vmem:[%s185 + $0x98] sm:$0xff]
      %v243 = vld [vmem:[%s185 + $0xa0] sm:$0xff]
      %v244 = vld [vmem:[%s185 + $0xa8] sm:$0xff]
      %v245 = vld [vmem:[%s185 + $0xb0] sm:$0xff]
      %v246 = vld [vmem:[%s185 + $0xb8] sm:$0xff]
      %v247 = vld [vmem:[%s185 + $0xc0] sm:$0xff]
      %v248 = vld [vmem:[%s185 + $0xc8] sm:$0xff]
      %v249 = vld [vmem:[%s185 + $0xd0] sm:$0xff]
      %v250 = vld [vmem:[%s185 + $0xd8] sm:$0xff]
      %v251 = vld [vmem:[%s185 + $0xe0] sm:$0xff]
      %v252 = vld [vmem:[%s185 + $0xe8] sm:$0xff]
      %v253 = vld [vmem:[%s185 + $0xf0] sm:$0xff]
      %v254 = vld [vmem:[%s185 + $0xf8] sm:$0xff]
      %v255 = vld [vmem:[%s2] sm:$0xf]
      %vm256 = vcmask 31744
      %v258 = vsel %vm256, %v223, 0
      %v261 = vsel %vm256, %v224, 0
      %v264 = vsel %vm256, %v225, 0
      %v267 = vsel %vm256, %v226, 0
      %v270 = vsel %vm256, %v227, 0
      %v273 = vsel %vm256, %v228, 0
      %v276 = vsel %vm256, %v229, 0
      %v279 = vsel %vm256, %v230, 0
      %v282 = vsel %vm256, %v231, 0
      %v285 = vsel %vm256, %v232, 0
      %v288 = vsel %vm256, %v233, 0
      %v291 = vsel %vm256, %v234, 0
      %v294 = vsel %vm256, %v235, 0
      %v297 = vsel %vm256, %v236, 0
      %v300 = vsel %vm256, %v237, 0
      %v303 = vsel %vm256, %v238, 0
      %v306 = vsel %vm256, %v239, 0
      %v309 = vsel %vm256, %v240, 0
      %v312 = vsel %vm256, %v241, 0
      %v315 = vsel %vm256, %v242, 0
      %v318 = vsel %vm256, %v243, 0
      %v321 = vsel %vm256, %v244, 0
      %v324 = vsel %vm256, %v245, 0
      %v327 = vsel %vm256, %v246, 0
      %v330 = vsel %vm256, %v247, 0
      %v333 = vsel %vm256, %v248, 0
      %v336 = vsel %vm256, %v249, 0
      %v339 = vsel %vm256, %v250, 0
      %v342 = vsel %vm256, %v251, 0
      %v345 = vsel %vm256, %v252, 0
      %v348 = vsel %vm256, %v253, 0
      %v351 = vsel %vm256, %v254, 0
      %vm353 = vcmask 1043456
      %v355 = vsel %vm353, %v255, 0
      %357 = vmatpush.msra.mxu0 0.0
      %358 = vmatpush.msra.mxu0 0.0
      %359 = vmatpush.msra.mxu0 0.0
      %360 = vmatpush.msra.mxu0 0.0
      %361 = vmatpush.msra.mxu0 0.0
      %362 = vmatpush.msra.mxu0 0.0
      %363 = vmatpush.msra.mxu0 0.0
      %364 = vmatpush.msra.mxu0 0.0
      %365 = vmatpush.msra.mxu0 0.0
      %366 = vmatpush.msra.mxu0 0.0
      %367 = vmatpush.msra.mxu0 0.0
      %368 = vmatpush.msra.mxu0 0.0
      %369 = vmatpush.msra.mxu0 0.0
      %370 = vmatpush.msra.mxu0 0.0
      %371 = vmatpush.msra.mxu0 0.0
      %372 = vmatpush.msra.mxu0 %v355
      %373 = vmatmul.f32.gmra.mxu0 %v258
      %v374 = vpop.f32.mrf.mxu0
      %v375 = vadd.f32 0.0, %v374
      %376 = vmatmul.f32.gmra.mxu0 %v261
      %v377 = vpop.f32.mrf.mxu0
      %v378 = vadd.f32 0.0, %v377
      %379 = vmatmul.f32.gmra.mxu0 %v264
      %v380 = vpop.f32.mrf.mxu0
      %v381 = vadd.f32 0.0, %v380
      %382 = vmatmul.f32.gmra.mxu0 %v267
      %v383 = vpop.f32.mrf.mxu0
      %v384 = vadd.f32 0.0, %v383
      %385 = vmatmul.f32.gmra.mxu0 %v270
      %v386 = vpop.f32.mrf.mxu0
      %v387 = vadd.f32 0.0, %v386
      %388 = vmatmul.f32.gmra.mxu0 %v273
      %v389 = vpop.f32.mrf.mxu0
      %v390 = vadd.f32 0.0, %v389
      %391 = vmatmul.f32.gmra.mxu0 %v276
      %v392 = vpop.f32.mrf.mxu0
      %v393 = vadd.f32 0.0, %v392
      %394 = vmatmul.f32.gmra.mxu0 %v279
      %v395 = vpop.f32.mrf.mxu0
      %v396 = vadd.f32 0.0, %v395
      %397 = vmatmul.f32.gmra.mxu0 %v282
      %v398 = vpop.f32.mrf.mxu0
      %v399 = vadd.f32 0.0, %v398
      %400 = vmatmul.f32.gmra.mxu0 %v285
      %v401 = vpop.f32.mrf.mxu0
      %v402 = vadd.f32 0.0, %v401
      %403 = vmatmul.f32.gmra.mxu0 %v288
      %v404 = vpop.f32.mrf.mxu0
      %v405 = vadd.f32 0.0, %v404
      %406 = vmatmul.f32.gmra.mxu0 %v291
      %v407 = vpop.f32.mrf.mxu0
      %v408 = vadd.f32 0.0, %v407
      %409 = vmatmul.f32.gmra.mxu0 %v294
      %v410 = vpop.f32.mrf.mxu0
      %v411 = vadd.f32 0.0, %v410
      %412 = vmatmul.f32.gmra.mxu0 %v297
      %v413 = vpop.f32.mrf.mxu0
      %v414 = vadd.f32 0.0, %v413
      %415 = vmatmul.f32.gmra.mxu0 %v300
      %v416 = vpop.f32.mrf.mxu0
      %v417 = vadd.f32 0.0, %v416
      %418 = vmatmul.f32.gmra.mxu0 %v303
      %v419 = vpop.f32.mrf.mxu0
      %v420 = vadd.f32 0.0, %v419
      %421 = vmatmul.f32.gmra.mxu0 %v306
      %v422 = vpop.f32.mrf.mxu0
      %v423 = vadd.f32 0.0, %v422
      %424 = vmatmul.f32.gmra.mxu0 %v309
      %v425 = vpop.f32.mrf.mxu0
      %v426 = vadd.f32 0.0, %v425
      %427 = vmatmul.f32.gmra.mxu0 %v312
      %v428 = vpop.f32.mrf.mxu0
      %v429 = vadd.f32 0.0, %v428
      %430 = vmatmul.f32.gmra.mxu0 %v315
      %v431 = vpop.f32.mrf.mxu0
      %v432 = vadd.f32 0.0, %v431
      %433 = vmatmul.f32.gmra.mxu0 %v318
      %v434 = vpop.f32.mrf.mxu0
      %v435 = vadd.f32 0.0, %v434
      %436 = vmatmul.f32.gmra.mxu0 %v321
      %v437 = vpop.f32.mrf.mxu0
      %v438 = vadd.f32 0.0, %v437
      %439 = vmatmul.f32.gmra.mxu0 %v324
      %v440 = vpop.f32.mrf.mxu0
      %v441 = vadd.f32 0.0, %v440
      %442 = vmatmul.f32.gmra.mxu0 %v327
      %v443 = vpop.f32.mrf.mxu0
      %v444 = vadd.f32 0.0, %v443
      %445 = vmatmul.f32.gmra.mxu0 %v330
      %v446 = vpop.f32.mrf.mxu0
      %v447 = vadd.f32 0.0, %v446
      %448 = vmatmul.f32.gmra.mxu0 %v333
      %v449 = vpop.f32.mrf.mxu0
      %v450 = vadd.f32 0.0, %v449
      %451 = vmatmul.f32.gmra.mxu0 %v336
      %v452 = vpop.f32.mrf.mxu0
      %v453 = vadd.f32 0.0, %v452
      %454 = vmatmul.f32.gmra.mxu0 %v339
      %v455 = vpop.f32.mrf.mxu0
      %v456 = vadd.f32 0.0, %v455
      %457 = vmatmul.f32.gmra.mxu0 %v342
      %v458 = vpop.f32.mrf.mxu0
      %v459 = vadd.f32 0.0, %v458
      %460 = vmatmul.f32.gmra.mxu0 %v345
      %v461 = vpop.f32.mrf.mxu0
      %v462 = vadd.f32 0.0, %v461
      %463 = vmatmul.f32.gmra.mxu0 %v348
      %v464 = vpop.f32.mrf.mxu0
      %v465 = vadd.f32 0.0, %v464
      %466 = vmatmul.f32.gmra.mxu0 %v351
      %v467 = vpop.f32.mrf.mxu0
      %v468 = vadd.f32 0.0, %v467
      %469 = vdwg.mxu0
      %vm470 = vcmask 130048
      %v471 = vsel %vm470, %v191, 0.0
      %v472 = vsel %vm470, %v192, 0.0
      %v473 = vadd.f32 %v471, %v472
      %v474 = vsel %vm470, %v193, 0.0
      %v475 = vadd.f32 %v473, %v474
      %v476 = vsel %vm470, %v194, 0.0
      %v477 = vadd.f32 %v475, %v476
      %v478 = vsel %vm470, %v195, 0.0
      %v479 = vadd.f32 %v477, %v478
      %v480 = vsel %vm470, %v196, 0.0
      %v481 = vadd.f32 %v479, %v480
      %v482 = vsel %vm470, %v197, 0.0
      %v483 = vadd.f32 %v481, %v482
      %v484 = vsel %vm470, %v198, 0.0
      %v485 = vadd.f32 %v483, %v484
      %v486 = vsel %vm470, %v199, 0.0
      %v487 = vadd.f32 %v485, %v486
      %v488 = vsel %vm470, %v200, 0.0
      %v489 = vadd.f32 %v487, %v488
      %v490 = vsel %vm470, %v201, 0.0
      %v491 = vadd.f32 %v489, %v490
      %v492 = vsel %vm470, %v202, 0.0
      %v493 = vadd.f32 %v491, %v492
      %v494 = vsel %vm470, %v203, 0.0
      %v495 = vadd.f32 %v493, %v494
      %v496 = vsel %vm470, %v204, 0.0
      %v497 = vadd.f32 %v495, %v496
      %v498 = vsel %vm470, %v205, 0.0
      %v499 = vadd.f32 %v497, %v498
      %v500 = vsel %vm470, %v206, 0.0
      %v501 = vadd.f32 %v499, %v500
      %v502 = vsel %vm470, %v207, 0.0
      %v503 = vadd.f32 %v501, %v502
      %v504 = vsel %vm470, %v208, 0.0
      %v505 = vadd.f32 %v503, %v504
      %v506 = vsel %vm470, %v209, 0.0
      %v507 = vadd.f32 %v505, %v506
      %v508 = vsel %vm470, %v210, 0.0
      %v509 = vadd.f32 %v507, %v508
      %v510 = vsel %vm470, %v211, 0.0
      %v511 = vadd.f32 %v509, %v510
      %v512 = vsel %vm470, %v212, 0.0
      %v513 = vadd.f32 %v511, %v512
      %v514 = vsel %vm470, %v213, 0.0
      %v515 = vadd.f32 %v513, %v514
      %v516 = vsel %vm470, %v214, 0.0
      %v517 = vadd.f32 %v515, %v516
      %v518 = vsel %vm470, %v215, 0.0
      %v519 = vadd.f32 %v517, %v518
      %v520 = vsel %vm470, %v216, 0.0
      %v521 = vadd.f32 %v519, %v520
      %v522 = vsel %vm470, %v217, 0.0
      %v523 = vadd.f32 %v521, %v522
      %v524 = vsel %vm470, %v218, 0.0
      %v525 = vadd.f32 %v523, %v524
      %v526 = vsel %vm470, %v219, 0.0
      %v527 = vadd.f32 %v525, %v526
      %v528 = vsel %vm470, %v220, 0.0
      %v529 = vadd.f32 %v527, %v528
      %v530 = vsel %vm470, %v221, 0.0
      %v531 = vadd.f32 %v529, %v530
      %v532 = vsel %vm470, %v222, 0.0
      %v533 = vadd.f32 %v531, %v532
      %v534 = vrot.slane %v533, 4
      %v535 = vadd.f32 %v533, %v534
      %v536 = vrot.slane %v535, 2
      %v537 = vadd.f32 %v535, %v536
      %v538 = vrot.slane %v537, 1
      %v539 = vadd.f32 %v537, %v538
      %v540 = vrcp.pop 256.0
      %v541 = vmul.f32 256.0, %v540
      %v542 = vsub.f32 1.0, %v541
      %v543 = vmul.f32 %v540, %v542
      %v544 = vadd.f32 %v540, %v543
      %vm545 = vweird.f32 %v540
      %v546 = vsel %vm545, %v540, %v544
      %v547 = vmul.f32 %v539, %v546
      %v548 = vsel %vm470, %v375, 0.0
      %v549 = vsel %vm470, %v378, 0.0
      %v550 = vadd.f32 %v548, %v549
      %v551 = vsel %vm470, %v381, 0.0
      %v552 = vadd.f32 %v550, %v551
      %v553 = vsel %vm470, %v384, 0.0
      %v554 = vadd.f32 %v552, %v553
      %v555 = vsel %vm470, %v387, 0.0
      %v556 = vadd.f32 %v554, %v555
      %v557 = vsel %vm470, %v390, 0.0
      %v558 = vadd.f32 %v556, %v557
      %v559 = vsel %vm470, %v393, 0.0
      %v560 = vadd.f32 %v558, %v559
      %v561 = vsel %vm470, %v396, 0.0
      %v562 = vadd.f32 %v560, %v561
      %v563 = vsel %vm470, %v399, 0.0
      %v564 = vadd.f32 %v562, %v563
      %v565 = vsel %vm470, %v402, 0.0
      %v566 = vadd.f32 %v564, %v565
      %v567 = vsel %vm470, %v405, 0.0
      %v568 = vadd.f32 %v566, %v567
      %v569 = vsel %vm470, %v408, 0.0
      %v570 = vadd.f32 %v568, %v569
      %v571 = vsel %vm470, %v411, 0.0
      %v572 = vadd.f32 %v570, %v571
      %v573 = vsel %vm470, %v414, 0.0
      %v574 = vadd.f32 %v572, %v573
      %v575 = vsel %vm470, %v417, 0.0
      %v576 = vadd.f32 %v574, %v575
      %v577 = vsel %vm470, %v420, 0.0
      %v578 = vadd.f32 %v576, %v577
      %v579 = vsel %vm470, %v423, 0.0
      %v580 = vadd.f32 %v578, %v579
      %v581 = vsel %vm470, %v426, 0.0
      %v582 = vadd.f32 %v580, %v581
      %v583 = vsel %vm470, %v429, 0.0
      %v584 = vadd.f32 %v582, %v583
      %v585 = vsel %vm470, %v432, 0.0
      %v586 = vadd.f32 %v584, %v585
      %v587 = vsel %vm470, %v435, 0.0
      %v588 = vadd.f32 %v586, %v587
      %v589 = vsel %vm470, %v438, 0.0
      %v590 = vadd.f32 %v588, %v589
      %v591 = vsel %vm470, %v441, 0.0
      %v592 = vadd.f32 %v590, %v591
      %v593 = vsel %vm470, %v444, 0.0
      %v594 = vadd.f32 %v592, %v593
      %v595 = vsel %vm470, %v447, 0.0
      %v596 = vadd.f32 %v594, %v595
      %v597 = vsel %vm470, %v450, 0.0
      %v598 = vadd.f32 %v596, %v597
      %v599 = vsel %vm470, %v453, 0.0
      %v600 = vadd.f32 %v598, %v599
      %v601 = vsel %vm470, %v456, 0.0
      %v602 = vadd.f32 %v600, %v601
      %v603 = vsel %vm470, %v459, 0.0
      %v604 = vadd.f32 %v602, %v603
      %v605 = vsel %vm470, %v462, 0.0
      %v606 = vadd.f32 %v604, %v605
      %v607 = vsel %vm470, %v465, 0.0
      %v608 = vadd.f32 %v606, %v607
      %v609 = vsel %vm470, %v468, 0.0
      %v610 = vadd.f32 %v608, %v609
      %v611 = vrot.slane %v610, 4
      %v612 = vadd.f32 %v610, %v611
      %v613 = vrot.slane %v612, 2
      %v614 = vadd.f32 %v612, %v613
      %v615 = vrot.slane %v614, 1
      %v616 = vadd.f32 %v614, %v615
      %v617 = vmul.f32 %v616, %v546
      %v618 = vsub.f32 %v547, %v617
      %v619 = vxor.u32 %v618, 2147483648
      %v620 = vmul.f32 %v619, 1.442695
      %v621 = vpow.pop %v620
      %v622 = vadd.f32 %v621, 1.0
      %v623 = vrcp.pop %v622
      %v624 = vmul.f32 %v622, %v623
      %v625 = vsub.f32 1.0, %v624
      %v626 = vmul.f32 %v623, %v625
      %v627 = vadd.f32 %v623, %v626
      %vm628 = vweird.f32 %v622
      %vm629 = vweird.f32 %v623
      %vm630 = vmor %vm628, %vm629
      %v631 = vsel %vm630, %v623, %v627
      %v632 = vand.u32 2147483647, %v622
      %vm633 = vcmp.eq.f32.partialorder %v632, 8.507059e+37
      %v634 = vand.u32 %v622, 2147483648
      %v635 = vor.u32 1.1754944e-38, %v634
      %v636 = vsel %vm633, %v635, %v631
      %v637 = vmul.f32 1.0, %v636
      %v638 = vmul.f32 %v191, %v637
      %v639 = vmul.f32 %v192, %v637
      %v640 = vmul.f32 %v193, %v637
      %v641 = vmul.f32 %v194, %v637
      %v642 = vmul.f32 %v195, %v637
      %v643 = vmul.f32 %v196, %v637
      %v644 = vmul.f32 %v197, %v637
      %v645 = vmul.f32 %v198, %v637
      %v646 = vmul.f32 %v199, %v637
      %v647 = vmul.f32 %v200, %v637
      %v648 = vmul.f32 %v201, %v637
      %v649 = vmul.f32 %v202, %v637
      %v650 = vmul.f32 %v203, %v637
      %v651 = vmul.f32 %v204, %v637
      %v652 = vmul.f32 %v205, %v637
      %v653 = vmul.f32 %v206, %v637
      %v654 = vmul.f32 %v207, %v637
      %v655 = vmul.f32 %v208, %v637
      %v656 = vmul.f32 %v209, %v637
      %v657 = vmul.f32 %v210, %v637
      %v658 = vmul.f32 %v211, %v637
      %v659 = vmul.f32 %v212, %v637
      %v660 = vmul.f32 %v213, %v637
      %v661 = vmul.f32 %v214, %v637
      %v662 = vmul.f32 %v215, %v637
      %v663 = vmul.f32 %v216, %v637
      %v664 = vmul.f32 %v217, %v637
      %v665 = vmul.f32 %v218, %v637
      %v666 = vmul.f32 %v219, %v637
      %v667 = vmul.f32 %v220, %v637
      %v668 = vmul.f32 %v221, %v637
      %v669 = vmul.f32 %v222, %v637
      %v670 = vsub.f32 1.0, %v637
      %v671 = vmul.f32 %v375, %v670
      %v672 = vmul.f32 %v378, %v670
      %v673 = vmul.f32 %v381, %v670
      %v674 = vmul.f32 %v384, %v670
      %v675 = vmul.f32 %v387, %v670
      %v676 = vmul.f32 %v390, %v670
      %v677 = vmul.f32 %v393, %v670
      %v678 = vmul.f32 %v396, %v670
      %v679 = vmul.f32 %v399, %v670
      %v680 = vmul.f32 %v402, %v670
      %v681 = vmul.f32 %v405, %v670
      %v682 = vmul.f32 %v408, %v670
      %v683 = vmul.f32 %v411, %v670
      %v684 = vmul.f32 %v414, %v670
      %v685 = vmul.f32 %v417, %v670
      %v686 = vmul.f32 %v420, %v670
      %v687 = vmul.f32 %v423, %v670
      %v688 = vmul.f32 %v426, %v670
      %v689 = vmul.f32 %v429, %v670
      %v690 = vmul.f32 %v432, %v670
      %v691 = vmul.f32 %v435, %v670
      %v692 = vmul.f32 %v438, %v670
      %v693 = vmul.f32 %v441, %v670
      %v694 = vmul.f32 %v444, %v670
      %v695 = vmul.f32 %v447, %v670
      %v696 = vmul.f32 %v450, %v670
      %v697 = vmul.f32 %v453, %v670
      %v698 = vmul.f32 %v456, %v670
      %v699 = vmul.f32 %v459, %v670
      %v700 = vmul.f32 %v462, %v670
      %v701 = vmul.f32 %v465, %v670
      %v702 = vmul.f32 %v468, %v670
      %v703 = vadd.f32 %v638, %v671
      %v704 = vadd.f32 %v639, %v672
      %v705 = vadd.f32 %v640, %v673
      %v706 = vadd.f32 %v641, %v674
      %v707 = vadd.f32 %v642, %v675
      %v708 = vadd.f32 %v643, %v676
      %v709 = vadd.f32 %v644, %v677
      %v710 = vadd.f32 %v645, %v678
      %v711 = vadd.f32 %v646, %v679
      %v712 = vadd.f32 %v647, %v680
      %v713 = vadd.f32 %v648, %v681
      %v714 = vadd.f32 %v649, %v682
      %v715 = vadd.f32 %v650, %v683
      %v716 = vadd.f32 %v651, %v684
      %v717 = vadd.f32 %v652, %v685
      %v718 = vadd.f32 %v653, %v686
      %v719 = vadd.f32 %v654, %v687
      %v720 = vadd.f32 %v655, %v688
      %v721 = vadd.f32 %v656, %v689
      %v722 = vadd.f32 %v657, %v690
      %v723 = vadd.f32 %v658, %v691
      %v724 = vadd.f32 %v659, %v692
      %v725 = vadd.f32 %v660, %v693
      %v726 = vadd.f32 %v661, %v694
      %v727 = vadd.f32 %v662, %v695
      %v728 = vadd.f32 %v663, %v696
      %v729 = vadd.f32 %v664, %v697
      %v730 = vadd.f32 %v665, %v698
      %v731 = vadd.f32 %v666, %v699
      %v732 = vadd.f32 %v667, %v700
      %v733 = vadd.f32 %v668, %v701
      %v734 = vadd.f32 %v669, %v702
      %735 = vst.msk [vmem:[%s190] sm:$0xff] %vm470, %v703
      %736 = vst.msk [vmem:[%s190 + $0x8] sm:$0xff] %vm470, %v704
      %737 = vst.msk [vmem:[%s190 + $0x10] sm:$0xff] %vm470, %v705
      %738 = vst.msk [vmem:[%s190 + $0x18] sm:$0xff] %vm470, %v706
      %739 = vst.msk [vmem:[%s190 + $0x20] sm:$0xff] %vm470, %v707
      %740 = vst.msk [vmem:[%s190 + $0x28] sm:$0xff] %vm470, %v708
      %741 = vst.msk [vmem:[%s190 + $0x30] sm:$0xff] %vm470, %v709
      %742 = vst.msk [vmem:[%s190 + $0x38] sm:$0xff] %vm470, %v710
      %743 = vst.msk [vmem:[%s190 + $0x40] sm:$0xff] %vm470, %v711
      %744 = vst.msk [vmem:[%s190 + $0x48] sm:$0xff] %vm470, %v712
      %745 = vst.msk [vmem:[%s190 + $0x50] sm:$0xff] %vm470, %v713
      %746 = vst.msk [vmem:[%s190 + $0x58] sm:$0xff] %vm470, %v714
      %747 = vst.msk [vmem:[%s190 + $0x60] sm:$0xff] %vm470, %v715
      %748 = vst.msk [vmem:[%s190 + $0x68] sm:$0xff] %vm470, %v716
      %749 = vst.msk [vmem:[%s190 + $0x70] sm:$0xff] %vm470, %v717
      %750 = vst.msk [vmem:[%s190 + $0x78] sm:$0xff] %vm470, %v718
      %751 = vst.msk [vmem:[%s190 + $0x80] sm:$0xff] %vm470, %v719
      %752 = vst.msk [vmem:[%s190 + $0x88] sm:$0xff] %vm470, %v720
      %753 = vst.msk [vmem:[%s190 + $0x90] sm:$0xff] %vm470, %v721
      %754 = vst.msk [vmem:[%s190 + $0x98] sm:$0xff] %vm470, %v722
      %755 = vst.msk [vmem:[%s190 + $0xa0] sm:$0xff] %vm470, %v723
      %756 = vst.msk [vmem:[%s190 + $0xa8] sm:$0xff] %vm470, %v724
      %757 = vst.msk [vmem:[%s190 + $0xb0] sm:$0xff] %vm470, %v725
      %758 = vst.msk [vmem:[%s190 + $0xb8] sm:$0xff] %vm470, %v726
      %759 = vst.msk [vmem:[%s190 + $0xc0] sm:$0xff] %vm470, %v727
      %760 = vst.msk [vmem:[%s190 + $0xc8] sm:$0xff] %vm470, %v728
      %761 = vst.msk [vmem:[%s190 + $0xd0] sm:$0xff] %vm470, %v729
      %762 = vst.msk [vmem:[%s190 + $0xd8] sm:$0xff] %vm470, %v730
      %763 = vst.msk [vmem:[%s190 + $0xe0] sm:$0xff] %vm470, %v731
      %764 = vst.msk [vmem:[%s190 + $0xe8] sm:$0xff] %vm470, %v732
      %765 = vst.msk [vmem:[%s190 + $0xf0] sm:$0xff] %vm470, %v733
      %766 = vst.msk [vmem:[%s190 + $0xf8] sm:$0xff] %vm470, %v734
      %p767 = scmp.lt.s32.totalorder %s14, 1
      %s768 = scalar_select %p767, %s14, 1
      %s769 = smul.addr %s768, 32
      %s770 = smul.addr %s769, 8
      %s771 = scalar_lea.vmem %s3, %s770
      // Predicated region
      $region33: #{scconv_forward.5} parent=31 // pred_check
        %p772 = pneg %p105
      $region34: #{scconv_forward.5} parent=31 // pred_check_branch
        %774 = sbr.rel (%p772) target = $region36
      $region35: #{scconv_forward.5} parent=31 // pred_region
        _
      $region36: #{scconv_forward.5} parent=31 // pred_fallthru
        _
    $region32: #{scconv_forward.5} parent=5 // pred_fallthru
      _
    %p775 = scmp.le.s32.totalorder 2, %s9
    // Predicated region
    $region37: #{scconv_forward.5} parent=5 // pred_check
      %p776 = pneg %p775
    $region38: #{scconv_forward.5} parent=5 // pred_check_branch
      %778 = sbr.rel (%p776) target = $region40
    $region39: #{scconv_forward.5} parent=5 // pred_region
      %s779 = ssub.s32 %s9, 2
      // Predicated region
      $region41: #{scconv_forward.5} parent=39 // pred_check
        %p780 = pneg %p111
      $region42: #{scconv_forward.5} parent=39 // pred_check_branch
        %782 = sbr.rel (%p780) target = $region44
      $region43: #{scconv_forward.5} parent=39 // pred_region
        %p783 = scmp.lt.s32.totalorder %s15, 1
        %s784 = scalar_select %p783, %s15, 1
        %s785 = smul.addr %s784, 32
        %s786 = smul.addr %s785, 8
        %s787 = scalar_lea.vmem %s3, %s786
      $region44: #{scconv_forward.5} parent=39 // pred_fallthru
        _
    $region40: #{scconv_forward.5} parent=5 // pred_fallthru
      _
  $region6: #{scconv_forward.5} parent=0 // loop_footer
    %s13 = sadd.s32 1, %s9
  $region7: #{scconv_forward.5} parent=0 // loop_footer_branch
    %8 = sbr.rel target = $region3
  $region8: #{scconv_forward.5} parent=0 // loop_exit
    _

// kernel: scconv_forward.3
$region0: #{scconv_forward.3}
  #allocation0 [shape = 'u32[]', space=smem, size = 0x4, offset = 0x4, fixed_abs, tag = 'smem constant byte address 0x4 - core index']
  #allocation1 [shape = 'u32[72,128]{1,0:T(1,128)}', space=vmem, size = 0x9000, scoped, tag = 'internal scratch']
  %s0 = inlined_call_operand.vmem [shape: f32[2,256,16], index: 0, kind: input, shape index: {}]
  %s1 = inlined_call_operand.vmem [shape: f32[1,16], index: 1, kind: input, shape index: {}]
  %s2 = inlined_call_operand.vmem [shape: f32[1,16], index: 2, kind: input, shape index: {}]
  %s3 = inlined_call_operand.vmem [shape: f32[1,16], index: 3, kind: input, shape index: {}]
  %s4 = inlined_call_operand.vmem [shape: f32[16,16], index: 4, kind: input, shape index: {}]
  %s5 = inlined_call_operand.vmem [shape: f32[16,4], index: 5, kind: input, shape index: {}]
  %s6 = inlined_call_operand.vmem [shape: f32[16,4], index: 6, kind: input, shape index: {}]
  %s7 = inlined_call_operand.vmem [shape: f32[16,4], index: 7, kind: input, shape index: {}]
  %s8 = inlined_call_operand.vmem [shape: f32[16,4], index: 8, kind: input, shape index: {}]
  %s9 = inlined_call_operand.vmem [shape: f32[2,320,4], index: 9, kind: output, shape index: {0}]
  %s10 = inlined_call_operand.vmem [shape: f32[2,256,4], index: 10, kind: output, shape index: {1}]
  %11 = xla_tuple %s9, %s10
  %s12 = sld [smem:[#allocation0]]
  $region77: #{scconv_forward.3} parent=0
    _
  %s14 = ssub.s32 1, %s12
  %s15 = scalar_select 0, %s14, %s12
  loop: start=0, step=1, limit=4
  $region2: #{scconv_forward.3} parent=0 // loop_pre_header
    _
  $region3: #{scconv_forward.3} parent=0 // loop_header
    %s17 = sphi 0, %s21
    %p18 = scmp.ge.s32.totalorder %s17, 4
    %s27 = sphi 0, %s29
    %s30 = sphi 0, %s27
    %s31 = sphi 0, %s30
    %s47 = sphi 0, %s31
    %s51 = sphi 0, %s51
    %s53 = sphi 0, %s51
    %s54 = sphi 0, %s53
    %s68 = sphi 0, %s54
    %s72 = sphi 0, %s72
    %s74 = sphi 0, %s72
    %s75 = sphi 0, %s74
    %s89 = sphi 0, %s75
    %s93 = sphi 0, %s93
    %s95 = sphi 0, %s93
    %s96 = sphi 0, %s95
    %s110 = sphi 0, %s96
    %s114 = sphi 0, %s114
    %s116 = sphi 0, %s114
    %s117 = sphi 0, %s116
    %s131 = sphi 0, %s117
    %s135 = sphi 0, %s135
    %s137 = sphi 0, %s135
    %s138 = sphi 0, %s137
    %s152 = sphi 0, %s138
    %s156 = sphi 0, %s156
    %s158 = sphi 0, %s156
    %s159 = sphi 0, %s158
    %s173 = sphi 0, %s159
    %s177 = sphi 0, %s177
    %s179 = sphi 0, %s177
    %s180 = sphi 0, %s179
    %s194 = sphi 0, %s180
    %s198 = sphi 0, %s198
    %s200 = sphi 0, %s198
    %s201 = sphi 0, %s200
    %s215 = sphi 0, %s201
    %s221 = sphi 0, %s223
    %s224 = sphi 0, %s221
    %s225 = sphi 0, %s224
    %s241 = sphi 0, %s225
    %s247 = sphi 0, %s249
    %s250 = sphi 0, %s247
    %s251 = sphi 0, %s250
    %s267 = sphi 0, %s251
  $region4: #{scconv_forward.3} parent=0 // loop_header_branch
    %20 = sbr.rel (%p18) target = $region8
  $region5: #{scconv_forward.3} parent=0 // loop_body
    %s22 = ssub.s32 %s17, 1
    %s23 = ssub.s32 %s17, 2
    %s24 = sadd.s32 %s17, 1
    %s25 = ssub.s32 %s17, %s24
    %p26 = scmp.eq.s32.totalorder %s25, 0
    %s28 = sadd.s32 %s27, 1
    %s29 = scalar_select %p26, %s27, %s28
    %p32 = pneg %p26
    %p33 = scmp.eq.s32.totalorder %s17, 1
    %p34 = por %p32, %p33
    %p35 = scmp.ne.s32.totalorder %s27, %s30
    %p36 = scmp.eq.s32.totalorder %s17, 0
    %p37 = por %p35, %p36
    %p38 = scmp.ne.s32.totalorder %s27, %s30
    %p39 = scmp.eq.s32.totalorder %s22, 1
    %p40 = por %p38, %p39
    %p41 = scmp.ne.s32.totalorder %s30, %s31
    %p42 = scmp.eq.s32.totalorder %s22, 0
    %p43 = por %p41, %p42
    %p44 = scmp.ne.s32.totalorder %s30, %s31
    %p45 = scmp.eq.s32.totalorder %s23, 1
    %p46 = por %p44, %p45
    %p48 = scmp.ne.s32.totalorder %s31, %s47
    %p49 = scmp.eq.s32.totalorder %s23, 0
    %p50 = por %p48, %p49
    %s52 = sadd.s32 %s51, 1
    %p55 = scmp.eq.s32.totalorder %s17, 1
    %p56 = scmp.ne.s32.totalorder %s51, %s53
    %p57 = scmp.eq.s32.totalorder %s17, 0
    %p58 = por %p56, %p57
    %p59 = scmp.ne.s32.totalorder %s51, %s53
    %p60 = scmp.eq.s32.totalorder %s22, 1
    %p61 = por %p59, %p60
    %p62 = scmp.ne.s32.totalorder %s53, %s54
    %p63 = scmp.eq.s32.totalorder %s22, 0
    %p64 = por %p62, %p63
    %p65 = scmp.ne.s32.totalorder %s53, %s54
    %p66 = scmp.eq.s32.totalorder %s23, 1
    %p67 = por %p65, %p66
    %p69 = scmp.ne.s32.totalorder %s54, %s68
    %p70 = scmp.eq.s32.totalorder %s23, 0
    %p71 = por %p69, %p70
    %s73 = sadd.s32 %s72, 1
    %p76 = scmp.eq.s32.totalorder %s17, 1
    %p77 = scmp.ne.s32.totalorder %s72, %s74
    %p78 = scmp.eq.s32.totalorder %s17, 0
    %p79 = por %p77, %p78
    %p80 = scmp.ne.s32.totalorder %s72, %s74
    %p81 = scmp.eq.s32.totalorder %s22, 1
    %p82 = por %p80, %p81
    %p83 = scmp.ne.s32.totalorder %s74, %s75
    %p84 = scmp.eq.s32.totalorder %s22, 0
    %p85 = por %p83, %p84
    %p86 = scmp.ne.s32.totalorder %s74, %s75
    %p87 = scmp.eq.s32.totalorder %s23, 1
    %p88 = por %p86, %p87
    %p90 = scmp.ne.s32.totalorder %s75, %s89
    %p91 = scmp.eq.s32.totalorder %s23, 0
    %p92 = por %p90, %p91
    %s94 = sadd.s32 %s93, 1
    %p97 = scmp.eq.s32.totalorder %s17, 1
    %p98 = scmp.ne.s32.totalorder %s93, %s95
    %p99 = scmp.eq.s32.totalorder %s17, 0
    %p100 = por %p98, %p99
    %p101 = scmp.ne.s32.totalorder %s93, %s95
    %p102 = scmp.eq.s32.totalorder %s22, 1
    %p103 = por %p101, %p102
    %p104 = scmp.ne.s32.totalorder %s95, %s96
    %p105 = scmp.eq.s32.totalorder %s22, 0
    %p106 = por %p104, %p105
    %p107 = scmp.ne.s32.totalorder %s95, %s96
    %p108 = scmp.eq.s32.totalorder %s23, 1
    %p109 = por %p107, %p108
    %p111 = scmp.ne.s32.totalorder %s96, %s110
    %p112 = scmp.eq.s32.totalorder %s23, 0
    %p113 = por %p111, %p112
    %s115 = sadd.s32 %s114, 1
    %p118 = scmp.eq.s32.totalorder %s17, 1
    %p119 = scmp.ne.s32.totalorder %s114, %s116
    %p120 = scmp.eq.s32.totalorder %s17, 0
    %p121 = por %p119, %p120
    %p122 = scmp.ne.s32.totalorder %s114, %s116
    %p123 = scmp.eq.s32.totalorder %s22, 1
    %p124 = por %p122, %p123
    %p125 = scmp.ne.s32.totalorder %s116, %s117
    %p126 = scmp.eq.s32.totalorder %s22, 0
    %p127 = por %p125, %p126
    %p128 = scmp.ne.s32.totalorder %s116, %s117
    %p129 = scmp.eq.s32.totalorder %s23, 1
    %p130 = por %p128, %p129
    %p132 = scmp.ne.s32.totalorder %s117, %s131
    %p133 = scmp.eq.s32.totalorder %s23, 0
    %p134 = por %p132, %p133
    %s136 = sadd.s32 %s135, 1
    %p139 = scmp.eq.s32.totalorder %s17, 1
    %p140 = scmp.ne.s32.totalorder %s135, %s137
    %p141 = scmp.eq.s32.totalorder %s17, 0
    %p142 = por %p140, %p141
    %p143 = scmp.ne.s32.totalorder %s135, %s137
    %p144 = scmp.eq.s32.totalorder %s22, 1
    %p145 = por %p143, %p144
    %p146 = scmp.ne.s32.totalorder %s137, %s138
    %p147 = scmp.eq.s32.totalorder %s22, 0
    %p148 = por %p146, %p147
    %p149 = scmp.ne.s32.totalorder %s137, %s138
    %p150 = scmp.eq.s32.totalorder %s23, 1
    %p151 = por %p149, %p150
    %p153 = scmp.ne.s32.totalorder %s138, %s152
    %p154 = scmp.eq.s32.totalorder %s23, 0
    %p155 = por %p153, %p154
    %s157 = sadd.s32 %s156, 1
    %p160 = scmp.eq.s32.totalorder %s17, 1
    %p161 = scmp.ne.s32.totalorder %s156, %s158
    %p162 = scmp.eq.s32.totalorder %s17, 0
    %p163 = por %p161, %p162
    %p164 = scmp.ne.s32.totalorder %s156, %s158
    %p165 = scmp.eq.s32.totalorder %s22, 1
    %p166 = por %p164, %p165
    %p167 = scmp.ne.s32.totalorder %s158, %s159
    %p168 = scmp.eq.s32.totalorder %s22, 0
    %p169 = por %p167, %p168
    %p170 = scmp.ne.s32.totalorder %s158, %s159
    %p171 = scmp.eq.s32.totalorder %s23, 1
    %p172 = por %p170, %p171
    %p174 = scmp.ne.s32.totalorder %s159, %s173
    %p175 = scmp.eq.s32.totalorder %s23, 0
    %p176 = por %p174, %p175
    %s178 = sadd.s32 %s177, 1
    %p181 = scmp.eq.s32.totalorder %s17, 1
    %p182 = scmp.ne.s32.totalorder %s177, %s179
    %p183 = scmp.eq.s32.totalorder %s17, 0
    %p184 = por %p182, %p183
    %p185 = scmp.ne.s32.totalorder %s177, %s179
    %p186 = scmp.eq.s32.totalorder %s22, 1
    %p187 = por %p185, %p186
    %p188 = scmp.ne.s32.totalorder %s179, %s180
    %p189 = scmp.eq.s32.totalorder %s22, 0
    %p190 = por %p188, %p189
    %p191 = scmp.ne.s32.totalorder %s179, %s180
    %p192 = scmp.eq.s32.totalorder %s23, 1
    %p193 = por %p191, %p192
    %p195 = scmp.ne.s32.totalorder %s180, %s194
    %p196 = scmp.eq.s32.totalorder %s23, 0
    %p197 = por %p195, %p196
    %s199 = sadd.s32 %s198, 1
    %p202 = scmp.eq.s32.totalorder %s17, 1
    %p203 = scmp.ne.s32.totalorder %s198, %s200
    %p204 = scmp.eq.s32.totalorder %s17, 0
    %p205 = por %p203, %p204
    %p206 = scmp.ne.s32.totalorder %s198, %s200
    %p207 = scmp.eq.s32.totalorder %s22, 1
    %p208 = por %p206, %p207
    %p209 = scmp.ne.s32.totalorder %s200, %s201
    %p210 = scmp.eq.s32.totalorder %s22, 0
    %p211 = por %p209, %p210
    %p212 = scmp.ne.s32.totalorder %s200, %s201
    %p213 = scmp.eq.s32.totalorder %s23, 1
    %p214 = por %p212, %p213
    %p216 = scmp.ne.s32.totalorder %s201, %s215
    %p217 = scmp.eq.s32.totalorder %s23, 0
    %p218 = por %p216, %p217
    %s219 = ssub.s32 %s17, %s24
    %p220 = scmp.eq.s32.totalorder %s219, 0
    %s222 = sadd.s32 %s221, 1
    %s223 = scalar_select %p220, %s221, %s222
    %p226 = pneg %p220
    %p227 = scmp.eq.s32.totalorder %s17, 1
    %p228 = por %p226, %p227
    %p229 = scmp.ne.s32.totalorder %s221, %s224
    %p230 = scmp.eq.s32.totalorder %s17, 0
    %p231 = por %p229, %p230
    %p232 = scmp.ne.s32.totalorder %s221, %s224
    %p233 = scmp.eq.s32.totalorder %s22, 1
    %p234 = por %p232, %p233
    %p235 = scmp.ne.s32.totalorder %s224, %s225
    %p236 = scmp.eq.s32.totalorder %s22, 0
    %p237 = por %p235, %p236
    %p238 = scmp.ne.s32.totalorder %s224, %s225
    %p239 = scmp.eq.s32.totalorder %s23, 1
    %p240 = por %p238, %p239
    %p242 = scmp.ne.s32.totalorder %s225, %s241
    %p243 = scmp.eq.s32.totalorder %s23, 0
    %p244 = por %p242, %p243
    %s245 = ssub.s32 %s17, %s24
    %p246 = scmp.eq.s32.totalorder %s245, 0
    %s248 = sadd.s32 %s247, 1
    %s249 = scalar_select %p246, %s247, %s248
    %p252 = pneg %p246
    %p253 = scmp.eq.s32.totalorder %s17, 1
    %p254 = por %p252, %p253
    %p255 = scmp.ne.s32.totalorder %s247, %s250
    %p256 = scmp.eq.s32.totalorder %s17, 0
    %p257 = por %p255, %p256
    %p258 = scmp.ne.s32.totalorder %s247, %s250
    %p259 = scmp.eq.s32.totalorder %s22, 1
    %p260 = por %p258, %p259
    %p261 = scmp.ne.s32.totalorder %s250, %s251
    %p262 = scmp.eq.s32.totalorder %s22, 0
    %p263 = por %p261, %p262
    %p264 = scmp.ne.s32.totalorder %s250, %s251
    %p265 = scmp.eq.s32.totalorder %s23, 1
    %p266 = por %p264, %p265
    %p268 = scmp.ne.s32.totalorder %s251, %s267
    %p269 = scmp.eq.s32.totalorder %s23, 0
    %p270 = por %p268, %p269
    %p271 = scmp.le.s32.totalorder 1, %s17
    %p272 = scmp.lt.s32.totalorder %s17, 3
    %p273 = pnand %p271, %p272
    %p274 = pneg %p273
    // Predicated region
    $region9: #{scconv_forward.3} parent=5 // pred_check
      _
    $region10: #{scconv_forward.3} parent=5 // pred_check_branch
      %276 = sbr.rel (%p273) target = $region12
    $region11: #{scconv_forward.3} parent=5 // pred_region
      %s277 = ssub.s32 %s17, 1
      // Predicated region
      $region13: #{scconv_forward.3} parent=11 // pred_check
        %p278 = pneg %p64
      $region14: #{scconv_forward.3} parent=11 // pred_check_branch
        %280 = sbr.rel (%p278) target = $region16
      $region15: #{scconv_forward.3} parent=11 // pred_region
        _
      $region16: #{scconv_forward.3} parent=11 // pred_fallthru
        _
      // Predicated region
      $region17: #{scconv_forward.3} parent=11 // pred_check
        %p281 = pneg %p85
      $region18: #{scconv_forward.3} parent=11 // pred_check_branch
        %283 = sbr.rel (%p281) target = $region20
      $region19: #{scconv_forward.3} parent=11 // pred_region
        _
      $region20: #{scconv_forward.3} parent=11 // pred_fallthru
        _
      // Predicated region
      $region21: #{scconv_forward.3} parent=11 // pred_check
        %p284 = pneg %p106
      $region22: #{scconv_forward.3} parent=11 // pred_check_branch
        %286 = sbr.rel (%p284) target = $region24
      $region23: #{scconv_forward.3} parent=11 // pred_region
        _
      $region24: #{scconv_forward.3} parent=11 // pred_fallthru
        _
      // Predicated region
      $region25: #{scconv_forward.3} parent=11 // pred_check
        %p287 = pneg %p127
      $region26: #{scconv_forward.3} parent=11 // pred_check_branch
        %289 = sbr.rel (%p287) target = $region28
      $region27: #{scconv_forward.3} parent=11 // pred_region
        _
      $region28: #{scconv_forward.3} parent=11 // pred_fallthru
        _
      // Predicated region
      $region29: #{scconv_forward.3} parent=11 // pred_check
        %p290 = pneg %p148
      $region30: #{scconv_forward.3} parent=11 // pred_check_branch
        %292 = sbr.rel (%p290) target = $region32
      $region31: #{scconv_forward.3} parent=11 // pred_region
        _
      $region32: #{scconv_forward.3} parent=11 // pred_fallthru
        _
      // Predicated region
      $region33: #{scconv_forward.3} parent=11 // pred_check
        %p293 = pneg %p169
      $region34: #{scconv_forward.3} parent=11 // pred_check_branch
        %295 = sbr.rel (%p293) target = $region36
      $region35: #{scconv_forward.3} parent=11 // pred_region
        _
      $region36: #{scconv_forward.3} parent=11 // pred_fallthru
        _
      // Predicated region
      $region37: #{scconv_forward.3} parent=11 // pred_check
        %p296 = pneg %p190
      $region38: #{scconv_forward.3} parent=11 // pred_check_branch
        %298 = sbr.rel (%p296) target = $region40
      $region39: #{scconv_forward.3} parent=11 // pred_region
        _
      $region40: #{scconv_forward.3} parent=11 // pred_fallthru
        _
      // Predicated region
      $region41: #{scconv_forward.3} parent=11 // pred_check
        %p299 = pneg %p211
      $region42: #{scconv_forward.3} parent=11 // pred_check_branch
        %301 = sbr.rel (%p299) target = $region44
      $region43: #{scconv_forward.3} parent=11 // pred_region
        _
      $region44: #{scconv_forward.3} parent=11 // pred_fallthru
        _
    $region12: #{scconv_forward.3} parent=5 // pred_fallthru
      _
    %p302 = scmp.lt.s32.totalorder %s17, 2
    // Predicated region
    $region45: #{scconv_forward.3} parent=5 // pred_check
      %p303 = pneg %p302
    $region46: #{scconv_forward.3} parent=5 // pred_check_branch
      %305 = sbr.rel (%p303) target = $region48
    $region47: #{scconv_forward.3} parent=5 // pred_region
      // Predicated region
      $region49: #{scconv_forward.3} parent=47 // pred_check
        %p306 = pneg %p37
      $region50: #{scconv_forward.3} parent=47 // pred_check_branch
        %308 = sbr.rel (%p306) target = $region52
      $region51: #{scconv_forward.3} parent=47 // pred_region
        %p309 = scmp.lt.s32.totalorder %s17, 1
        %s310 = scalar_select %p309, %s17, 1
        %s311 = smul.addr %s310, 32
        %s312 = smul.addr %s311, 8
        %s313 = scalar_lea.vmem %s0, %s312
      $region52: #{scconv_forward.3} parent=47 // pred_fallthru
        _
    $region48: #{scconv_forward.3} parent=5 // pred_fallthru
      _
    %p314 = scmp.le.s32.totalorder 1, %s17
    %p315 = scmp.lt.s32.totalorder %s17, 3
    %p316 = pnand %p314, %p315
    %p317 = pneg %p316
    // Predicated region
    $region53: #{scconv_forward.3} parent=5 // pred_check
      _
    $region54: #{scconv_forward.3} parent=5 // pred_check_branch
      %319 = sbr.rel (%p316) target = $region56
    $region55: #{scconv_forward.3} parent=5 // pred_region
      %s320 = ssub.s32 %s17, 1
      %p321 = scmp.lt.s32.totalorder %s22, 1
      %s322 = scalar_select %p321, %s22, 1
      %s323 = smul.addr %s322, 32
      %s324 = smul.addr %s323, 8
      %s325 = scalar_lea.vmem %s0, %s324
      %p326 = pneg %p43
      %p327 = pneg %p40
      %p328 = pneg %p64
      %p329 = pneg %p61
      %p330 = pneg %p85
      %p331 = pneg %p82
      %p332 = pneg %p106
      %p333 = pneg %p103
      %p334 = pneg %p127
      %p335 = pneg %p124
      %p336 = pneg %p148
      %p337 = pneg %p145
      %p338 = pneg %p169
      %p339 = pneg %p166
      %p340 = pneg %p190
      %p341 = pneg %p187
      %p342 = pneg %p211
      %p343 = pneg %p208
      %p344 = pneg %p237
      %p345 = pneg %p234
      %p346 = scmp.lt.s32.totalorder %s22, 1
      %s347 = scalar_select %p346, %s22, 1
      %s348 = smul.addr %s347, 40
      %s349 = smul.addr %s348, 8
      %s350 = scalar_lea.vmem %s9, %s349
      %p351 = pneg %p263
      %p352 = pneg %p260
      %p353 = scmp.lt.s32.totalorder %s22, 1
      %s354 = scalar_select %p353, %s22, 1
      %s355 = smul.addr %s354, 32
      %s356 = smul.addr %s355, 8
      %s357 = scalar_lea.vmem %s10, %s356
      %p358 = scmp.lt.s32.totalorder %s22, 1
      %s359 = scalar_select %p358, %s22, 1
      %s360 = smul.addr %s359, 32
      %s361 = smul.addr %s360, 8
      %s362 = scalar_lea.vmem %s0, %s361
      %p363 = scmp.lt.s32.totalorder %s22, 1
      %s364 = scalar_select %p363, %s22, 1
      %s365 = smul.addr %s364, 40
      %s366 = smul.addr %s365, 8
      %s367 = scalar_lea.vmem %s9, %s366
      %p368 = scmp.lt.s32.totalorder %s22, 1
      %s369 = scalar_select %p368, %s22, 1
      %s370 = smul.addr %s369, 32
      %s371 = smul.addr %s370, 8
      %s372 = scalar_lea.vmem %s10, %s371
      %v373 = vld [vmem:[%s362] sm:$0xff]
      %v374 = vld [vmem:[%s362 + $0x8] sm:$0xff]
      %v375 = vld [vmem:[%s362 + $0x10] sm:$0xff]
      %v376 = vld [vmem:[%s362 + $0x18] sm:$0xff]
      %v377 = vld [vmem:[%s362 + $0x20] sm:$0xff]
      %v378 = vld [vmem:[%s362 + $0x28] sm:$0xff]
      %v379 = vld [vmem:[%s362 + $0x30] sm:$0xff]
      %v380 = vld [vmem:[%s362 + $0x38] sm:$0xff]
      %v381 = vld [vmem:[%s362 + $0x40] sm:$0xff]
      %v382 = vld [vmem:[%s362 + $0x48] sm:$0xff]
      %v383 = vld [vmem:[%s362 + $0x50] sm:$0xff]
      %v384 = vld [vmem:[%s362 + $0x58] sm:$0xff]
      %v385 = vld [vmem:[%s362 + $0x60] sm:$0xff]
      %v386 = vld [vmem:[%s362 + $0x68] sm:$0xff]
      %v387 = vld [vmem:[%s362 + $0x70] sm:$0xff]
      %v388 = vld [vmem:[%s362 + $0x78] sm:$0xff]
      %v389 = vld [vmem:[%s362 + $0x80] sm:$0xff]
      %v390 = vld [vmem:[%s362 + $0x88] sm:$0xff]
      %v391 = vld [vmem:[%s362 + $0x90] sm:$0xff]
      %v392 = vld [vmem:[%s362 + $0x98] sm:$0xff]
      %v393 = vld [vmem:[%s362 + $0xa0] sm:$0xff]
      %v394 = vld [vmem:[%s362 + $0xa8] sm:$0xff]
      %v395 = vld [vmem:[%s362 + $0xb0] sm:$0xff]
      %v396 = vld [vmem:[%s362 + $0xb8] sm:$0xff]
      %v397 = vld [vmem:[%s362 + $0xc0] sm:$0xff]
      %v398 = vld [vmem:[%s362 + $0xc8] sm:$0xff]
      %v399 = vld [vmem:[%s362 + $0xd0] sm:$0xff]
      %v400 = vld [vmem:[%s362 + $0xd8] sm:$0xff]
      %v401 = vld [vmem:[%s362 + $0xe0] sm:$0xff]
      %v402 = vld [vmem:[%s362 + $0xe8] sm:$0xff]
      %v403 = vld [vmem:[%s362 + $0xf0] sm:$0xff]
      %v404 = vld [vmem:[%s362 + $0xf8] sm:$0xff]
      %vm405 = vcmask 130048
      %v406 = vsel %vm405, %v373, 0.0
      %v407 = vsel %vm405, %v374, 0.0
      %v408 = vadd.f32 %v406, %v407
      %v409 = vsel %vm405, %v375, 0.0
      %v410 = vadd.f32 %v408, %v409
      %v411 = vsel %vm405, %v376, 0.0
      %v412 = vadd.f32 %v410, %v411
      %v413 = vsel %vm405, %v377, 0.0
      %v414 = vadd.f32 %v412, %v413
      %v415 = vsel %vm405, %v378, 0.0
      %v416 = vadd.f32 %v414, %v415
      %v417 = vsel %vm405, %v379, 0.0
      %v418 = vadd.f32 %v416, %v417
      %v419 = vsel %vm405, %v380, 0.0
      %v420 = vadd.f32 %v418, %v419
      %v421 = vsel %vm405, %v381, 0.0
      %v422 = vadd.f32 %v420, %v421
      %v423 = vsel %vm405, %v382, 0.0
      %v424 = vadd.f32 %v422, %v423
      %v425 = vsel %vm405, %v383, 0.0
      %v426 = vadd.f32 %v424, %v425
      %v427 = vsel %vm405, %v384, 0.0
      %v428 = vadd.f32 %v426, %v427
      %v429 = vsel %vm405, %v385, 0.0
      %v430 = vadd.f32 %v428, %v429
      %v431 = vsel %vm405, %v386, 0.0
      %v432 = vadd.f32 %v430, %v431
      %v433 = vsel %vm405, %v387, 0.0
      %v434 = vadd.f32 %v432, %v433
      %v435 = vsel %vm405, %v388, 0.0
      %v436 = vadd.f32 %v434, %v435
      %v437 = vsel %vm405, %v389, 0.0
      %v438 = vadd.f32 %v436, %v437
      %v439 = vsel %vm405, %v390, 0.0
      %v440 = vadd.f32 %v438, %v439
      %v441 = vsel %vm405, %v391, 0.0
      %v442 = vadd.f32 %v440, %v441
      %v443 = vsel %vm405, %v392, 0.0
      %v444 = vadd.f32 %v442, %v443
      %v445 = vsel %vm405, %v393, 0.0
      %v446 = vadd.f32 %v444, %v445
      %v447 = vsel %vm405, %v394, 0.0
      %v448 = vadd.f32 %v446, %v447
      %v449 = vsel %vm405, %v395, 0.0
      %v450 = vadd.f32 %v448, %v449
      %v451 = vsel %vm405, %v396, 0.0
      %v452 = vadd.f32 %v450, %v451
      %v453 = vsel %vm405, %v397, 0.0
      %v454 = vadd.f32 %v452, %v453
      %v455 = vsel %vm405, %v398, 0.0
      %v456 = vadd.f32 %v454, %v455
      %v457 = vsel %vm405, %v399, 0.0
      %v458 = vadd.f32 %v456, %v457
      %v459 = vsel %vm405, %v400, 0.0
      %v460 = vadd.f32 %v458, %v459
      %v461 = vsel %vm405, %v401, 0.0
      %v462 = vadd.f32 %v460, %v461
      %v463 = vsel %vm405, %v402, 0.0
      %v464 = vadd.f32 %v462, %v463
      %v465 = vsel %vm405, %v403, 0.0
      %v466 = vadd.f32 %v464, %v465
      %v467 = vsel %vm405, %v404, 0.0
      %v468 = vadd.f32 %v466, %v467
      %v469 = vrot.slane %v468, 4
      %v470 = vadd.f32 %v468, %v469
      %v471 = vrot.slane %v470, 2
      %v472 = vadd.f32 %v470, %v471
      %v473 = vrot.slane %v472, 1
      %v474 = vadd.f32 %v472, %v473
      %v475 = vmul.f32 %v373, %v373
      %v476 = vmul.f32 %v374, %v374
      %v477 = vmul.f32 %v375, %v375
      %v478 = vmul.f32 %v376, %v376
      %v479 = vmul.f32 %v377, %v377
      %v480 = vmul.f32 %v378, %v378
      %v481 = vmul.f32 %v379, %v379
      %v482 = vmul.f32 %v380, %v380
      %v483 = vmul.f32 %v381, %v381
      %v484 = vmul.f32 %v382, %v382
      %v485 = vmul.f32 %v383, %v383
      %v486 = vmul.f32 %v384, %v384
      %v487 = vmul.f32 %v385, %v385
      %v488 = vmul.f32 %v386, %v386
      %v489 = vmul.f32 %v387, %v387
      %v490 = vmul.f32 %v388, %v388
      %v491 = vmul.f32 %v389, %v389
      %v492 = vmul.f32 %v390, %v390
      %v493 = vmul.f32 %v391, %v391
      %v494 = vmul.f32 %v392, %v392
      %v495 = vmul.f32 %v393, %v393
      %v496 = vmul.f32 %v394, %v394
      %v497 = vmul.f32 %v395, %v395
      %v498 = vmul.f32 %v396, %v396
      %v499 = vmul.f32 %v397, %v397
      %v500 = vmul.f32 %v398, %v398
      %v501 = vmul.f32 %v399, %v399
      %v502 = vmul.f32 %v400, %v400
      %v503 = vmul.f32 %v401, %v401
      %v504 = vmul.f32 %v402, %v402
      %v505 = vmul.f32 %v403, %v403
      %v506 = vmul.f32 %v404, %v404
      %v507 = vsel %vm405, %v475, 0.0
      %v508 = vsel %vm405, %v476, 0.0
      %v509 = vadd.f32 %v507, %v508
      %v510 = vsel %vm405, %v477, 0.0
      %v511 = vadd.f32 %v509, %v510
      %v512 = vsel %vm405, %v478, 0.0
      %v513 = vadd.f32 %v511, %v512
      %v514 = vsel %vm405, %v479, 0.0
      %v515 = vadd.f32 %v513, %v514
      %v516 = vsel %vm405, %v480, 0.0
      %v517 = vadd.f32 %v515, %v516
      %v518 = vsel %vm405, %v481, 0.0
      %v519 = vadd.f32 %v517, %v518
      %v520 = vsel %vm405, %v482, 0.0
      %v521 = vadd.f32 %v519, %v520
      %v522 = vsel %vm405, %v483, 0.0
      %v523 = vadd.f32 %v521, %v522
      %v524 = vsel %vm405, %v484, 0.0
      %v525 = vadd.f32 %v523, %v524
      %v526 = vsel %vm405, %v485, 0.0
      %v527 = vadd.f32 %v525, %v526
      %v528 = vsel %vm405, %v486, 0.0
      %v529 = vadd.f32 %v527, %v528
      %v530 = vsel %vm405, %v487, 0.0
      %v531 = vadd.f32 %v529, %v530
      %v532 = vsel %vm405, %v488, 0.0
      %v533 = vadd.f32 %v531, %v532
      %v534 = vsel %vm405, %v489, 0.0
      %v535 = vadd.f32 %v533, %v534
      %v536 = vsel %vm405, %v490, 0.0
      %v537 = vadd.f32 %v535, %v536
      %v538 = vsel %vm405, %v491, 0.0
      %v539 = vadd.f32 %v537, %v538
      %v540 = vsel %vm405, %v492, 0.0
      %v541 = vadd.f32 %v539, %v540
      %v542 = vsel %vm405, %v493, 0.0
      %v543 = vadd.f32 %v541, %v542
      %v544 = vsel %vm405, %v494, 0.0
      %v545 = vadd.f32 %v543, %v544
      %v546 = vsel %vm405, %v495, 0.0
      %v547 = vadd.f32 %v545, %v546
      %v548 = vsel %vm405, %v496, 0.0
      %v549 = vadd.f32 %v547, %v548
      %v550 = vsel %vm405, %v497, 0.0
      %v551 = vadd.f32 %v549, %v550
      %v552 = vsel %vm405, %v498, 0.0
      %v553 = vadd.f32 %v551, %v552
      %v554 = vsel %vm405, %v499, 0.0
      %v555 = vadd.f32 %v553, %v554
      %v556 = vsel %vm405, %v500, 0.0
      %v557 = vadd.f32 %v555, %v556
      %v558 = vsel %vm405, %v501, 0.0
      %v559 = vadd.f32 %v557, %v558
      %v560 = vsel %vm405, %v502, 0.0
      %v561 = vadd.f32 %v559, %v560
      %v562 = vsel %vm405, %v503, 0.0
      %v563 = vadd.f32 %v561, %v562
      %v564 = vsel %vm405, %v504, 0.0
      %v565 = vadd.f32 %v563, %v564
      %v566 = vsel %vm405, %v505, 0.0
      %v567 = vadd.f32 %v565, %v566
      %v568 = vsel %vm405, %v506, 0.0
      %v569 = vadd.f32 %v567, %v568
      %v570 = vrot.slane %v569, 4
      %v571 = vadd.f32 %v569, %v570
      %v572 = vrot.slane %v571, 2
      %v573 = vadd.f32 %v571, %v572
      %v574 = vrot.slane %v573, 1
      %v575 = vadd.f32 %v573, %v574
      %vm576 = vcmask 1040384
      %v577 = vsel %vm576, %v474, %v575
      %v578 = vmul.f32 %v577, 0.00390625
      %v579 = vld [vmem:[%s4] sm:$0xff]
      %v580 = vld [vmem:[%s4 + $0x8] sm:$0xff]
      %v582 = vsel %vm405, %v578, 0
      %584 = vmatpush.msra.mxu0 0.0
      %585 = vmatpush.msra.mxu0 0.0
      %586 = vmatpush.msra.mxu0 0.0
      %587 = vmatpush.msra.mxu0 0.0
      %588 = vmatpush.msra.mxu0 0.0
      %589 = vmatpush.msra.mxu0 0.0
      %590 = vmatpush.msra.mxu0 0.0
      %591 = vmatpush.msra.mxu0 0.0
      %592 = vmatpush.msra.mxu0 0.0
      %593 = vmatpush.msra.mxu0 0.0
      %594 = vmatpush.msra.mxu0 0.0
      %595 = vmatpush.msra.mxu0 0.0
      %596 = vmatpush.msra.mxu0 0.0
      %597 = vmatpush.msra.mxu0 0.0
      %598 = vmatpush.msra.mxu0 %v580
      %599 = vmatpush.msra.mxu0 %v579
      %600 = vmatmul.f32.gmra.mxu0 %v582
      %v601 = vpop.f32.mrf.mxu0
      %v602 = vadd.f32 0.0, %v601
      %603 = vdwg.mxu0
      %v604 = vmul.f32 %v602, %v602
      %v606 = vrot.slane %v604, 7
      %v608 = vsub.f32 %v602, %v606
      %v609 = vmax.f32 %v608, 0.0
      %v610 = vadd.f32 %v609, 1e-05
      %v611 = vrsqrt.pop %v610
      %v612 = vmul.f32 %v611, %v610
      %v613 = vmul.f32 %v612, %v611
      %v614 = vmul.f32 0.5, %v613
      %v615 = vsub.f32 1.5, %v614
      %v616 = vmul.f32 %v611, %v615
      %vm617 = vweird.f32 %v610
      %vm618 = vweird.f32 %v611
      %vm619 = vmor %vm617, %vm618
      %v620 = vsel %vm619, %v611, %v616
      %v621 = vperm.slane %v602, 0
      %v622 = vsub.f32 %v373, %v621
      %v623 = vsub.f32 %v374, %v621
      %v624 = vsub.f32 %v375, %v621
      %v625 = vsub.f32 %v376, %v621
      %v626 = vsub.f32 %v377, %v621
      %v627 = vsub.f32 %v378, %v621
      %v628 = vsub.f32 %v379, %v621
      %v629 = vsub.f32 %v380, %v621
      %v630 = vsub.f32 %v381, %v621
      %v631 = vsub.f32 %v382, %v621
      %v632 = vsub.f32 %v383, %v621
      %v633 = vsub.f32 %v384, %v621
      %v634 = vsub.f32 %v385, %v621
      %v635 = vsub.f32 %v386, %v621
      %v636 = vsub.f32 %v387, %v621
      %v637 = vsub.f32 %v388, %v621
      %v638 = vsub.f32 %v389, %v621
      %v639 = vsub.f32 %v390, %v621
      %v640 = vsub.f32 %v391, %v621
      %v641 = vsub.f32 %v392, %v621
      %v642 = vsub.f32 %v393, %v621
      %v643 = vsub.f32 %v394, %v621
      %v644 = vsub.f32 %v395, %v621
      %v645 = vsub.f32 %v396, %v621
      %v646 = vsub.f32 %v397, %v621
      %v647 = vsub.f32 %v398, %v621
      %v648 = vsub.f32 %v399, %v621
      %v649 = vsub.f32 %v400, %v621
      %v650 = vsub.f32 %v401, %v621
      %v651 = vsub.f32 %v402, %v621
      %v652 = vsub.f32 %v403, %v621
      %v653 = vsub.f32 %v404, %v621
      %v654 = vld [vmem:[%s1] sm:$0x1]
      %v656 = vperm.slane %v654, 0
      %v658 = vmul.f32 %v620, %v656
      %v659 = vperm.slane %v658, 1
      %v660 = vmul.f32 %v622, %v659
      %v661 = vmul.f32 %v623, %v659
      %v662 = vmul.f32 %v624, %v659
      %v663 = vmul.f32 %v625, %v659
      %v664 = vmul.f32 %v626, %v659
      %v665 = vmul.f32 %v627, %v659
      %v666 = vmul.f32 %v628, %v659
      %v667 = vmul.f32 %v629, %v659
      %v668 = vmul.f32 %v630, %v659
      %v669 = vmul.f32 %v631, %v659
      %v670 = vmul.f32 %v632, %v659
      %v671 = vmul.f32 %v633, %v659
      %v672 = vmul.f32 %v634, %v659
      %v673 = vmul.f32 %v635, %v659
      %v674 = vmul.f32 %v636, %v659
      %v675 = vmul.f32 %v637, %v659
      %v676 = vmul.f32 %v638, %v659
      %v677 = vmul.f32 %v639, %v659
      %v678 = vmul.f32 %v640, %v659
      %v679 = vmul.f32 %v641, %v659
      %v680 = vmul.f32 %v642, %v659
      %v681 = vmul.f32 %v643, %v659
      %v682 = vmul.f32 %v644, %v659
      %v683 = vmul.f32 %v645, %v659
      %v684 = vmul.f32 %v646, %v659
      %v685 = vmul.f32 %v647, %v659
      %v686 = vmul.f32 %v648, %v659
      %v687 = vmul.f32 %v649, %v659
      %v688 = vmul.f32 %v650, %v659
      %v689 = vmul.f32 %v651, %v659
      %v690 = vmul.f32 %v652, %v659
      %v691 = vmul.f32 %v653, %v659
      %v692 = vld [vmem:[%s2] sm:$0x1]
      %v694 = vperm.slane %v692, 0
      %v696 = vadd.f32 %v660, %v694
      %v697 = vadd.f32 %v661, %v694
      %v698 = vadd.f32 %v662, %v694
      %v699 = vadd.f32 %v663, %v694
      %v700 = vadd.f32 %v664, %v694
      %v701 = vadd.f32 %v665, %v694
      %v702 = vadd.f32 %v666, %v694
      %v703 = vadd.f32 %v667, %v694
      %v704 = vadd.f32 %v668, %v694
      %v705 = vadd.f32 %v669, %v694
      %v706 = vadd.f32 %v670, %v694
      %v707 = vadd.f32 %v671, %v694
      %v708 = vadd.f32 %v672, %v694
      %v709 = vadd.f32 %v673, %v694
      %v710 = vadd.f32 %v674, %v694
      %v711 = vadd.f32 %v675, %v694
      %v712 = vadd.f32 %v676, %v694
      %v713 = vadd.f32 %v677, %v694
      %v714 = vadd.f32 %v678, %v694
      %v715 = vadd.f32 %v679, %v694
      %v716 = vadd.f32 %v680, %v694
      %v717 = vadd.f32 %v681, %v694
      %v718 = vadd.f32 %v682, %v694
      %v719 = vadd.f32 %v683, %v694
      %v720 = vadd.f32 %v684, %v694
      %v721 = vadd.f32 %v685, %v694
      %v722 = vadd.f32 %v686, %v694
      %v723 = vadd.f32 %v687, %v694
      %v724 = vadd.f32 %v688, %v694
      %v725 = vadd.f32 %v689, %v694
      %v726 = vadd.f32 %v690, %v694
      %v727 = vadd.f32 %v691, %v694
      %v728 = vld [vmem:[%s3] sm:$0x1]
      %v730 = vperm.slane %v728, 0
      %v732 = vmul.f32 %v730, %v696
      %v733 = vmul.f32 %v730, %v697
      %v734 = vmul.f32 %v730, %v698
      %v735 = vmul.f32 %v730, %v699
      %v736 = vmul.f32 %v730, %v700
      %v737 = vmul.f32 %v730, %v701
      %v738 = vmul.f32 %v730, %v702
      %v739 = vmul.f32 %v730, %v703
      %v740 = vmul.f32 %v730, %v704
      %v741 = vmul.f32 %v730, %v705
      %v742 = vmul.f32 %v730, %v706
      %v743 = vmul.f32 %v730, %v707
      %v744 = vmul.f32 %v730, %v708
      %v745 = vmul.f32 %v730, %v709
      %v746 = vmul.f32 %v730, %v710
      %v747 = vmul.f32 %v730, %v711
      %v748 = vmul.f32 %v730, %v712
      %v749 = vmul.f32 %v730, %v713
      %v750 = vmul.f32 %v730, %v714
      %v751 = vmul.f32 %v730, %v715
      %v752 = vmul.f32 %v730, %v716
      %v753 = vmul.f32 %v730, %v717
      %v754 = vmul.f32 %v730, %v718
      %v755 = vmul.f32 %v730, %v719
      %v756 = vmul.f32 %v730, %v720
      %v757 = vmul.f32 %v730, %v721
      %v758 = vmul.f32 %v730, %v722
      %v759 = vmul.f32 %v730, %v723
      %v760 = vmul.f32 %v730, %v724
      %v761 = vmul.f32 %v730, %v725
      %v762 = vmul.f32 %v730, %v726
      %v763 = vmul.f32 %v730, %v727
      %v764 = vxor.u32 %v732, 2147483648
      %v765 = vxor.u32 %v733, 2147483648
      %v766 = vxor.u32 %v734, 2147483648
      %v767 = vxor.u32 %v735, 2147483648
      %v768 = vxor.u32 %v736, 2147483648
      %v769 = vxor.u32 %v737, 2147483648
      %v770 = vxor.u32 %v738, 2147483648
      %v771 = vxor.u32 %v739, 2147483648
      %v772 = vxor.u32 %v740, 2147483648
      %v773 = vxor.u32 %v741, 2147483648
      %v774 = vxor.u32 %v742, 2147483648
      %v775 = vxor.u32 %v743, 2147483648
      %v776 = vxor.u32 %v744, 2147483648
      %v777 = vxor.u32 %v745, 2147483648
      %v778 = vxor.u32 %v746, 2147483648
      %v779 = vxor.u32 %v747, 2147483648
      %v780 = vxor.u32 %v748, 2147483648
      %v781 = vxor.u32 %v749, 2147483648
      %v782 = vxor.u32 %v750, 2147483648
      %v783 = vxor.u32 %v751, 2147483648
      %v784 = vxor.u32 %v752, 2147483648
      %v785 = vxor.u32 %v753, 2147483648
      %v786 = vxor.u32 %v754, 2147483648
      %v787 = vxor.u32 %v755, 2147483648
      %v788 = vxor.u32 %v756, 2147483648
      %v789 = vxor.u32 %v757, 2147483648
      %v790 = vxor.u32 %v758, 2147483648
      %v791 = vxor.u32 %v759, 2147483648
      %v792 = vxor.u32 %v760, 2147483648
      %v793 = vxor.u32 %v761, 2147483648
      %v794 = vxor.u32 %v762, 2147483648
      %v795 = vxor.u32 %v763, 2147483648
      %v796 = vmul.f32 %v764, 1.442695
      %v797 = vpow.pop %v796
      %v798 = vmul.f32 %v765, 1.442695
      %v799 = vpow.pop %v798
      %v800 = vmul.f32 %v766, 1.442695
      %v801 = vpow.pop %v800
      %v802 = vmul.f32 %v767, 1.442695
      %v803 = vpow.pop %v802
      %v804 = vmul.f32 %v768, 1.442695
      %v805 = vpow.pop %v804
      %v806 = vmul.f32 %v769, 1.442695
      %v807 = vpow.pop %v806
      %v808 = vmul.f32 %v770, 1.442695
      %v809 = vpow.pop %v808
      %v810 = vmul.f32 %v771, 1.442695
      %v811 = vpow.pop %v810
      %v812 = vmul.f32 %v772, 1.442695
      %v813 = vpow.pop %v812
      %v814 = vmul.f32 %v773, 1.442695
      %v815 = vpow.pop %v814
      %v816 = vmul.f32 %v774, 1.442695
      %v817 = vpow.pop %v816
      %v818 = vmul.f32 %v775, 1.442695
      %v819 = vpow.pop %v818
      %v820 = vmul.f32 %v776, 1.442695
      %v821 = vpow.pop %v820
      %v822 = vmul.f32 %v777, 1.442695
      %v823 = vpow.pop %v822
      %v824 = vmul.f32 %v778, 1.442695
      %v825 = vpow.pop %v824
      %v826 = vmul.f32 %v779, 1.442695
      %v827 = vpow.pop %v826
      %v828 = vmul.f32 %v780, 1.442695
      %v829 = vpow.pop %v828
      %v830 = vmul.f32 %v781, 1.442695
      %v831 = vpow.pop %v830
      %v832 = vmul.f32 %v782, 1.442695
      %v833 = vpow.pop %v832
      %v834 = vmul.f32 %v783, 1.442695
      %v835 = vpow.pop %v834
      %v836 = vmul.f32 %v784, 1.442695
      %v837 = vpow.pop %v836
      %v838 = vmul.f32 %v785, 1.442695
      %v839 = vpow.pop %v838
      %v840 = vmul.f32 %v786, 1.442695
      %v841 = vpow.pop %v840
      %v842 = vmul.f32 %v787, 1.442695
      %v843 = vpow.pop %v842
      %v844 = vmul.f32 %v788, 1.442695
      %v845 = vpow.pop %v844
      %v846 = vmul.f32 %v789, 1.442695
      %v847 = vpow.pop %v846
      %v848 = vmul.f32 %v790, 1.442695
      %v849 = vpow.pop %v848
      %v850 = vmul.f32 %v791, 1.442695
      %v851 = vpow.pop %v850
      %v852 = vmul.f32 %v792, 1.442695
      %v853 = vpow.pop %v852
      %v854 = vmul.f32 %v793, 1.442695
      %v855 = vpow.pop %v854
      %v856 = vmul.f32 %v794, 1.442695
      %v857 = vpow.pop %v856
      %v858 = vmul.f32 %v795, 1.442695
      %v859 = vpow.pop %v858
      %v860 = vadd.f32 %v797, 1.0
      %v861 = vadd.f32 %v799, 1.0
      %v862 = vadd.f32 %v801, 1.0
      %v863 = vadd.f32 %v803, 1.0
      %v864 = vadd.f32 %v805, 1.0
      %v865 = vadd.f32 %v807, 1.0
      %v866 = vadd.f32 %v809, 1.0
      %v867 = vadd.f32 %v811, 1.0
      %v868 = vadd.f32 %v813, 1.0
      %v869 = vadd.f32 %v815, 1.0
      %v870 = vadd.f32 %v817, 1.0
      %v871 = vadd.f32 %v819, 1.0
      %v872 = vadd.f32 %v821, 1.0
      %v873 = vadd.f32 %v823, 1.0
      %v874 = vadd.f32 %v825, 1.0
      %v875 = vadd.f32 %v827, 1.0
      %v876 = vadd.f32 %v829, 1.0
      %v877 = vadd.f32 %v831, 1.0
      %v878 = vadd.f32 %v833, 1.0
      %v879 = vadd.f32 %v835, 1.0
      %v880 = vadd.f32 %v837, 1.0
      %v881 = vadd.f32 %v839, 1.0
      %v882 = vadd.f32 %v841, 1.0
      %v883 = vadd.f32 %v843, 1.0
      %v884 = vadd.f32 %v845, 1.0
      %v885 = vadd.f32 %v847, 1.0
      %v886 = vadd.f32 %v849, 1.0
      %v887 = vadd.f32 %v851, 1.0
      %v888 = vadd.f32 %v853, 1.0
      %v889 = vadd.f32 %v855, 1.0
      %v890 = vadd.f32 %v857, 1.0
      %v891 = vadd.f32 %v859, 1.0
      %v892 = vrcp.pop %v860
      %v893 = vmul.f32 %v860, %v892
      %v894 = vsub.f32 1.0, %v893
      %v895 = vmul.f32 %v892, %v894
      %v896 = vadd.f32 %v892, %v895
      %vm897 = vweird.f32 %v860
      %vm898 = vweird.f32 %v892
      %vm899 = vmor %vm897, %vm898
      %v900 = vsel %vm899, %v892, %v896
      %v901 = vand.u32 2147483647, %v860
      %vm902 = vcmp.eq.f32.partialorder %v901, 8.507059e+37
      %v903 = vand.u32 %v860, 2147483648
      %v904 = vor.u32 1.1754944e-38, %v903
      %v905 = vsel %vm902, %v904, %v900
      %v906 = vmul.f32 1.0, %v905
      %v907 = vrcp.pop %v861
      %v908 = vmul.f32 %v861, %v907
      %v909 = vsub.f32 1.0, %v908
      %v910 = vmul.f32 %v907, %v909
      %v911 = vadd.f32 %v907, %v910
      %vm912 = vweird.f32 %v861
      %vm913 = vweird.f32 %v907
      %vm914 = vmor %vm912, %vm913
      %v915 = vsel %vm914, %v907, %v911
      %v916 = vand.u32 2147483647, %v861
      %vm917 = vcmp.eq.f32.partialorder %v916, 8.507059e+37
      %v918 = vand.u32 %v861, 2147483648
      %v919 = vor.u32 1.1754944e-38, %v918
      %v920 = vsel %vm917, %v919, %v915
      %v921 = vmul.f32 1.0, %v920
      %v922 = vrcp.pop %v862
      %v923 = vmul.f32 %v862, %v922
      %v924 = vsub.f32 1.0, %v923
      %v925 = vmul.f32 %v922, %v924
      %v926 = vadd.f32 %v922, %v925
      %vm927 = vweird.f32 %v862
      %vm928 = vweird.f32 %v922
      %vm929 = vmor %vm927, %vm928
      %v930 = vsel %vm929, %v922, %v926
      %v931 = vand.u32 2147483647, %v862
      %vm932 = vcmp.eq.f32.partialorder %v931, 8.507059e+37
      %v933 = vand.u32 %v862, 2147483648
      %v934 = vor.u32 1.1754944e-38, %v933
      %v935 = vsel %vm932, %v934, %v930
      %v936 = vmul.f32 1.0, %v935
      %v937 = vrcp.pop %v863
      %v938 = vmul.f32 %v863, %v937
      %v939 = vsub.f32 1.0, %v938
      %v940 = vmul.f32 %v937, %v939
      %v941 = vadd.f32 %v937, %v940
      %vm942 = vweird.f32 %v863
      %vm943 = vweird.f32 %v937
      %vm944 = vmor %vm942, %vm943
      %v945 = vsel %vm944, %v937, %v941
      %v946 = vand.u32 2147483647, %v863
      %vm947 = vcmp.eq.f32.partialorder %v946, 8.507059e+37
      %v948 = vand.u32 %v863, 2147483648
      %v949 = vor.u32 1.1754944e-38, %v948
      %v950 = vsel %vm947, %v949, %v945
      %v951 = vmul.f32 1.0, %v950
      %v952 = vrcp.pop %v864
      %v953 = vmul.f32 %v864, %v952
      %v954 = vsub.f32 1.0, %v953
      %v955 = vmul.f32 %v952, %v954
      %v956 = vadd.f32 %v952, %v955
      %vm957 = vweird.f32 %v864
      %vm958 = vweird.f32 %v952
      %vm959 = vmor %vm957, %vm958
      %v960 = vsel %vm959, %v952, %v956
      %v961 = vand.u32 2147483647, %v864
      %vm962 = vcmp.eq.f32.partialorder %v961, 8.507059e+37
      %v963 = vand.u32 %v864, 2147483648
      %v964 = vor.u32 1.1754944e-38, %v963
      %v965 = vsel %vm962, %v964, %v960
      %v966 = vmul.f32 1.0, %v965
      %v967 = vrcp.pop %v865
      %v968 = vmul.f32 %v865, %v967
      %v969 = vsub.f32 1.0, %v968
      %v970 = vmul.f32 %v967, %v969
      %v971 = vadd.f32 %v967, %v970
      %vm972 = vweird.f32 %v865
      %vm973 = vweird.f32 %v967
      %vm974 = vmor %vm972, %vm973
      %v975 = vsel %vm974, %v967, %v971
      %v976 = vand.u32 2147483647, %v865
      %vm977 = vcmp.eq.f32.partialorder %v976, 8.507059e+37
      %v978 = vand.u32 %v865, 2147483648
      %v979 = vor.u32 1.1754944e-38, %v978
      %v980 = vsel %vm977, %v979, %v975
      %v981 = vmul.f32 1.0, %v980
      %v982 = vrcp.pop %v866
      %v983 = vmul.f32 %v866, %v982
      %v984 = vsub.f32 1.0, %v983
      %v985 = vmul.f32 %v982, %v984
      %v986 = vadd.f32 %v982, %v985
      %vm987 = vweird.f32 %v866
      %vm988 = vweird.f32 %v982
      %vm989 = vmor %vm987, %vm988
      %v990 = vsel %vm989, %v982, %v986
      %v991 = vand.u32 2147483647, %v866
      %vm992 = vcmp.eq.f32.partialorder %v991, 8.507059e+37
      %v993 = vand.u32 %v866, 2147483648
      %v994 = vor.u32 1.1754944e-38, %v993
      %v995 = vsel %vm992, %v994, %v990
      %v996 = vmul.f32 1.0, %v995
      %v997 = vrcp.pop %v867
      %v998 = vmul.f32 %v867, %v997
      %v999 = vsub.f32 1.0, %v998
      %v1000 = vmul.f32 %v997, %v999
      %v1001 = vadd.f32 %v997, %v1000
      %vm1002 = vweird.f32 %v867
      %vm1003 = vweird.f32 %v997
      %vm1004 = vmor %vm1002, %vm1003
      %v1005 = vsel %vm1004, %v997, %v1001
      %v1006 = vand.u32 2147483647, %v867
      %vm1007 = vcmp.eq.f32.partialorder %v1006, 8.507059e+37
      %v1008 = vand.u32 %v867, 2147483648
      %v1009 = vor.u32 1.1754944e-38, %v1008
      %v1010 = vsel %vm1007, %v1009, %v1005
      %v1011 = vmul.f32 1.0, %v1010
      %v1012 = vrcp.pop %v868
      %v1013 = vmul.f32 %v868, %v1012
      %v1014 = vsub.f32 1.0, %v1013
      %v1015 = vmul.f32 %v1012, %v1014
      %v1016 = vadd.f32 %v1012, %v1015
      %vm1017 = vweird.f32 %v868
      %vm1018 = vweird.f32 %v1012
      %vm1019 = vmor %vm1017, %vm1018
      %v1020 = vsel %vm1019, %v1012, %v1016
      %v1021 = vand.u32 2147483647, %v868
      %vm1022 = vcmp.eq.f32.partialorder %v1021, 8.507059e+37
      %v1023 = vand.u32 %v868, 2147483648
      %v1024 = vor.u32 1.1754944e-38, %v1023
      %v1025 = vsel %vm1022, %v1024, %v1020
      %v1026 = vmul.f32 1.0, %v1025
      %v1027 = vrcp.pop %v869
      %v1028 = vmul.f32 %v869, %v1027
      %v1029 = vsub.f32 1.0, %v1028
      %v1030 = vmul.f32 %v1027, %v1029
      %v1031 = vadd.f32 %v1027, %v1030
      %vm1032 = vweird.f32 %v869
      %vm1033 = vweird.f32 %v1027
      %vm1034 = vmor %vm1032, %vm1033
      %v1035 = vsel %vm1034, %v1027, %v1031
      %v1036 = vand.u32 2147483647, %v869
      %vm1037 = vcmp.eq.f32.partialorder %v1036, 8.507059e+37
      %v1038 = vand.u32 %v869, 2147483648
      %v1039 = vor.u32 1.1754944e-38, %v1038
      %v1040 = vsel %vm1037, %v1039, %v1035
      %v1041 = vmul.f32 1.0, %v1040
      %v1042 = vrcp.pop %v870
      %v1043 = vmul.f32 %v870, %v1042
      %v1044 = vsub.f32 1.0, %v1043
      %v1045 = vmul.f32 %v1042, %v1044
      %v1046 = vadd.f32 %v1042, %v1045
      %vm1047 = vweird.f32 %v870
      %vm1048 = vweird.f32 %v1042
      %vm1049 = vmor %vm1047, %vm1048
      %v1050 = vsel %vm1049, %v1042, %v1046
      %v1051 = vand.u32 2147483647, %v870
      %vm1052 = vcmp.eq.f32.partialorder %v1051, 8.507059e+37
      %v1053 = vand.u32 %v870, 2147483648
      %v1054 = vor.u32 1.1754944e-38, %v1053
      %v1055 = vsel %vm1052, %v1054, %v1050
      %v1056 = vmul.f32 1.0, %v1055
      %v1057 = vrcp.pop %v871
      %v1058 = vmul.f32 %v871, %v1057
      %v1059 = vsub.f32 1.0, %v1058
      %v1060 = vmul.f32 %v1057, %v1059
      %v1061 = vadd.f32 %v1057, %v1060
      %vm1062 = vweird.f32 %v871
      %vm1063 = vweird.f32 %v1057
      %vm1064 = vmor %vm1062, %vm1063
      %v1065 = vsel %vm1064, %v1057, %v1061
      %v1066 = vand.u32 2147483647, %v871
      %vm1067 = vcmp.eq.f32.partialorder %v1066, 8.507059e+37
      %v1068 = vand.u32 %v871, 2147483648
      %v1069 = vor.u32 1.1754944e-38, %v1068
      %v1070 = vsel %vm1067, %v1069, %v1065
      %v1071 = vmul.f32 1.0, %v1070
      %v1072 = vrcp.pop %v872
      %v1073 = vmul.f32 %v872, %v1072
      %v1074 = vsub.f32 1.0, %v1073
      %v1075 = vmul.f32 %v1072, %v1074
      %v1076 = vadd.f32 %v1072, %v1075
      %vm1077 = vweird.f32 %v872
      %vm1078 = vweird.f32 %v1072
      %vm1079 = vmor %vm1077, %vm1078
      %v1080 = vsel %vm1079, %v1072, %v1076
      %v1081 = vand.u32 2147483647, %v872
      %vm1082 = vcmp.eq.f32.partialorder %v1081, 8.507059e+37
      %v1083 = vand.u32 %v872, 2147483648
      %v1084 = vor.u32 1.1754944e-38, %v1083
      %v1085 = vsel %vm1082, %v1084, %v1080
      %v1086 = vmul.f32 1.0, %v1085
      %v1087 = vrcp.pop %v873
      %v1088 = vmul.f32 %v873, %v1087
      %v1089 = vsub.f32 1.0, %v1088
      %v1090 = vmul.f32 %v1087, %v1089
      %v1091 = vadd.f32 %v1087, %v1090
      %vm1092 = vweird.f32 %v873
      %vm1093 = vweird.f32 %v1087
      %vm1094 = vmor %vm1092, %vm1093
      %v1095 = vsel %vm1094, %v1087, %v1091
      %v1096 = vand.u32 2147483647, %v873
      %vm1097 = vcmp.eq.f32.partialorder %v1096, 8.507059e+37
      %v1098 = vand.u32 %v873, 2147483648
      %v1099 = vor.u32 1.1754944e-38, %v1098
      %v1100 = vsel %vm1097, %v1099, %v1095
      %v1101 = vmul.f32 1.0, %v1100
      %v1102 = vrcp.pop %v874
      %v1103 = vmul.f32 %v874, %v1102
      %v1104 = vsub.f32 1.0, %v1103
      %v1105 = vmul.f32 %v1102, %v1104
      %v1106 = vadd.f32 %v1102, %v1105
      %vm1107 = vweird.f32 %v874
      %vm1108 = vweird.f32 %v1102
      %vm1109 = vmor %vm1107, %vm1108
      %v1110 = vsel %vm1109, %v1102, %v1106
      %v1111 = vand.u32 2147483647, %v874
      %vm1112 = vcmp.eq.f32.partialorder %v1111, 8.507059e+37
      %v1113 = vand.u32 %v874, 2147483648
      %v1114 = vor.u32 1.1754944e-38, %v1113
      %v1115 = vsel %vm1112, %v1114, %v1110
      %v1116 = vmul.f32 1.0, %v1115
      %v1117 = vrcp.pop %v875
      %v1118 = vmul.f32 %v875, %v1117
      %v1119 = vsub.f32 1.0, %v1118
      %v1120 = vmul.f32 %v1117, %v1119
      %v1121 = vadd.f32 %v1117, %v1120
      %vm1122 = vweird.f32 %v875
      %vm1123 = vweird.f32 %v1117
      %vm1124 = vmor %vm1122, %vm1123
      %v1125 = vsel %vm1124, %v1117, %v1121
      %v1126 = vand.u32 2147483647, %v875
      %vm1127 = vcmp.eq.f32.partialorder %v1126, 8.507059e+37
      %v1128 = vand.u32 %v875, 2147483648
      %v1129 = vor.u32 1.1754944e-38, %v1128
      %v1130 = vsel %vm1127, %v1129, %v1125
      %v1131 = vmul.f32 1.0, %v1130
      %v1132 = vrcp.pop %v876
      %v1133 = vmul.f32 %v876, %v1132
      %v1134 = vsub.f32 1.0, %v1133
      %v1135 = vmul.f32 %v1132, %v1134
      %v1136 = vadd.f32 %v1132, %v1135
      %vm1137 = vweird.f32 %v876
      %vm1138 = vweird.f32 %v1132
      %vm1139 = vmor %vm1137, %vm1138
      %v1140 = vsel %vm1139, %v1132, %v1136
      %v1141 = vand.u32 2147483647, %v876
      %vm1142 = vcmp.eq.f32.partialorder %v1141, 8.507059e+37
      %v1143 = vand.u32 %v876, 2147483648
      %v1144 = vor.u32 1.1754944e-38, %v1143
      %v1145 = vsel %vm1142, %v1144, %v1140
      %v1146 = vmul.f32 1.0, %v1145
      %v1147 = vrcp.pop %v877
      %v1148 = vmul.f32 %v877, %v1147
      %v1149 = vsub.f32 1.0, %v1148
      %v1150 = vmul.f32 %v1147, %v1149
      %v1151 = vadd.f32 %v1147, %v1150
      %vm1152 = vweird.f32 %v877
      %vm1153 = vweird.f32 %v1147
      %vm1154 = vmor %vm1152, %vm1153
      %v1155 = vsel %vm1154, %v1147, %v1151
      %v1156 = vand.u32 2147483647, %v877
      %vm1157 = vcmp.eq.f32.partialorder %v1156, 8.507059e+37
      %v1158 = vand.u32 %v877, 2147483648
      %v1159 = vor.u32 1.1754944e-38, %v1158
      %v1160 = vsel %vm1157, %v1159, %v1155
      %v1161 = vmul.f32 1.0, %v1160
      %v1162 = vrcp.pop %v878
      %v1163 = vmul.f32 %v878, %v1162
      %v1164 = vsub.f32 1.0, %v1163
      %v1165 = vmul.f32 %v1162, %v1164
      %v1166 = vadd.f32 %v1162, %v1165
      %vm1167 = vweird.f32 %v878
      %vm1168 = vweird.f32 %v1162
      %vm1169 = vmor %vm1167, %vm1168
      %v1170 = vsel %vm1169, %v1162, %v1166
      %v1171 = vand.u32 2147483647, %v878
      %vm1172 = vcmp.eq.f32.partialorder %v1171, 8.507059e+37
      %v1173 = vand.u32 %v878, 2147483648
      %v1174 = vor.u32 1.1754944e-38, %v1173
      %v1175 = vsel %vm1172, %v1174, %v1170
      %v1176 = vmul.f32 1.0, %v1175
      %v1177 = vrcp.pop %v879
      %v1178 = vmul.f32 %v879, %v1177
      %v1179 = vsub.f32 1.0, %v1178
      %v1180 = vmul.f32 %v1177, %v1179
      %v1181 = vadd.f32 %v1177, %v1180
      %vm1182 = vweird.f32 %v879
      %vm1183 = vweird.f32 %v1177
      %vm1184 = vmor %vm1182, %vm1183
      %v1185 = vsel %vm1184, %v1177, %v1181
      %v1186 = vand.u32 2147483647, %v879
      %vm1187 = vcmp.eq.f32.partialorder %v1186, 8.507059e+37
      %v1188 = vand.u32 %v879, 2147483648
      %v1189 = vor.u32 1.1754944e-38, %v1188
      %v1190 = vsel %vm1187, %v1189, %v1185
      %v1191 = vmul.f32 1.0, %v1190
      %v1192 = vrcp.pop %v880
      %v1193 = vmul.f32 %v880, %v1192
      %v1194 = vsub.f32 1.0, %v1193
      %v1195 = vmul.f32 %v1192, %v1194
      %v1196 = vadd.f32 %v1192, %v1195
      %vm1197 = vweird.f32 %v880
      %vm1198 = vweird.f32 %v1192
      %vm1199 = vmor %vm1197, %vm1198
      %v1200 = vsel %vm1199, %v1192, %v1196
      %v1201 = vand.u32 2147483647, %v880
      %vm1202 = vcmp.eq.f32.partialorder %v1201, 8.507059e+37
      %v1203 = vand.u32 %v880, 2147483648
      %v1204 = vor.u32 1.1754944e-38, %v1203
      %v1205 = vsel %vm1202, %v1204, %v1200
      %v1206 = vmul.f32 1.0, %v1205
      %v1207 = vrcp.pop %v881
      %v1208 = vmul.f32 %v881, %v1207
      %v1209 = vsub.f32 1.0, %v1208
      %v1210 = vmul.f32 %v1207, %v1209
      %v1211 = vadd.f32 %v1207, %v1210
      %vm1212 = vweird.f32 %v881
      %vm1213 = vweird.f32 %v1207
      %vm1214 = vmor %vm1212, %vm1213
      %v1215 = vsel %vm1214, %v1207, %v1211
      %v1216 = vand.u32 2147483647, %v881
      %vm1217 = vcmp.eq.f32.partialorder %v1216, 8.507059e+37
      %v1218 = vand.u32 %v881, 2147483648
      %v1219 = vor.u32 1.1754944e-38, %v1218
      %v1220 = vsel %vm1217, %v1219, %v1215
      %v1221 = vmul.f32 1.0, %v1220
      %v1222 = vrcp.pop %v882
      %v1223 = vmul.f32 %v882, %v1222
      %v1224 = vsub.f32 1.0, %v1223
      %v1225 = vmul.f32 %v1222, %v1224
      %v1226 = vadd.f32 %v1222, %v1225
      %vm1227 = vweird.f32 %v882
      %vm1228 = vweird.f32 %v1222
      %vm1229 = vmor %vm1227, %vm1228
      %v1230 = vsel %vm1229, %v1222, %v1226
      %v1231 = vand.u32 2147483647, %v882
      %vm1232 = vcmp.eq.f32.partialorder %v1231, 8.507059e+37
      %v1233 = vand.u32 %v882, 2147483648
      %v1234 = vor.u32 1.1754944e-38, %v1233
      %v1235 = vsel %vm1232, %v1234, %v1230
      %v1236 = vmul.f32 1.0, %v1235
      %v1237 = vrcp.pop %v883
      %v1238 = vmul.f32 %v883, %v1237
      %v1239 = vsub.f32 1.0, %v1238
      %v1240 = vmul.f32 %v1237, %v1239
      %v1241 = vadd.f32 %v1237, %v1240
      %vm1242 = vweird.f32 %v883
      %vm1243 = vweird.f32 %v1237
      %vm1244 = vmor %vm1242, %vm1243
      %v1245 = vsel %vm1244, %v1237, %v1241
      %v1246 = vand.u32 2147483647, %v883
      %vm1247 = vcmp.eq.f32.partialorder %v1246, 8.507059e+37
      %v1248 = vand.u32 %v883, 2147483648
      %v1249 = vor.u32 1.1754944e-38, %v1248
      %v1250 = vsel %vm1247, %v1249, %v1245
      %v1251 = vmul.f32 1.0, %v1250
      %v1252 = vrcp.pop %v884
      %v1253 = vmul.f32 %v884, %v1252
      %v1254 = vsub.f32 1.0, %v1253
      %v1255 = vmul.f32 %v1252, %v1254
      %v1256 = vadd.f32 %v1252, %v1255
      %vm1257 = vweird.f32 %v884
      %vm1258 = vweird.f32 %v1252
      %vm1259 = vmor %vm1257, %vm1258
      %v1260 = vsel %vm1259, %v1252, %v1256
      %v1261 = vand.u32 2147483647, %v884
      %vm1262 = vcmp.eq.f32.partialorder %v1261, 8.507059e+37
      %v1263 = vand.u32 %v884, 2147483648
      %v1264 = vor.u32 1.1754944e-38, %v1263
      %v1265 = vsel %vm1262, %v1264, %v1260
      %v1266 = vmul.f32 1.0, %v1265
      %v1267 = vrcp.pop %v885
      %v1268 = vmul.f32 %v885, %v1267
      %v1269 = vsub.f32 1.0, %v1268
      %v1270 = vmul.f32 %v1267, %v1269
      %v1271 = vadd.f32 %v1267, %v1270
      %vm1272 = vweird.f32 %v885
      %vm1273 = vweird.f32 %v1267
      %vm1274 = vmor %vm1272, %vm1273
      %v1275 = vsel %vm1274, %v1267, %v1271
      %v1276 = vand.u32 2147483647, %v885
      %vm1277 = vcmp.eq.f32.partialorder %v1276, 8.507059e+37
      %v1278 = vand.u32 %v885, 2147483648
      %v1279 = vor.u32 1.1754944e-38, %v1278
      %v1280 = vsel %vm1277, %v1279, %v1275
      %v1281 = vmul.f32 1.0, %v1280
      %v1282 = vrcp.pop %v886
      %v1283 = vmul.f32 %v886, %v1282
      %v1284 = vsub.f32 1.0, %v1283
      %v1285 = vmul.f32 %v1282, %v1284
      %v1286 = vadd.f32 %v1282, %v1285
      %vm1287 = vweird.f32 %v886
      %vm1288 = vweird.f32 %v1282
      %vm1289 = vmor %vm1287, %vm1288
      %v1290 = vsel %vm1289, %v1282, %v1286
      %v1291 = vand.u32 2147483647, %v886
      %vm1292 = vcmp.eq.f32.partialorder %v1291, 8.507059e+37
      %v1293 = vand.u32 %v886, 2147483648
      %v1294 = vor.u32 1.1754944e-38, %v1293
      %v1295 = vsel %vm1292, %v1294, %v1290
      %v1296 = vmul.f32 1.0, %v1295
      %v1297 = vrcp.pop %v887
      %v1298 = vmul.f32 %v887, %v1297
      %v1299 = vsub.f32 1.0, %v1298
      %v1300 = vmul.f32 %v1297, %v1299
      %v1301 = vadd.f32 %v1297, %v1300
      %vm1302 = vweird.f32 %v887
      %vm1303 = vweird.f32 %v1297
      %vm1304 = vmor %vm1302, %vm1303
      %v1305 = vsel %vm1304, %v1297, %v1301
      %v1306 = vand.u32 2147483647, %v887
      %vm1307 = vcmp.eq.f32.partialorder %v1306, 8.507059e+37
      %v1308 = vand.u32 %v887, 2147483648
      %v1309 = vor.u32 1.1754944e-38, %v1308
      %v1310 = vsel %vm1307, %v1309, %v1305
      %v1311 = vmul.f32 1.0, %v1310
      %v1312 = vrcp.pop %v888
      %v1313 = vmul.f32 %v888, %v1312
      %v1314 = vsub.f32 1.0, %v1313
      %v1315 = vmul.f32 %v1312, %v1314
      %v1316 = vadd.f32 %v1312, %v1315
      %vm1317 = vweird.f32 %v888
      %vm1318 = vweird.f32 %v1312
      %vm1319 = vmor %vm1317, %vm1318
      %v1320 = vsel %vm1319, %v1312, %v1316
      %v1321 = vand.u32 2147483647, %v888
      %vm1322 = vcmp.eq.f32.partialorder %v1321, 8.507059e+37
      %v1323 = vand.u32 %v888, 2147483648
      %v1324 = vor.u32 1.1754944e-38, %v1323
      %v1325 = vsel %vm1322, %v1324, %v1320
      %v1326 = vmul.f32 1.0, %v1325
      %v1327 = vrcp.pop %v889
      %v1328 = vmul.f32 %v889, %v1327
      %v1329 = vsub.f32 1.0, %v1328
      %v1330 = vmul.f32 %v1327, %v1329
      %v1331 = vadd.f32 %v1327, %v1330
      %vm1332 = vweird.f32 %v889
      %vm1333 = vweird.f32 %v1327
      %vm1334 = vmor %vm1332, %vm1333
      %v1335 = vsel %vm1334, %v1327, %v1331
      %v1336 = vand.u32 2147483647, %v889
      %vm1337 = vcmp.eq.f32.partialorder %v1336, 8.507059e+37
      %v1338 = vand.u32 %v889, 2147483648
      %v1339 = vor.u32 1.1754944e-38, %v1338
      %v1340 = vsel %vm1337, %v1339, %v1335
      %v1341 = vmul.f32 1.0, %v1340
      %v1342 = vrcp.pop %v890
      %v1343 = vmul.f32 %v890, %v1342
      %v1344 = vsub.f32 1.0, %v1343
      %v1345 = vmul.f32 %v1342, %v1344
      %v1346 = vadd.f32 %v1342, %v1345
      %vm1347 = vweird.f32 %v890
      %vm1348 = vweird.f32 %v1342
      %vm1349 = vmor %vm1347, %vm1348
      %v1350 = vsel %vm1349, %v1342, %v1346
      %v1351 = vand.u32 2147483647, %v890
      %vm1352 = vcmp.eq.f32.partialorder %v1351, 8.507059e+37
      %v1353 = vand.u32 %v890, 2147483648
      %v1354 = vor.u32 1.1754944e-38, %v1353
      %v1355 = vsel %vm1352, %v1354, %v1350
      %v1356 = vmul.f32 1.0, %v1355
      %v1357 = vrcp.pop %v891
      %v1358 = vmul.f32 %v891, %v1357
      %v1359 = vsub.f32 1.0, %v1358
      %v1360 = vmul.f32 %v1357, %v1359
      %v1361 = vadd.f32 %v1357, %v1360
      %vm1362 = vweird.f32 %v891
      %vm1363 = vweird.f32 %v1357
      %vm1364 = vmor %vm1362, %vm1363
      %v1365 = vsel %vm1364, %v1357, %v1361
      %v1366 = vand.u32 2147483647, %v891
      %vm1367 = vcmp.eq.f32.partialorder %v1366, 8.507059e+37
      %v1368 = vand.u32 %v891, 2147483648
      %v1369 = vor.u32 1.1754944e-38, %v1368
      %v1370 = vsel %vm1367, %v1369, %v1365
      %v1371 = vmul.f32 1.0, %v1370
      %vm1372 = vcmp.gt.f32.partialorder %v906, 0.5
      %vm1373 = vcmp.gt.f32.partialorder %v921, 0.5
      %vm1374 = vcmp.gt.f32.partialorder %v936, 0.5
      %vm1375 = vcmp.gt.f32.partialorder %v951, 0.5
      %vm1376 = vcmp.gt.f32.partialorder %v966, 0.5
      %vm1377 = vcmp.gt.f32.partialorder %v981, 0.5
      %vm1378 = vcmp.gt.f32.partialorder %v996, 0.5
      %vm1379 = vcmp.gt.f32.partialorder %v1011, 0.5
      %vm1380 = vcmp.gt.f32.partialorder %v1026, 0.5
      %vm1381 = vcmp.gt.f32.partialorder %v1041, 0.5
      %vm1382 = vcmp.gt.f32.partialorder %v1056, 0.5
      %vm1383 = vcmp.gt.f32.partialorder %v1071, 0.5
      %vm1384 = vcmp.gt.f32.partialorder %v1086, 0.5
      %vm1385 = vcmp.gt.f32.partialorder %v1101, 0.5
      %vm1386 = vcmp.gt.f32.partialorder %v1116, 0.5
      %vm1387 = vcmp.gt.f32.partialorder %v1131, 0.5
      %vm1388 = vcmp.gt.f32.partialorder %v1146, 0.5
      %vm1389 = vcmp.gt.f32.partialorder %v1161, 0.5
      %vm1390 = vcmp.gt.f32.partialorder %v1176, 0.5
      %vm1391 = vcmp.gt.f32.partialorder %v1191, 0.5
      %vm1392 = vcmp.gt.f32.partialorder %v1206, 0.5
      %vm1393 = vcmp.gt.f32.partialorder %v1221, 0.5
      %vm1394 = vcmp.gt.f32.partialorder %v1236, 0.5
      %vm1395 = vcmp.gt.f32.partialorder %v1251, 0.5
      %vm1396 = vcmp.gt.f32.partialorder %v1266, 0.5
      %vm1397 = vcmp.gt.f32.partialorder %v1281, 0.5
      %vm1398 = vcmp.gt.f32.partialorder %v1296, 0.5
      %vm1399 = vcmp.gt.f32.partialorder %v1311, 0.5
      %vm1400 = vcmp.gt.f32.partialorder %v1326, 0.5
      %vm1401 = vcmp.gt.f32.partialorder %v1341, 0.5
      %vm1402 = vcmp.gt.f32.partialorder %v1356, 0.5
      %vm1403 = vcmp.gt.f32.partialorder %v1371, 0.5
      %v1404 = vsel %vm1372, 1.0, %v906
      %v1405 = vsel %vm1373, 1.0, %v921
      %v1406 = vsel %vm1374, 1.0, %v936
      %v1407 = vsel %vm1375, 1.0, %v951
      %v1408 = vsel %vm1376, 1.0, %v966
      %v1409 = vsel %vm1377, 1.0, %v981
      %v1410 = vsel %vm1378, 1.0, %v996
      %v1411 = vsel %vm1379, 1.0, %v1011
      %v1412 = vsel %vm1380, 1.0, %v1026
      %v1413 = vsel %vm1381, 1.0, %v1041
      %v1414 = vsel %vm1382, 1.0, %v1056
      %v1415 = vsel %vm1383, 1.0, %v1071
      %v1416 = vsel %vm1384, 1.0, %v1086
      %v1417 = vsel %vm1385, 1.0, %v1101
      %v1418 = vsel %vm1386, 1.0, %v1116
      %v1419 = vsel %vm1387, 1.0, %v1131
      %v1420 = vsel %vm1388, 1.0, %v1146
      %v1421 = vsel %vm1389, 1.0, %v1161
      %v1422 = vsel %vm1390, 1.0, %v1176
      %v1423 = vsel %vm1391, 1.0, %v1191
      %v1424 = vsel %vm1392, 1.0, %v1206
      %v1425 = vsel %vm1393, 1.0, %v1221
      %v1426 = vsel %vm1394, 1.0, %v1236
      %v1427 = vsel %vm1395, 1.0, %v1251
      %v1428 = vsel %vm1396, 1.0, %v1266
      %v1429 = vsel %vm1397, 1.0, %v1281
      %v1430 = vsel %vm1398, 1.0, %v1296
      %v1431 = vsel %vm1399, 1.0, %v1311
      %v1432 = vsel %vm1400, 1.0, %v1326
      %v1433 = vsel %vm1401, 1.0, %v1341
      %v1434 = vsel %vm1402, 1.0, %v1356
      %v1435 = vsel %vm1403, 1.0, %v1371
      %v1436 = vmul.f32 %v373, %v1404
      %v1437 = vmul.f32 %v374, %v1405
      %v1438 = vmul.f32 %v375, %v1406
      %v1439 = vmul.f32 %v376, %v1407
      %v1440 = vmul.f32 %v377, %v1408
      %v1441 = vmul.f32 %v378, %v1409
      %v1442 = vmul.f32 %v379, %v1410
      %v1443 = vmul.f32 %v380, %v1411
      %v1444 = vmul.f32 %v381, %v1412
      %v1445 = vmul.f32 %v382, %v1413
      %v1446 = vmul.f32 %v383, %v1414
      %v1447 = vmul.f32 %v384, %v1415
      %v1448 = vmul.f32 %v385, %v1416
      %v1449 = vmul.f32 %v386, %v1417
      %v1450 = vmul.f32 %v387, %v1418
      %v1451 = vmul.f32 %v388, %v1419
      %v1452 = vmul.f32 %v389, %v1420
      %v1453 = vmul.f32 %v390, %v1421
      %v1454 = vmul.f32 %v391, %v1422
      %v1455 = vmul.f32 %v392, %v1423
      %v1456 = vmul.f32 %v393, %v1424
      %v1457 = vmul.f32 %v394, %v1425
      %v1458 = vmul.f32 %v395, %v1426
      %v1459 = vmul.f32 %v396, %v1427
      %v1460 = vmul.f32 %v397, %v1428
      %v1461 = vmul.f32 %v398, %v1429
      %v1462 = vmul.f32 %v399, %v1430
      %v1463 = vmul.f32 %v400, %v1431
      %v1464 = vmul.f32 %v401, %v1432
      %v1465 = vmul.f32 %v402, %v1433
      %v1466 = vmul.f32 %v403, %v1434
      %v1467 = vmul.f32 %v404, %v1435
      %v1468 = vsel %vm1372, 0.0, %v906
      %v1469 = vsel %vm1373, 0.0, %v921
      %v1470 = vsel %vm1374, 0.0, %v936
      %v1471 = vsel %vm1375, 0.0, %v951
      %v1472 = vsel %vm1376, 0.0, %v966
      %v1473 = vsel %vm1377, 0.0, %v981
      %v1474 = vsel %vm1378, 0.0, %v996
      %v1475 = vsel %vm1379, 0.0, %v1011
      %v1476 = vsel %vm1380, 0.0, %v1026
      %v1477 = vsel %vm1381, 0.0, %v1041
      %v1478 = vsel %vm1382, 0.0, %v1056
      %v1479 = vsel %vm1383, 0.0, %v1071
      %v1480 = vsel %vm1384, 0.0, %v1086
      %v1481 = vsel %vm1385, 0.0, %v1101
      %v1482 = vsel %vm1386, 0.0, %v1116
      %v1483 = vsel %vm1387, 0.0, %v1131
      %v1484 = vsel %vm1388, 0.0, %v1146
      %v1485 = vsel %vm1389, 0.0, %v1161
      %v1486 = vsel %vm1390, 0.0, %v1176
      %v1487 = vsel %vm1391, 0.0, %v1191
      %v1488 = vsel %vm1392, 0.0, %v1206
      %v1489 = vsel %vm1393, 0.0, %v1221
      %v1490 = vsel %vm1394, 0.0, %v1236
      %v1491 = vsel %vm1395, 0.0, %v1251
      %v1492 = vsel %vm1396, 0.0, %v1266
      %v1493 = vsel %vm1397, 0.0, %v1281
      %v1494 = vsel %vm1398, 0.0, %v1296
      %v1495 = vsel %vm1399, 0.0, %v1311
      %v1496 = vsel %vm1400, 0.0, %v1326
      %v1497 = vsel %vm1401, 0.0, %v1341
      %v1498 = vsel %vm1402, 0.0, %v1356
      %v1499 = vsel %vm1403, 0.0, %v1371
      %v1500 = vmul.f32 %v373, %v1468
      %v1501 = vmul.f32 %v374, %v1469
      %v1502 = vmul.f32 %v375, %v1470
      %v1503 = vmul.f32 %v376, %v1471
      %v1504 = vmul.f32 %v377, %v1472
      %v1505 = vmul.f32 %v378, %v1473
      %v1506 = vmul.f32 %v379, %v1474
      %v1507 = vmul.f32 %v380, %v1475
      %v1508 = vmul.f32 %v381, %v1476
      %v1509 = vmul.f32 %v382, %v1477
      %v1510 = vmul.f32 %v383, %v1478
      %v1511 = vmul.f32 %v384, %v1479
      %v1512 = vmul.f32 %v385, %v1480
      %v1513 = vmul.f32 %v386, %v1481
      %v1514 = vmul.f32 %v387, %v1482
      %v1515 = vmul.f32 %v388, %v1483
      %v1516 = vmul.f32 %v389, %v1484
      %v1517 = vmul.f32 %v390, %v1485
      %v1518 = vmul.f32 %v391, %v1486
      %v1519 = vmul.f32 %v392, %v1487
      %v1520 = vmul.f32 %v393, %v1488
      %v1521 = vmul.f32 %v394, %v1489
      %v1522 = vmul.f32 %v395, %v1490
      %v1523 = vmul.f32 %v396, %v1491
      %v1524 = vmul.f32 %v397, %v1492
      %v1525 = vmul.f32 %v398, %v1493
      %v1526 = vmul.f32 %v399, %v1494
      %v1527 = vmul.f32 %v400, %v1495
      %v1528 = vmul.f32 %v401, %v1496
      %v1529 = vmul.f32 %v402, %v1497
      %v1530 = vmul.f32 %v403, %v1498
      %v1531 = vmul.f32 %v404, %v1499
      %v1532 = vld [vmem:[%s5] sm:$0xff]
      %v1533 = vld [vmem:[%s5 + $0x8] sm:$0xff]
      %v1534 = vld [vmem:[%s6] sm:$0xff]
      %v1535 = vld [vmem:[%s6 + $0x8] sm:$0xff]
      %v1537 = vsel %vm405, %v1500, 0
      %v1540 = vsel %vm405, %v1501, 0
      %v1543 = vsel %vm405, %v1502, 0
      %v1546 = vsel %vm405, %v1503, 0
      %v1549 = vsel %vm405, %v1504, 0
      %v1552 = vsel %vm405, %v1505, 0
      %v1555 = vsel %vm405, %v1506, 0
      %v1558 = vsel %vm405, %v1507, 0
      %v1561 = vsel %vm405, %v1508, 0
      %v1564 = vsel %vm405, %v1509, 0
      %v1567 = vsel %vm405, %v1510, 0
      %v1570 = vsel %vm405, %v1511, 0
      %v1573 = vsel %vm405, %v1512, 0
      %v1576 = vsel %vm405, %v1513, 0
      %v1579 = vsel %vm405, %v1514, 0
      %v1582 = vsel %vm405, %v1515, 0
      %v1585 = vsel %vm405, %v1516, 0
      %v1588 = vsel %vm405, %v1517, 0
      %v1591 = vsel %vm405, %v1518, 0
      %v1594 = vsel %vm405, %v1519, 0
      %v1597 = vsel %vm405, %v1520, 0
      %v1600 = vsel %vm405, %v1521, 0
      %v1603 = vsel %vm405, %v1522, 0
      %v1606 = vsel %vm405, %v1523, 0
      %v1609 = vsel %vm405, %v1524, 0
      %v1612 = vsel %vm405, %v1525, 0
      %v1615 = vsel %vm405, %v1526, 0
      %v1618 = vsel %vm405, %v1527, 0
      %v1621 = vsel %vm405, %v1528, 0
      %v1624 = vsel %vm405, %v1529, 0
      %v1627 = vsel %vm405, %v1530, 0
      %v1630 = vsel %vm405, %v1531, 0
      %1632 = vmatpush.msra.mxu0 0.0
      %1633 = vmatpush.msra.mxu0 0.0
      %1634 = vmatpush.msra.mxu0 0.0
      %1635 = vmatpush.msra.mxu0 0.0
      %1636 = vmatpush.msra.mxu0 0.0
      %1637 = vmatpush.msra.mxu0 0.0
      %1638 = vmatpush.msra.mxu0 0.0
      %1639 = vmatpush.msra.mxu0 0.0
      %1640 = vmatpush.msra.mxu0 0.0
      %1641 = vmatpush.msra.mxu0 0.0
      %1642 = vmatpush.msra.mxu0 0.0
      %1643 = vmatpush.msra.mxu0 0.0
      %1644 = vmatpush.msra.mxu0 0.0
      %1645 = vmatpush.msra.mxu0 0.0
      %1646 = vmatpush.msra.mxu0 %v1535
      %1647 = vmatpush.msra.mxu0 %v1534
      %1648 = vmatmul.f32.gmra.mxu0 %v1537
      %v1649 = vpop.f32.mrf.mxu0
      %v1650 = vadd.f32 0.0, %v1649
      %1651 = vmatmul.f32.gmra.mxu0 %v1540
      %v1652 = vpop.f32.mrf.mxu0
      %v1653 = vadd.f32 0.0, %v1652
      %1654 = vmatmul.f32.gmra.mxu0 %v1543
      %v1655 = vpop.f32.mrf.mxu0
      %v1656 = vadd.f32 0.0, %v1655
      %1657 = vmatmul.f32.gmra.mxu0 %v1546
      %v1658 = vpop.f32.mrf.mxu0
      %v1659 = vadd.f32 0.0, %v1658
      %1660 = vmatmul.f32.gmra.mxu0 %v1549
      %v1661 = vpop.f32.mrf.mxu0
      %v1662 = vadd.f32 0.0, %v1661
      %1663 = vmatmul.f32.gmra.mxu0 %v1552
      %v1664 = vpop.f32.mrf.mxu0
      %v1665 = vadd.f32 0.0, %v1664
      %1666 = vmatmul.f32.gmra.mxu0 %v1555
      %v1667 = vpop.f32.mrf.mxu0
      %v1668 = vadd.f32 0.0, %v1667
      %1669 = vmatmul.f32.gmra.mxu0 %v1558
      %v1670 = vpop.f32.mrf.mxu0
      %v1671 = vadd.f32 0.0, %v1670
      %1672 = vmatmul.f32.gmra.mxu0 %v1561
      %v1673 = vpop.f32.mrf.mxu0
      %v1674 = vadd.f32 0.0, %v1673
      %1675 = vmatmul.f32.gmra.mxu0 %v1564
      %v1676 = vpop.f32.mrf.mxu0
      %v1677 = vadd.f32 0.0, %v1676
      %1678 = vmatmul.f32.gmra.mxu0 %v1567
      %v1679 = vpop.f32.mrf.mxu0
      %v1680 = vadd.f32 0.0, %v1679
      %1681 = vmatmul.f32.gmra.mxu0 %v1570
      %v1682 = vpop.f32.mrf.mxu0
      %v1683 = vadd.f32 0.0, %v1682
      %1684 = vmatmul.f32.gmra.mxu0 %v1573
      %v1685 = vpop.f32.mrf.mxu0
      %v1686 = vadd.f32 0.0, %v1685
      %1687 = vmatmul.f32.gmra.mxu0 %v1576
      %v1688 = vpop.f32.mrf.mxu0
      %v1689 = vadd.f32 0.0, %v1688
      %1690 = vmatmul.f32.gmra.mxu0 %v1579
      %v1691 = vpop.f32.mrf.mxu0
      %v1692 = vadd.f32 0.0, %v1691
      %1693 = vmatmul.f32.gmra.mxu0 %v1582
      %v1694 = vpop.f32.mrf.mxu0
      %v1695 = vadd.f32 0.0, %v1694
      %1696 = vmatmul.f32.gmra.mxu0 %v1585
      %v1697 = vpop.f32.mrf.mxu0
      %v1698 = vadd.f32 0.0, %v1697
      %1699 = vmatmul.f32.gmra.mxu0 %v1588
      %v1700 = vpop.f32.mrf.mxu0
      %v1701 = vadd.f32 0.0, %v1700
      %1702 = vmatmul.f32.gmra.mxu0 %v1591
      %v1703 = vpop.f32.mrf.mxu0
      %v1704 = vadd.f32 0.0, %v1703
      %1705 = vmatmul.f32.gmra.mxu0 %v1594
      %v1706 = vpop.f32.mrf.mxu0
      %v1707 = vadd.f32 0.0, %v1706
      %1708 = vmatmul.f32.gmra.mxu0 %v1597
      %v1709 = vpop.f32.mrf.mxu0
      %v1710 = vadd.f32 0.0, %v1709
      %1711 = vmatmul.f32.gmra.mxu0 %v1600
      %v1712 = vpop.f32.mrf.mxu0
      %v1713 = vadd.f32 0.0, %v1712
      %1714 = vmatmul.f32.gmra.mxu0 %v1603
      %v1715 = vpop.f32.mrf.mxu0
      %v1716 = vadd.f32 0.0, %v1715
      %1717 = vmatmul.f32.gmra.mxu0 %v1606
      %v1718 = vpop.f32.mrf.mxu0
      %v1719 = vadd.f32 0.0, %v1718
      %1720 = vmatmul.f32.gmra.mxu0 %v1609
      %v1721 = vpop.f32.mrf.mxu0
      %v1722 = vadd.f32 0.0, %v1721
      %1723 = vmatmul.f32.gmra.mxu0 %v1612
      %v1724 = vpop.f32.mrf.mxu0
      %v1725 = vadd.f32 0.0, %v1724
      %1726 = vmatmul.f32.gmra.mxu0 %v1615
      %v1727 = vpop.f32.mrf.mxu0
      %v1728 = vadd.f32 0.0, %v1727
      %1729 = vmatmul.f32.gmra.mxu0 %v1618
      %v1730 = vpop.f32.mrf.mxu0
      %v1731 = vadd.f32 0.0, %v1730
      %1732 = vmatmul.f32.gmra.mxu0 %v1621
      %v1733 = vpop.f32.mrf.mxu0
      %v1734 = vadd.f32 0.0, %v1733
      %1735 = vmatmul.f32.gmra.mxu0 %v1624
      %v1736 = vpop.f32.mrf.mxu0
      %v1737 = vadd.f32 0.0, %v1736
      %1738 = vmatmul.f32.gmra.mxu0 %v1627
      %v1739 = vpop.f32.mrf.mxu0
      %v1740 = vadd.f32 0.0, %v1739
      %1741 = vmatmul.f32.gmra.mxu0 %v1630
      %v1742 = vpop.f32.mrf.mxu0
      %v1743 = vadd.f32 0.0, %v1742
      %1744 = vdwg.mxu0
      %v1746 = vsel %vm405, %v1436, 0
      %v1749 = vsel %vm405, %v1437, 0
      %v1752 = vsel %vm405, %v1438, 0
      %v1755 = vsel %vm405, %v1439, 0
      %v1758 = vsel %vm405, %v1440, 0
      %v1761 = vsel %vm405, %v1441, 0
      %v1764 = vsel %vm405, %v1442, 0
      %v1767 = vsel %vm405, %v1443, 0
      %v1770 = vsel %vm405, %v1444, 0
      %v1773 = vsel %vm405, %v1445, 0
      %v1776 = vsel %vm405, %v1446, 0
      %v1779 = vsel %vm405, %v1447, 0
      %v1782 = vsel %vm405, %v1448, 0
      %v1785 = vsel %vm405, %v1449, 0
      %v1788 = vsel %vm405, %v1450, 0
      %v1791 = vsel %vm405, %v1451, 0
      %v1794 = vsel %vm405, %v1452, 0
      %v1797 = vsel %vm405, %v1453, 0
      %v1800 = vsel %vm405, %v1454, 0
      %v1803 = vsel %vm405, %v1455, 0
      %v1806 = vsel %vm405, %v1456, 0
      %v1809 = vsel %vm405, %v1457, 0
      %v1812 = vsel %vm405, %v1458, 0
      %v1815 = vsel %vm405, %v1459, 0
      %v1818 = vsel %vm405, %v1460, 0
      %v1821 = vsel %vm405, %v1461, 0
      %v1824 = vsel %vm405, %v1462, 0
      %v1827 = vsel %vm405, %v1463, 0
      %v1830 = vsel %vm405, %v1464, 0
      %v1833 = vsel %vm405, %v1465, 0
      %v1836 = vsel %vm405, %v1466, 0
      %v1839 = vsel %vm405, %v1467, 0
      %1841 = vmatpush.msra.mxu0 0.0
      %1842 = vmatpush.msra.mxu0 0.0
      %1843 = vmatpush.msra.mxu0 0.0
      %1844 = vmatpush.msra.mxu0 0.0
      %1845 = vmatpush.msra.mxu0 0.0
      %1846 = vmatpush.msra.mxu0 0.0
      %1847 = vmatpush.msra.mxu0 0.0
      %1848 = vmatpush.msra.mxu0 0.0
      %1849 = vmatpush.msra.mxu0 0.0
      %1850 = vmatpush.msra.mxu0 0.0
      %1851 = vmatpush.msra.mxu0 0.0
      %1852 = vmatpush.msra.mxu0 0.0
      %1853 = vmatpush.msra.mxu0 0.0
      %1854 = vmatpush.msra.mxu0 0.0
      %1855 = vmatpush.msra.mxu0 %v1533
      %1856 = vmatpush.msra.mxu0 %v1532
      %1857 = vmatmul.f32.gmra.mxu0 %v1746
      %v1858 = vpop.f32.mrf.mxu0
      %v1859 = vadd.f32 %v1650, %v1858
      %1860 = vmatmul.f32.gmra.mxu0 %v1749
      %v1861 = vpop.f32.mrf.mxu0
      %v1862 = vadd.f32 %v1653, %v1861
      %1863 = vmatmul.f32.gmra.mxu0 %v1752
      %v1864 = vpop.f32.mrf.mxu0
      %v1865 = vadd.f32 %v1656, %v1864
      %1866 = vmatmul.f32.gmra.mxu0 %v1755
      %v1867 = vpop.f32.mrf.mxu0
      %v1868 = vadd.f32 %v1659, %v1867
      %1869 = vmatmul.f32.gmra.mxu0 %v1758
      %v1870 = vpop.f32.mrf.mxu0
      %v1871 = vadd.f32 %v1662, %v1870
      %1872 = vmatmul.f32.gmra.mxu0 %v1761
      %v1873 = vpop.f32.mrf.mxu0
      %v1874 = vadd.f32 %v1665, %v1873
      %1875 = vmatmul.f32.gmra.mxu0 %v1764
      %v1876 = vpop.f32.mrf.mxu0
      %v1877 = vadd.f32 %v1668, %v1876
      %1878 = vmatmul.f32.gmra.mxu0 %v1767
      %v1879 = vpop.f32.mrf.mxu0
      %v1880 = vadd.f32 %v1671, %v1879
      %1881 = vmatmul.f32.gmra.mxu0 %v1770
      %v1882 = vpop.f32.mrf.mxu0
      %v1883 = vadd.f32 %v1674, %v1882
      %1884 = vmatmul.f32.gmra.mxu0 %v1773
      %v1885 = vpop.f32.mrf.mxu0
      %v1886 = vadd.f32 %v1677, %v1885
      %1887 = vmatmul.f32.gmra.mxu0 %v1776
      %v1888 = vpop.f32.mrf.mxu0
      %v1889 = vadd.f32 %v1680, %v1888
      %1890 = vmatmul.f32.gmra.mxu0 %v1779
      %v1891 = vpop.f32.mrf.mxu0
      %v1892 = vadd.f32 %v1683, %v1891
      %1893 = vmatmul.f32.gmra.mxu0 %v1782
      %v1894 = vpop.f32.mrf.mxu0
      %v1895 = vadd.f32 %v1686, %v1894
      %1896 = vmatmul.f32.gmra.mxu0 %v1785
      %v1897 = vpop.f32.mrf.mxu0
      %v1898 = vadd.f32 %v1689, %v1897
      %1899 = vmatmul.f32.gmra.mxu0 %v1788
      %v1900 = vpop.f32.mrf.mxu0
      %v1901 = vadd.f32 %v1692, %v1900
      %1902 = vmatmul.f32.gmra.mxu0 %v1791
      %v1903 = vpop.f32.mrf.mxu0
      %v1904 = vadd.f32 %v1695, %v1903
      %1905 = vmatmul.f32.gmra.mxu0 %v1794
      %v1906 = vpop.f32.mrf.mxu0
      %v1907 = vadd.f32 %v1698, %v1906
      %1908 = vmatmul.f32.gmra.mxu0 %v1797
      %v1909 = vpop.f32.mrf.mxu0
      %v1910 = vadd.f32 %v1701, %v1909
      %1911 = vmatmul.f32.gmra.mxu0 %v1800
      %v1912 = vpop.f32.mrf.mxu0
      %v1913 = vadd.f32 %v1704, %v1912
      %1914 = vmatmul.f32.gmra.mxu0 %v1803
      %v1915 = vpop.f32.mrf.mxu0
      %v1916 = vadd.f32 %v1707, %v1915
      %1917 = vmatmul.f32.gmra.mxu0 %v1806
      %v1918 = vpop.f32.mrf.mxu0
      %v1919 = vadd.f32 %v1710, %v1918
      %1920 = vmatmul.f32.gmra.mxu0 %v1809
      %v1921 = vpop.f32.mrf.mxu0
      %v1922 = vadd.f32 %v1713, %v1921
      %1923 = vmatmul.f32.gmra.mxu0 %v1812
      %v1924 = vpop.f32.mrf.mxu0
      %v1925 = vadd.f32 %v1716, %v1924
      %1926 = vmatmul.f32.gmra.mxu0 %v1815
      %v1927 = vpop.f32.mrf.mxu0
      %v1928 = vadd.f32 %v1719, %v1927
      %1929 = vmatmul.f32.gmra.mxu0 %v1818
      %v1930 = vpop.f32.mrf.mxu0
      %v1931 = vadd.f32 %v1722, %v1930
      %1932 = vmatmul.f32.gmra.mxu0 %v1821
      %v1933 = vpop.f32.mrf.mxu0
      %v1934 = vadd.f32 %v1725, %v1933
      %1935 = vmatmul.f32.gmra.mxu0 %v1824
      %v1936 = vpop.f32.mrf.mxu0
      %v1937 = vadd.f32 %v1728, %v1936
      %1938 = vmatmul.f32.gmra.mxu0 %v1827
      %v1939 = vpop.f32.mrf.mxu0
      %v1940 = vadd.f32 %v1731, %v1939
      %1941 = vmatmul.f32.gmra.mxu0 %v1830
      %v1942 = vpop.f32.mrf.mxu0
      %v1943 = vadd.f32 %v1734, %v1942
      %1944 = vmatmul.f32.gmra.mxu0 %v1833
      %v1945 = vpop.f32.mrf.mxu0
      %v1946 = vadd.f32 %v1737, %v1945
      %1947 = vmatmul.f32.gmra.mxu0 %v1836
      %v1948 = vpop.f32.mrf.mxu0
      %v1949 = vadd.f32 %v1740, %v1948
      %1950 = vmatmul.f32.gmra.mxu0 %v1839
      %v1951 = vpop.f32.mrf.mxu0
      %v1952 = vadd.f32 %v1743, %v1951
      %1953 = vdwg.mxu0
      %v1954 = vld [vmem:[%s7] sm:$0xff]
      %v1955 = vld [vmem:[%s7 + $0x8] sm:$0xff]
      %v1956 = vld [vmem:[%s8] sm:$0xff]
      %v1957 = vld [vmem:[%s8 + $0x8] sm:$0xff]
      %1958 = vmatpush.msra.mxu0 0.0
      %1959 = vmatpush.msra.mxu0 0.0
      %1960 = vmatpush.msra.mxu0 0.0
      %1961 = vmatpush.msra.mxu0 0.0
      %1962 = vmatpush.msra.mxu0 0.0
      %1963 = vmatpush.msra.mxu0 0.0
      %1964 = vmatpush.msra.mxu0 0.0
      %1965 = vmatpush.msra.mxu0 0.0
      %1966 = vmatpush.msra.mxu0 0.0
      %1967 = vmatpush.msra.mxu0 0.0
      %1968 = vmatpush.msra.mxu0 0.0
      %1969 = vmatpush.msra.mxu0 0.0
      %1970 = vmatpush.msra.mxu0 0.0
      %1971 = vmatpush.msra.mxu0 0.0
      %1972 = vmatpush.msra.mxu0 %v1957
      %1973 = vmatpush.msra.mxu0 %v1956
      %1974 = vmatmul.f32.gmra.mxu0 %v1537
      %v1975 = vpop.f32.mrf.mxu0
      %v1976 = vadd.f32 0.0, %v1975
      %1977 = vmatmul.f32.gmra.mxu0 %v1540
      %v1978 = vpop.f32.mrf.mxu0
      %v1979 = vadd.f32 0.0, %v1978
      %1980 = vmatmul.f32.gmra.mxu0 %v1543
      %v1981 = vpop.f32.mrf.mxu0
      %v1982 = vadd.f32 0.0, %v1981
      %1983 = vmatmul.f32.gmra.mxu0 %v1546
      %v1984 = vpop.f32.mrf.mxu0
      %v1985 = vadd.f32 0.0, %v1984
      %1986 = vmatmul.f32.gmra.mxu0 %v1549
      %v1987 = vpop.f32.mrf.mxu0
      %v1988 = vadd.f32 0.0, %v1987
      %1989 = vmatmul.f32.gmra.mxu0 %v1552
      %v1990 = vpop.f32.mrf.mxu0
      %v1991 = vadd.f32 0.0, %v1990
      %1992 = vmatmul.f32.gmra.mxu0 %v1555
      %v1993 = vpop.f32.mrf.mxu0
      %v1994 = vadd.f32 0.0, %v1993
      %1995 = vmatmul.f32.gmra.mxu0 %v1558
      %v1996 = vpop.f32.mrf.mxu0
      %v1997 = vadd.f32 0.0, %v1996
      %1998 = vmatmul.f32.gmra.mxu0 %v1561
      %v1999 = vpop.f32.mrf.mxu0
      %v2000 = vadd.f32 0.0, %v1999
      %2001 = vmatmul.f32.gmra.mxu0 %v1564
      %v2002 = vpop.f32.mrf.mxu0
      %v2003 = vadd.f32 0.0, %v2002
      %2004 = vmatmul.f32.gmra.mxu0 %v1567
      %v2005 = vpop.f32.mrf.mxu0
      %v2006 = vadd.f32 0.0, %v2005
      %2007 = vmatmul.f32.gmra.mxu0 %v1570
      %v2008 = vpop.f32.mrf.mxu0
      %v2009 = vadd.f32 0.0, %v2008
      %2010 = vmatmul.f32.gmra.mxu0 %v1573
      %v2011 = vpop.f32.mrf.mxu0
      %v2012 = vadd.f32 0.0, %v2011
      %2013 = vmatmul.f32.gmra.mxu0 %v1576
      %v2014 = vpop.f32.mrf.mxu0
      %v2015 = vadd.f32 0.0, %v2014
      %2016 = vmatmul.f32.gmra.mxu0 %v1579
      %v2017 = vpop.f32.mrf.mxu0
      %v2018 = vadd.f32 0.0, %v2017
      %2019 = vmatmul.f32.gmra.mxu0 %v1582
      %v2020 = vpop.f32.mrf.mxu0
      %v2021 = vadd.f32 0.0, %v2020
      %2022 = vmatmul.f32.gmra.mxu0 %v1585
      %v2023 = vpop.f32.mrf.mxu0
      %v2024 = vadd.f32 0.0, %v2023
      %2025 = vmatmul.f32.gmra.mxu0 %v1588
      %v2026 = vpop.f32.mrf.mxu0
      %v2027 = vadd.f32 0.0, %v2026
      %2028 = vmatmul.f32.gmra.mxu0 %v1591
      %v2029 = vpop.f32.mrf.mxu0
      %v2030 = vadd.f32 0.0, %v2029
      %2031 = vmatmul.f32.gmra.mxu0 %v1594
      %v2032 = vpop.f32.mrf.mxu0
      %v2033 = vadd.f32 0.0, %v2032
      %2034 = vmatmul.f32.gmra.mxu0 %v1597
      %v2035 = vpop.f32.mrf.mxu0
      %v2036 = vadd.f32 0.0, %v2035
      %2037 = vmatmul.f32.gmra.mxu0 %v1600
      %v2038 = vpop.f32.mrf.mxu0
      %v2039 = vadd.f32 0.0, %v2038
      %2040 = vmatmul.f32.gmra.mxu0 %v1603
      %v2041 = vpop.f32.mrf.mxu0
      %v2042 = vadd.f32 0.0, %v2041
      %2043 = vmatmul.f32.gmra.mxu0 %v1606
      %v2044 = vpop.f32.mrf.mxu0
      %v2045 = vadd.f32 0.0, %v2044
      %2046 = vmatmul.f32.gmra.mxu0 %v1609
      %v2047 = vpop.f32.mrf.mxu0
      %v2048 = vadd.f32 0.0, %v2047
      %2049 = vmatmul.f32.gmra.mxu0 %v1612
      %v2050 = vpop.f32.mrf.mxu0
      %v2051 = vadd.f32 0.0, %v2050
      %2052 = vmatmul.f32.gmra.mxu0 %v1615
      %v2053 = vpop.f32.mrf.mxu0
      %v2054 = vadd.f32 0.0, %v2053
      %2055 = vmatmul.f32.gmra.mxu0 %v1618
      %v2056 = vpop.f32.mrf.mxu0
      %v2057 = vadd.f32 0.0, %v2056
      %2058 = vmatmul.f32.gmra.mxu0 %v1621
      %v2059 = vpop.f32.mrf.mxu0
      %v2060 = vadd.f32 0.0, %v2059
      %2061 = vmatmul.f32.gmra.mxu0 %v1624
      %v2062 = vpop.f32.mrf.mxu0
      %v2063 = vadd.f32 0.0, %v2062
      %2064 = vmatmul.f32.gmra.mxu0 %v1627
      %v2065 = vpop.f32.mrf.mxu0
      %v2066 = vadd.f32 0.0, %v2065
      %2067 = vmatmul.f32.gmra.mxu0 %v1630
      %v2068 = vpop.f32.mrf.mxu0
      %v2069 = vadd.f32 0.0, %v2068
      %2070 = vdwg.mxu0
      %2071 = vmatpush.msra.mxu0 0.0
      %2072 = vmatpush.msra.mxu0 0.0
      %2073 = vmatpush.msra.mxu0 0.0
      %2074 = vmatpush.msra.mxu0 0.0
      %2075 = vmatpush.msra.mxu0 0.0
      %2076 = vmatpush.msra.mxu0 0.0
      %2077 = vmatpush.msra.mxu0 0.0
      %2078 = vmatpush.msra.mxu0 0.0
      %2079 = vmatpush.msra.mxu0 0.0
      %2080 = vmatpush.msra.mxu0 0.0
      %2081 = vmatpush.msra.mxu0 0.0
      %2082 = vmatpush.msra.mxu0 0.0
      %2083 = vmatpush.msra.mxu0 0.0
      %2084 = vmatpush.msra.mxu0 0.0
      %2085 = vmatpush.msra.mxu0 %v1955
      %2086 = vmatpush.msra.mxu0 %v1954
      %2087 = vmatmul.f32.gmra.mxu0 %v1746
      %v2088 = vpop.f32.mrf.mxu0
      %v2089 = vadd.f32 %v1976, %v2088
      %2090 = vmatmul.f32.gmra.mxu0 %v1749
      %v2091 = vpop.f32.mrf.mxu0
      %v2092 = vadd.f32 %v1979, %v2091
      %2093 = vmatmul.f32.gmra.mxu0 %v1752
      %v2094 = vpop.f32.mrf.mxu0
      %v2095 = vadd.f32 %v1982, %v2094
      %2096 = vmatmul.f32.gmra.mxu0 %v1755
      %v2097 = vpop.f32.mrf.mxu0
      %v2098 = vadd.f32 %v1985, %v2097
      %2099 = vmatmul.f32.gmra.mxu0 %v1758
      %v2100 = vpop.f32.mrf.mxu0
      %v2101 = vadd.f32 %v1988, %v2100
      %2102 = vmatmul.f32.gmra.mxu0 %v1761
      %v2103 = vpop.f32.mrf.mxu0
      %v2104 = vadd.f32 %v1991, %v2103
      %2105 = vmatmul.f32.gmra.mxu0 %v1764
      %v2106 = vpop.f32.mrf.mxu0
      %v2107 = vadd.f32 %v1994, %v2106
      %2108 = vmatmul.f32.gmra.mxu0 %v1767
      %v2109 = vpop.f32.mrf.mxu0
      %v2110 = vadd.f32 %v1997, %v2109
      %2111 = vmatmul.f32.gmra.mxu0 %v1770
      %v2112 = vpop.f32.mrf.mxu0
      %v2113 = vadd.f32 %v2000, %v2112
      %2114 = vmatmul.f32.gmra.mxu0 %v1773
      %v2115 = vpop.f32.mrf.mxu0
      %v2116 = vadd.f32 %v2003, %v2115
      %2117 = vmatmul.f32.gmra.mxu0 %v1776
      %v2118 = vpop.f32.mrf.mxu0
      %v2119 = vadd.f32 %v2006, %v2118
      %2120 = vmatmul.f32.gmra.mxu0 %v1779
      %v2121 = vpop.f32.mrf.mxu0
      %v2122 = vadd.f32 %v2009, %v2121
      %2123 = vmatmul.f32.gmra.mxu0 %v1782
      %v2124 = vpop.f32.mrf.mxu0
      %v2125 = vadd.f32 %v2012, %v2124
      %2126 = vmatmul.f32.gmra.mxu0 %v1785
      %v2127 = vpop.f32.mrf.mxu0
      %v2128 = vadd.f32 %v2015, %v2127
      %2129 = vmatmul.f32.gmra.mxu0 %v1788
      %v2130 = vpop.f32.mrf.mxu0
      %v2131 = vadd.f32 %v2018, %v2130
      %2132 = vmatmul.f32.gmra.mxu0 %v1791
      %v2133 = vpop.f32.mrf.mxu0
      %v2134 = vadd.f32 %v2021, %v2133
      %2135 = vmatmul.f32.gmra.mxu0 %v1794
      %v2136 = vpop.f32.mrf.mxu0
      %v2137 = vadd.f32 %v2024, %v2136
      %2138 = vmatmul.f32.gmra.mxu0 %v1797
      %v2139 = vpop.f32.mrf.mxu0
      %v2140 = vadd.f32 %v2027, %v2139
      %2141 = vmatmul.f32.gmra.mxu0 %v1800
      %v2142 = vpop.f32.mrf.mxu0
      %v2143 = vadd.f32 %v2030, %v2142
      %2144 = vmatmul.f32.gmra.mxu0 %v1803
      %v2145 = vpop.f32.mrf.mxu0
      %v2146 = vadd.f32 %v2033, %v2145
      %2147 = vmatmul.f32.gmra.mxu0 %v1806
      %v2148 = vpop.f32.mrf.mxu0
      %v2149 = vadd.f32 %v2036, %v2148
      %2150 = vmatmul.f32.gmra.mxu0 %v1809
      %v2151 = vpop.f32.mrf.mxu0
      %v2152 = vadd.f32 %v2039, %v2151
      %2153 = vmatmul.f32.gmra.mxu0 %v1812
      %v2154 = vpop.f32.mrf.mxu0
      %v2155 = vadd.f32 %v2042, %v2154
      %2156 = vmatmul.f32.gmra.mxu0 %v1815
      %v2157 = vpop.f32.mrf.mxu0
      %v2158 = vadd.f32 %v2045, %v2157
      %2159 = vmatmul.f32.gmra.mxu0 %v1818
      %v2160 = vpop.f32.mrf.mxu0
      %v2161 = vadd.f32 %v2048, %v2160
      %2162 = vmatmul.f32.gmra.mxu0 %v1821
      %v2163 = vpop.f32.mrf.mxu0
      %v2164 = vadd.f32 %v2051, %v2163
      %2165 = vmatmul.f32.gmra.mxu0 %v1824
      %v2166 = vpop.f32.mrf.mxu0
      %v2167 = vadd.f32 %v2054, %v2166
      %2168 = vmatmul.f32.gmra.mxu0 %v1827
      %v2169 = vpop.f32.mrf.mxu0
      %v2170 = vadd.f32 %v2057, %v2169
      %2171 = vmatmul.f32.gmra.mxu0 %v1830
      %v2172 = vpop.f32.mrf.mxu0
      %v2173 = vadd.f32 %v2060, %v2172
      %2174 = vmatmul.f32.gmra.mxu0 %v1833
      %v2175 = vpop.f32.mrf.mxu0
      %v2176 = vadd.f32 %v2063, %v2175
      %2177 = vmatmul.f32.gmra.mxu0 %v1836
      %v2178 = vpop.f32.mrf.mxu0
      %v2179 = vadd.f32 %v2066, %v2178
      %2180 = vmatmul.f32.gmra.mxu0 %v1839
      %v2181 = vpop.f32.mrf.mxu0
      %v2182 = vadd.f32 %v2069, %v2181
      %2183 = vdwg.mxu0
      %vm2184 = vcmask 31744
      %2185 = vst.msk [vmem:[%s367] sm:$0xff] %vm2184, 0.0
      %2186 = vst.msk [vmem:[%s367 + $0x8] sm:$0xff] %vm2184, 0.0
      %2187 = vst.msk [vmem:[%s367 + $0x10] sm:$0xff] %vm2184, 0.0
      %2188 = vst.msk [vmem:[%s367 + $0x18] sm:$0xff] %vm2184, 0.0
      %2189 = vst.msk [vmem:[%s367 + $0x20] sm:$0xff] %vm2184, 0.0
      %2190 = vst.msk [vmem:[%s367 + $0x28] sm:$0xff] %vm2184, 0.0
      %2191 = vst.msk [vmem:[%s367 + $0x30] sm:$0xff] %vm2184, 0.0
      %2192 = vst.msk [vmem:[%s367 + $0x38] sm:$0xff] %vm2184, 0.0
      %2193 = vst.msk [vmem:[%s367 + $0x40] sm:$0xff] %vm2184, 0.0
      %2194 = vst.msk [vmem:[%s367 + $0x48] sm:$0xff] %vm2184, 0.0
      %2195 = vst.msk [vmem:[%s367 + $0x50] sm:$0xff] %vm2184, 0.0
      %2196 = vst.msk [vmem:[%s367 + $0x58] sm:$0xff] %vm2184, 0.0
      %2197 = vst.msk [vmem:[%s367 + $0x60] sm:$0xff] %vm2184, 0.0
      %2198 = vst.msk [vmem:[%s367 + $0x68] sm:$0xff] %vm2184, 0.0
      %2199 = vst.msk [vmem:[%s367 + $0x70] sm:$0xff] %vm2184, 0.0
      %2200 = vst.msk [vmem:[%s367 + $0x78] sm:$0xff] %vm2184, 0.0
      %2201 = vst.msk [vmem:[%s367 + $0x80] sm:$0xff] %vm2184, 0.0
      %2202 = vst.msk [vmem:[%s367 + $0x88] sm:$0xff] %vm2184, 0.0
      %2203 = vst.msk [vmem:[%s367 + $0x90] sm:$0xff] %vm2184, 0.0
      %2204 = vst.msk [vmem:[%s367 + $0x98] sm:$0xff] %vm2184, 0.0
      %2205 = vst.msk [vmem:[%s367 + $0xa0] sm:$0xff] %vm2184, 0.0
      %2206 = vst.msk [vmem:[%s367 + $0xa8] sm:$0xff] %vm2184, 0.0
      %2207 = vst.msk [vmem:[%s367 + $0xb0] sm:$0xff] %vm2184, 0.0
      %2208 = vst.msk [vmem:[%s367 + $0xb8] sm:$0xff] %vm2184, 0.0
      %2209 = vst.msk [vmem:[%s367 + $0xc0] sm:$0xff] %vm2184, 0.0
      %2210 = vst.msk [vmem:[%s367 + $0xc8] sm:$0xff] %vm2184, 0.0
      %2211 = vst.msk [vmem:[%s367 + $0xd0] sm:$0xff] %vm2184, 0.0
      %2212 = vst.msk [vmem:[%s367 + $0xd8] sm:$0xff] %vm2184, 0.0
      %2213 = vst.msk [vmem:[%s367 + $0xe0] sm:$0xff] %vm2184, 0.0
      %2214 = vst.msk [vmem:[%s367 + $0xe8] sm:$0xff] %vm2184, 0.0
      %2215 = vst.msk [vmem:[%s367 + $0xf0] sm:$0xff] %vm2184, 0.0
      %2216 = vst.msk [vmem:[%s367 + $0xf8] sm:$0xff] %vm2184, 0.0
      %2217 = vst.msk [vmem:[%s367 + $0x100] sm:$0xff] %vm2184, 0.0
      %2218 = vst.msk [vmem:[%s367 + $0x108] sm:$0xff] %vm2184, 0.0
      %2219 = vst.msk [vmem:[%s367 + $0x110] sm:$0xff] %vm2184, 0.0
      %2220 = vst.msk [vmem:[%s367 + $0x118] sm:$0xff] %vm2184, 0.0
      %2221 = vst.msk [vmem:[%s367 + $0x120] sm:$0xff] %vm2184, 0.0
      %2222 = vst.msk [vmem:[%s367 + $0x128] sm:$0xff] %vm2184, 0.0
      %2223 = vst.msk [vmem:[%s367 + $0x130] sm:$0xff] %vm2184, 0.0
      %2224 = vst.msk [vmem:[%s367 + $0x138] sm:$0xff] %vm2184, 0.0
      %2225 = vst.msk [vmem:[%s367 + $0x20] sm:$0xff] %vm2184, %v1859
      %2226 = vst.msk [vmem:[%s367 + $0x28] sm:$0xff] %vm2184, %v1862
      %2227 = vst.msk [vmem:[%s367 + $0x30] sm:$0xff] %vm2184, %v1865
      %2228 = vst.msk [vmem:[%s367 + $0x38] sm:$0xff] %vm2184, %v1868
      %2229 = vst.msk [vmem:[%s367 + $0x40] sm:$0xff] %vm2184, %v1871
      %2230 = vst.msk [vmem:[%s367 + $0x48] sm:$0xff] %vm2184, %v1874
      %2231 = vst.msk [vmem:[%s367 + $0x50] sm:$0xff] %vm2184, %v1877
      %2232 = vst.msk [vmem:[%s367 + $0x58] sm:$0xff] %vm2184, %v1880
      %2233 = vst.msk [vmem:[%s367 + $0x60] sm:$0xff] %vm2184, %v1883
      %2234 = vst.msk [vmem:[%s367 + $0x68] sm:$0xff] %vm2184, %v1886
      %2235 = vst.msk [vmem:[%s367 + $0x70] sm:$0xff] %vm2184, %v1889
      %2236 = vst.msk [vmem:[%s367 + $0x78] sm:$0xff] %vm2184, %v1892
      %2237 = vst.msk [vmem:[%s367 + $0x80] sm:$0xff] %vm2184, %v1895
      %2238 = vst.msk [vmem:[%s367 + $0x88] sm:$0xff] %vm2184, %v1898
      %2239 = vst.msk [vmem:[%s367 + $0x90] sm:$0xff] %vm2184, %v1901
      %2240 = vst.msk [vmem:[%s367 + $0x98] sm:$0xff] %vm2184, %v1904
      %2241 = vst.msk [vmem:[%s367 + $0xa0] sm:$0xff] %vm2184, %v1907
      %2242 = vst.msk [vmem:[%s367 + $0xa8] sm:$0xff] %vm2184, %v1910
      %2243 = vst.msk [vmem:[%s367 + $0xb0] sm:$0xff] %vm2184, %v1913
      %2244 = vst.msk [vmem:[%s367 + $0xb8] sm:$0xff] %vm2184, %v1916
      %2245 = vst.msk [vmem:[%s367 + $0xc0] sm:$0xff] %vm2184, %v1919
      %2246 = vst.msk [vmem:[%s367 + $0xc8] sm:$0xff] %vm2184, %v1922
      %2247 = vst.msk [vmem:[%s367 + $0xd0] sm:$0xff] %vm2184, %v1925
      %2248 = vst.msk [vmem:[%s367 + $0xd8] sm:$0xff] %vm2184, %v1928
      %2249 = vst.msk [vmem:[%s367 + $0xe0] sm:$0xff] %vm2184, %v1931
      %2250 = vst.msk [vmem:[%s367 + $0xe8] sm:$0xff] %vm2184, %v1934
      %2251 = vst.msk [vmem:[%s367 + $0xf0] sm:$0xff] %vm2184, %v1937
      %2252 = vst.msk [vmem:[%s367 + $0xf8] sm:$0xff] %vm2184, %v1940
      %2253 = vst.msk [vmem:[%s367 + $0x100] sm:$0xff] %vm2184, %v1943
      %2254 = vst.msk [vmem:[%s367 + $0x108] sm:$0xff] %vm2184, %v1946
      %2255 = vst.msk [vmem:[%s367 + $0x110] sm:$0xff] %vm2184, %v1949
      %2256 = vst.msk [vmem:[%s367 + $0x118] sm:$0xff] %vm2184, %v1952
      %2257 = vst.msk [vmem:[%s372] sm:$0xff] %vm2184, %v2089
      %2258 = vst.msk [vmem:[%s372 + $0x8] sm:$0xff] %vm2184, %v2092
      %2259 = vst.msk [vmem:[%s372 + $0x10] sm:$0xff] %vm2184, %v2095
      %2260 = vst.msk [vmem:[%s372 + $0x18] sm:$0xff] %vm2184, %v2098
      %2261 = vst.msk [vmem:[%s372 + $0x20] sm:$0xff] %vm2184, %v2101
      %2262 = vst.msk [vmem:[%s372 + $0x28] sm:$0xff] %vm2184, %v2104
      %2263 = vst.msk [vmem:[%s372 + $0x30] sm:$0xff] %vm2184, %v2107
      %2264 = vst.msk [vmem:[%s372 + $0x38] sm:$0xff] %vm2184, %v2110
      %2265 = vst.msk [vmem:[%s372 + $0x40] sm:$0xff] %vm2184, %v2113
      %2266 = vst.msk [vmem:[%s372 + $0x48] sm:$0xff] %vm2184, %v2116
      %2267 = vst.msk [vmem:[%s372 + $0x50] sm:$0xff] %vm2184, %v2119
      %2268 = vst.msk [vmem:[%s372 + $0x58] sm:$0xff] %vm2184, %v2122
      %2269 = vst.msk [vmem:[%s372 + $0x60] sm:$0xff] %vm2184, %v2125
      %2270 = vst.msk [vmem:[%s372 + $0x68] sm:$0xff] %vm2184, %v2128
      %2271 = vst.msk [vmem:[%s372 + $0x70] sm:$0xff] %vm2184, %v2131
      %2272 = vst.msk [vmem:[%s372 + $0x78] sm:$0xff] %vm2184, %v2134
      %2273 = vst.msk [vmem:[%s372 + $0x80] sm:$0xff] %vm2184, %v2137
      %2274 = vst.msk [vmem:[%s372 + $0x88] sm:$0xff] %vm2184, %v2140
      %2275 = vst.msk [vmem:[%s372 + $0x90] sm:$0xff] %vm2184, %v2143
      %2276 = vst.msk [vmem:[%s372 + $0x98] sm:$0xff] %vm2184, %v2146
      %2277 = vst.msk [vmem:[%s372 + $0xa0] sm:$0xff] %vm2184, %v2149
      %2278 = vst.msk [vmem:[%s372 + $0xa8] sm:$0xff] %vm2184, %v2152
      %2279 = vst.msk [vmem:[%s372 + $0xb0] sm:$0xff] %vm2184, %v2155
      %2280 = vst.msk [vmem:[%s372 + $0xb8] sm:$0xff] %vm2184, %v2158
      %2281 = vst.msk [vmem:[%s372 + $0xc0] sm:$0xff] %vm2184, %v2161
      %2282 = vst.msk [vmem:[%s372 + $0xc8] sm:$0xff] %vm2184, %v2164
      %2283 = vst.msk [vmem:[%s372 + $0xd0] sm:$0xff] %vm2184, %v2167
      %2284 = vst.msk [vmem:[%s372 + $0xd8] sm:$0xff] %vm2184, %v2170
      %2285 = vst.msk [vmem:[%s372 + $0xe0] sm:$0xff] %vm2184, %v2173
      %2286 = vst.msk [vmem:[%s372 + $0xe8] sm:$0xff] %vm2184, %v2176
      %2287 = vst.msk [vmem:[%s372 + $0xf0] sm:$0xff] %vm2184, %v2179
      %2288 = vst.msk [vmem:[%s372 + $0xf8] sm:$0xff] %vm2184, %v2182
      %p2289 = scmp.lt.s32.totalorder %s22, 1
      %s2290 = scalar_select %p2289, %s22, 1
      %s2291 = smul.addr %s2290, 40
      %s2292 = smul.addr %s2291, 8
      %s2293 = scalar_lea.vmem %s9, %s2292
      %p2294 = scmp.lt.s32.totalorder %s22, 1
      %s2295 = scalar_select %p2294, %s22, 1
      %s2296 = smul.addr %s2295, 32
      %s2297 = smul.addr %s2296, 8
      %s2298 = scalar_lea.vmem %s10, %s2297
      // Predicated region
      $region57: #{scconv_forward.3} parent=55 // pred_check
        %p2299 = pneg %p234
      $region58: #{scconv_forward.3} parent=55 // pred_check_branch
        %2301 = sbr.rel (%p2299) target = $region60
      $region59: #{scconv_forward.3} parent=55 // pred_region
        _
      $region60: #{scconv_forward.3} parent=55 // pred_fallthru
        _
      // Predicated region
      $region61: #{scconv_forward.3} parent=55 // pred_check
        %p2302 = pneg %p260
      $region62: #{scconv_forward.3} parent=55 // pred_check_branch
        %2304 = sbr.rel (%p2302) target = $region64
      $region63: #{scconv_forward.3} parent=55 // pred_region
        _
      $region64: #{scconv_forward.3} parent=55 // pred_fallthru
        _
    $region56: #{scconv_forward.3} parent=5 // pred_fallthru
      _
    %p2305 = scmp.le.s32.totalorder 2, %s17
    // Predicated region
    $region65: #{scconv_forward.3} parent=5 // pred_check
      %p2306 = pneg %p2305
    $region66: #{scconv_forward.3} parent=5 // pred_check_branch
      %2308 = sbr.rel (%p2306) target = $region68
    $region67: #{scconv_forward.3} parent=5 // pred_region
      %s2309 = ssub.s32 %s17, 2
      // Predicated region
      $region69: #{scconv_forward.3} parent=67 // pred_check
        %p2310 = pneg %p240
      $region70: #{scconv_forward.3} parent=67 // pred_check_branch
        %2312 = sbr.rel (%p2310) target = $region72
      $region71: #{scconv_forward.3} parent=67 // pred_region
        %p2313 = scmp.lt.s32.totalorder %s23, 1
        %s2314 = scalar_select %p2313, %s23, 1
        %s2315 = smul.addr %s2314, 40
        %s2316 = smul.addr %s2315, 8
        %s2317 = scalar_lea.vmem %s9, %s2316
      $region72: #{scconv_forward.3} parent=67 // pred_fallthru
        _
      // Predicated region
      $region73: #{scconv_forward.3} parent=67 // pred_check
        %p2318 = pneg %p266
      $region74: #{scconv_forward.3} parent=67 // pred_check_branch
        %2320 = sbr.rel (%p2318) target = $region76
      $region75: #{scconv_forward.3} parent=67 // pred_region
        %p2321 = scmp.lt.s32.totalorder %s23, 1
        %s2322 = scalar_select %p2321, %s23, 1
        %s2323 = smul.addr %s2322, 32
        %s2324 = smul.addr %s2323, 8
        %s2325 = scalar_lea.vmem %s10, %s2324
      $region76: #{scconv_forward.3} parent=67 // pred_fallthru
        _
    $region68: #{scconv_forward.3} parent=5 // pred_fallthru
      _
  $region6: #{scconv_forward.3} parent=0 // loop_footer
    %s21 = sadd.s32 1, %s17
  $region7: #{scconv_forward.3} parent=0 // loop_footer_branch
    %16 = sbr.rel target = $region3
  $region8: #{scconv_forward.3} parent=0 // loop_exit
    _

// kernel: scconv_forward.4
$region0: #{scconv_forward.4}
  #allocation0 [shape = 'u32[]', space=smem, size = 0x4, offset = 0x4, fixed_abs, tag = 'smem constant byte address 0x4 - core index']
  #allocation1 [shape = 'u32[72,128]{1,0:T(1,128)}', space=vmem, size = 0x9000, scoped, tag = 'internal scratch']
  %s0 = inlined_call_operand.vmem [shape: f32[2,320,4], index: 0, kind: input, shape index: {}]
  %s1 = inlined_call_operand.vmem [shape: f32[9,4,16], index: 1, kind: input, shape index: {}]
  %s2 = inlined_call_operand.vmem [shape: f32[1,16], index: 2, kind: input, shape index: {}]
  %s3 = inlined_call_operand.vmem [shape: f32[2,256,16], index: 3, kind: output, shape index: {}]
  %s4 = sld [smem:[#allocation0]]
  $region45: #{scconv_forward.4} parent=0
    _
  %s6 = ssub.s32 1, %s4
  %s7 = scalar_select 0, %s6, %s4
  loop: start=0, step=1, limit=6
  $region2: #{scconv_forward.4} parent=0 // loop_pre_header
    _
  $region3: #{scconv_forward.4} parent=0 // loop_header
    %s9 = sphi 0, %s13
    %p10 = scmp.ge.s32.totalorder %s9, 6
    %s16 = sphi 0, %s28
    %s17 = sphi 0, %s24
    %s18 = sphi 0, %s16
    %s19 = sphi 0, %s17
    %s20 = sphi 0, %s18
    %s21 = sphi 0, %s19
    %s31 = sphi 0, %s33
    %s34 = sphi 0, %s31
    %s35 = sphi 0, %s34
    %s51 = sphi 0, %s35
    %s55 = sphi 0, %s55
    %s57 = sphi 0, %s55
    %s58 = sphi 0, %s57
    %s72 = sphi 0, %s58
    %s76 = sphi 0, %s76
    %s78 = sphi 0, %s76
    %s79 = sphi 0, %s78
    %s93 = sphi 0, %s79
    %s101 = sphi 0, %s103
    %s104 = sphi 0, %s101
    %s105 = sphi 0, %s104
    %s121 = sphi 0, %s105
  $region4: #{scconv_forward.4} parent=0 // loop_header_branch
    %12 = sbr.rel (%p10) target = $region8
  $region5: #{scconv_forward.4} parent=0 // loop_body
    %s14 = ssub.s32 %s9, 1
    %s15 = ssub.s32 %s9, 2
    %s22 = sadd.s32 1, %s17
    %p23 = scmp.ge.s32.totalorder %s22, 2
    %s24 = scalar_select %p23, 0, %s22
    %s25 = sadd.s32 1, %s16
    %s26 = scalar_select %p23, %s25, %s16
    %p27 = scmp.ge.s32.totalorder %s26, 2
    %s28 = scalar_select %p27, 0, %s26
    %s29 = ssub.s32 %s16, %s28
    %p30 = scmp.eq.s32.totalorder %s29, 0
    %s32 = sadd.s32 %s31, 1
    %s33 = scalar_select %p30, %s31, %s32
    %p36 = pneg %p30
    %p37 = scmp.eq.s32.totalorder %s9, 3
    %p38 = por %p36, %p37
    %p39 = scmp.ne.s32.totalorder %s31, %s34
    %p40 = scmp.eq.s32.totalorder %s9, 0
    %p41 = por %p39, %p40
    %p42 = scmp.ne.s32.totalorder %s31, %s34
    %p43 = scmp.eq.s32.totalorder %s14, 3
    %p44 = por %p42, %p43
    %p45 = scmp.ne.s32.totalorder %s34, %s35
    %p46 = scmp.eq.s32.totalorder %s14, 0
    %p47 = por %p45, %p46
    %p48 = scmp.ne.s32.totalorder %s34, %s35
    %p49 = scmp.eq.s32.totalorder %s15, 3
    %p50 = por %p48, %p49
    %p52 = scmp.ne.s32.totalorder %s35, %s51
    %p53 = scmp.eq.s32.totalorder %s15, 0
    %p54 = por %p52, %p53
    %s56 = sadd.s32 %s55, 1
    %p59 = scmp.eq.s32.totalorder %s9, 3
    %p60 = scmp.ne.s32.totalorder %s55, %s57
    %p61 = scmp.eq.s32.totalorder %s9, 0
    %p62 = por %p60, %p61
    %p63 = scmp.ne.s32.totalorder %s55, %s57
    %p64 = scmp.eq.s32.totalorder %s14, 3
    %p65 = por %p63, %p64
    %p66 = scmp.ne.s32.totalorder %s57, %s58
    %p67 = scmp.eq.s32.totalorder %s14, 0
    %p68 = por %p66, %p67
    %p69 = scmp.ne.s32.totalorder %s57, %s58
    %p70 = scmp.eq.s32.totalorder %s15, 3
    %p71 = por %p69, %p70
    %p73 = scmp.ne.s32.totalorder %s58, %s72
    %p74 = scmp.eq.s32.totalorder %s15, 0
    %p75 = por %p73, %p74
    %s77 = sadd.s32 %s76, 1
    %p80 = scmp.eq.s32.totalorder %s9, 3
    %p81 = scmp.ne.s32.totalorder %s76, %s78
    %p82 = scmp.eq.s32.totalorder %s9, 0
    %p83 = por %p81, %p82
    %p84 = scmp.ne.s32.totalorder %s76, %s78
    %p85 = scmp.eq.s32.totalorder %s14, 3
    %p86 = por %p84, %p85
    %p87 = scmp.ne.s32.totalorder %s78, %s79
    %p88 = scmp.eq.s32.totalorder %s14, 0
    %p89 = por %p87, %p88
    %p90 = scmp.ne.s32.totalorder %s78, %s79
    %p91 = scmp.eq.s32.totalorder %s15, 3
    %p92 = por %p90, %p91
    %p94 = scmp.ne.s32.totalorder %s79, %s93
    %p95 = scmp.eq.s32.totalorder %s15, 0
    %p96 = por %p94, %p95
    %s97 = ssub.s32 %s16, %s28
    %s98 = ssub.s32 %s17, %s24
    %s99 = sor.u32 %s97, %s98
    %p100 = scmp.eq.s32.totalorder %s99, 0
    %s102 = sadd.s32 %s101, 1
    %s103 = scalar_select %p100, %s101, %s102
    %p106 = pneg %p100
    %p107 = scmp.eq.s32.totalorder %s9, 3
    %p108 = por %p106, %p107
    %p109 = scmp.ne.s32.totalorder %s101, %s104
    %p110 = scmp.eq.s32.totalorder %s9, 0
    %p111 = por %p109, %p110
    %p112 = scmp.ne.s32.totalorder %s101, %s104
    %p113 = scmp.eq.s32.totalorder %s14, 3
    %p114 = por %p112, %p113
    %p115 = scmp.ne.s32.totalorder %s104, %s105
    %p116 = scmp.eq.s32.totalorder %s14, 0
    %p117 = por %p115, %p116
    %p118 = scmp.ne.s32.totalorder %s104, %s105
    %p119 = scmp.eq.s32.totalorder %s15, 3
    %p120 = por %p118, %p119
    %p122 = scmp.ne.s32.totalorder %s105, %s121
    %p123 = scmp.eq.s32.totalorder %s15, 0
    %p124 = por %p122, %p123
    %p125 = scmp.le.s32.totalorder 1, %s9
    %p126 = scmp.lt.s32.totalorder %s9, 5
    %p127 = pnand %p125, %p126
    %p128 = pneg %p127
    // Predicated region
    $region9: #{scconv_forward.4} parent=5 // pred_check
      _
    $region10: #{scconv_forward.4} parent=5 // pred_check_branch
      %130 = sbr.rel (%p127) target = $region12
    $region11: #{scconv_forward.4} parent=5 // pred_region
      %s131 = ssub.s32 %s9, 1
      // Predicated region
      $region13: #{scconv_forward.4} parent=11 // pred_check
        %p132 = pneg %p68
      $region14: #{scconv_forward.4} parent=11 // pred_check_branch
        %134 = sbr.rel (%p132) target = $region16
      $region15: #{scconv_forward.4} parent=11 // pred_region
        _
      $region16: #{scconv_forward.4} parent=11 // pred_fallthru
        _
      // Predicated region
      $region17: #{scconv_forward.4} parent=11 // pred_check
        %p135 = pneg %p89
      $region18: #{scconv_forward.4} parent=11 // pred_check_branch
        %137 = sbr.rel (%p135) target = $region20
      $region19: #{scconv_forward.4} parent=11 // pred_region
        _
      $region20: #{scconv_forward.4} parent=11 // pred_fallthru
        _
    $region12: #{scconv_forward.4} parent=5 // pred_fallthru
      _
    %p138 = scmp.lt.s32.totalorder %s9, 4
    // Predicated region
    $region21: #{scconv_forward.4} parent=5 // pred_check
      %p139 = pneg %p138
    $region22: #{scconv_forward.4} parent=5 // pred_check_branch
      %141 = sbr.rel (%p139) target = $region24
    $region23: #{scconv_forward.4} parent=5 // pred_region
      // Predicated region
      $region25: #{scconv_forward.4} parent=23 // pred_check
        %p142 = pneg %p41
      $region26: #{scconv_forward.4} parent=23 // pred_check_branch
        %144 = sbr.rel (%p142) target = $region28
      $region27: #{scconv_forward.4} parent=23 // pred_region
        %p145 = scmp.lt.s32.totalorder %s16, 1
        %s146 = scalar_select %p145, %s16, 1
        %s147 = smul.addr %s146, 40
        %s148 = smul.addr %s147, 8
        %s149 = scalar_lea.vmem %s0, %s148
      $region28: #{scconv_forward.4} parent=23 // pred_fallthru
        _
    $region24: #{scconv_forward.4} parent=5 // pred_fallthru
      _
    %p150 = scmp.le.s32.totalorder 1, %s9
    %p151 = scmp.lt.s32.totalorder %s9, 5
    %p152 = pnand %p150, %p151
    %p153 = pneg %p152
    // Predicated region
    $region29: #{scconv_forward.4} parent=5 // pred_check
      _
    $region30: #{scconv_forward.4} parent=5 // pred_check_branch
      %155 = sbr.rel (%p152) target = $region32
    $region31: #{scconv_forward.4} parent=5 // pred_region
      %s156 = ssub.s32 %s9, 1
      %p157 = scmp.lt.s32.totalorder %s18, 1
      %s158 = scalar_select %p157, %s18, 1
      %s159 = smul.addr %s158, 40
      %s160 = smul.addr %s159, 8
      %s161 = scalar_lea.vmem %s0, %s160
      %p162 = pneg %p47
      %p163 = pneg %p44
      %p164 = pneg %p68
      %p165 = pneg %p65
      %p166 = pneg %p89
      %p167 = pneg %p86
      %p168 = pneg %p117
      %p169 = pneg %p114
      %s170 = smul.u32 16, %s19
      %p171 = scmp.lt.s32.totalorder %s18, 1
      %s172 = scalar_select %p171, %s18, 1
      %p173 = scmp.lt.s32.totalorder %s170, 31
      %s174 = scalar_select %p173, %s170, 31
      %s175 = smul.addr %s172, 32
      %s176 = sadd.s32 %s174, %s175
      %s177 = smul.addr %s176, 8
      %s178 = scalar_lea.vmem %s3, %s177
      %p179 = scmp.lt.s32.totalorder %s18, 1
      %s180 = scalar_select %p179, %s18, 1
      %s181 = smul.addr %s180, 40
      %s182 = smul.addr %s181, 8
      %s183 = scalar_lea.vmem %s0, %s182
      %s184 = smul.u32 16, %s19
      %p185 = scmp.lt.s32.totalorder %s18, 1
      %s186 = scalar_select %p185, %s18, 1
      %p187 = scmp.lt.s32.totalorder %s184, 31
      %s188 = scalar_select %p187, %s184, 31
      %s189 = smul.addr %s186, 32
      %s190 = sadd.s32 %s188, %s189
      %s191 = smul.addr %s190, 8
      %s192 = scalar_lea.vmem %s3, %s191
      %s193 = smul.u32 16, %s19
      %s194 = smul.u32 %s19, 8
      %v195 = vlaneseq
      %v196 = vshrl.u32 %v195, 7
      %v197 = vadd.s32 %v196, 8
      %v198 = vadd.s32 %v196, 16
      %v199 = vadd.s32 %v196, 24
      %v200 = vadd.s32 %v196, 32
      %v201 = vadd.s32 %v196, 40
      %v202 = vadd.s32 %v196, 48
      %v203 = vadd.s32 %v196, 56
      %v204 = vadd.s32 %v196, 64
      %v205 = vadd.s32 %v196, 72
      %v206 = vadd.s32 %v196, 80
      %v207 = vadd.s32 %v196, 88
      %v208 = vadd.s32 %v196, 96
      %v209 = vadd.s32 %v196, 104
      %v210 = vadd.s32 %v196, 112
      %v211 = vadd.s32 %v196, 120
      %vm212 = vcmp.lt.s32.totalorder %v196, 0
      %v213 = vsub.s32 0, %v196
      %v214 = vsel %vm212, %v213, %v196
      %v215 = vshrl.u32 %v214, 4
      %v216 = vand.u32 %v214, 15
      %v217 = vsub.s32 0, %v216
      %v218 = vsel %vm212, %v217, %v216
      %vm219 = vcmp.lt.s32.totalorder %v197, 0
      %v220 = vsub.s32 0, %v197
      %v221 = vsel %vm219, %v220, %v197
      %v222 = vshrl.u32 %v221, 4
      %v223 = vand.u32 %v221, 15
      %v224 = vsub.s32 0, %v223
      %v225 = vsel %vm219, %v224, %v223
      %vm226 = vcmp.lt.s32.totalorder %v198, 0
      %v227 = vsub.s32 0, %v198
      %v228 = vsel %vm226, %v227, %v198
      %v229 = vshrl.u32 %v228, 4
      %v230 = vand.u32 %v228, 15
      %v231 = vsub.s32 0, %v230
      %v232 = vsel %vm226, %v231, %v230
      %vm233 = vcmp.lt.s32.totalorder %v199, 0
      %v234 = vsub.s32 0, %v199
      %v235 = vsel %vm233, %v234, %v199
      %v236 = vshrl.u32 %v235, 4
      %v237 = vand.u32 %v235, 15
      %v238 = vsub.s32 0, %v237
      %v239 = vsel %vm233, %v238, %v237
      %vm240 = vcmp.lt.s32.totalorder %v200, 0
      %v241 = vsub.s32 0, %v200
      %v242 = vsel %vm240, %v241, %v200
      %v243 = vshrl.u32 %v242, 4
      %v244 = vand.u32 %v242, 15
      %v245 = vsub.s32 0, %v244
      %v246 = vsel %vm240, %v245, %v244
      %vm247 = vcmp.lt.s32.totalorder %v201, 0
      %v248 = vsub.s32 0, %v201
      %v249 = vsel %vm247, %v248, %v201
      %v250 = vshrl.u32 %v249, 4
      %v251 = vand.u32 %v249, 15
      %v252 = vsub.s32 0, %v251
      %v253 = vsel %vm247, %v252, %v251
      %vm254 = vcmp.lt.s32.totalorder %v202, 0
      %v255 = vsub.s32 0, %v202
      %v256 = vsel %vm254, %v255, %v202
      %v257 = vshrl.u32 %v256, 4
      %v258 = vand.u32 %v256, 15
      %v259 = vsub.s32 0, %v258
      %v260 = vsel %vm254, %v259, %v258
      %vm261 = vcmp.lt.s32.totalorder %v203, 0
      %v262 = vsub.s32 0, %v203
      %v263 = vsel %vm261, %v262, %v203
      %v264 = vshrl.u32 %v263, 4
      %v265 = vand.u32 %v263, 15
      %v266 = vsub.s32 0, %v265
      %v267 = vsel %vm261, %v266, %v265
      %vm268 = vcmp.lt.s32.totalorder %v204, 0
      %v269 = vsub.s32 0, %v204
      %v270 = vsel %vm268, %v269, %v204
      %v271 = vshrl.u32 %v270, 4
      %v272 = vand.u32 %v270, 15
      %v273 = vsub.s32 0, %v272
      %v274 = vsel %vm268, %v273, %v272
      %vm275 = vcmp.lt.s32.totalorder %v205, 0
      %v276 = vsub.s32 0, %v205
      %v277 = vsel %vm275, %v276, %v205
      %v278 = vshrl.u32 %v277, 4
      %v279 = vand.u32 %v277, 15
      %v280 = vsub.s32 0, %v279
      %v281 = vsel %vm275, %v280, %v279
      %vm282 = vcmp.lt.s32.totalorder %v206, 0
      %v283 = vsub.s32 0, %v206
      %v284 = vsel %vm282, %v283, %v206
      %v285 = vshrl.u32 %v284, 4
      %v286 = vand.u32 %v284, 15
      %v287 = vsub.s32 0, %v286
      %v288 = vsel %vm282, %v287, %v286
      %vm289 = vcmp.lt.s32.totalorder %v207, 0
      %v290 = vsub.s32 0, %v207
      %v291 = vsel %vm289, %v290, %v207
      %v292 = vshrl.u32 %v291, 4
      %v293 = vand.u32 %v291, 15
      %v294 = vsub.s32 0, %v293
      %v295 = vsel %vm289, %v294, %v293
      %vm296 = vcmp.lt.s32.totalorder %v208, 0
      %v297 = vsub.s32 0, %v208
      %v298 = vsel %vm296, %v297, %v208
      %v299 = vshrl.u32 %v298, 4
      %v300 = vand.u32 %v298, 15
      %v301 = vsub.s32 0, %v300
      %v302 = vsel %vm296, %v301, %v300
      %vm303 = vcmp.lt.s32.totalorder %v209, 0
      %v304 = vsub.s32 0, %v209
      %v305 = vsel %vm303, %v304, %v209
      %v306 = vshrl.u32 %v305, 4
      %v307 = vand.u32 %v305, 15
      %v308 = vsub.s32 0, %v307
      %v309 = vsel %vm303, %v308, %v307
      %vm310 = vcmp.lt.s32.totalorder %v210, 0
      %v311 = vsub.s32 0, %v210
      %v312 = vsel %vm310, %v311, %v210
      %v313 = vshrl.u32 %v312, 4
      %v314 = vand.u32 %v312, 15
      %v315 = vsub.s32 0, %v314
      %v316 = vsel %vm310, %v315, %v314
      %vm317 = vcmp.lt.s32.totalorder %v211, 0
      %v318 = vsub.s32 0, %v211
      %v319 = vsel %vm317, %v318, %v211
      %v320 = vshrl.u32 %v319, 4
      %v321 = vand.u32 %v319, 15
      %v322 = vsub.s32 0, %v321
      %v323 = vsel %vm317, %v322, %v321
      %vm324 = vcmp.ne.s32.totalorder %v218, 0
      %vm325 = vcmp.ne.s32.totalorder %v225, 0
      %vm326 = vcmp.ne.s32.totalorder %v232, 0
      %vm327 = vcmp.ne.s32.totalorder %v239, 0
      %vm328 = vcmp.ne.s32.totalorder %v246, 0
      %vm329 = vcmp.ne.s32.totalorder %v253, 0
      %vm330 = vcmp.ne.s32.totalorder %v260, 0
      %vm331 = vcmp.ne.s32.totalorder %v267, 0
      %vm332 = vcmp.ne.s32.totalorder %v274, 0
      %vm333 = vcmp.ne.s32.totalorder %v281, 0
      %vm334 = vcmp.ne.s32.totalorder %v288, 0
      %vm335 = vcmp.ne.s32.totalorder %v295, 0
      %vm336 = vcmp.ne.s32.totalorder %v302, 0
      %vm337 = vcmp.ne.s32.totalorder %v309, 0
      %vm338 = vcmp.ne.s32.totalorder %v316, 0
      %vm339 = vcmp.ne.s32.totalorder %v323, 0
      %vm340 = vcmp.lt.s32.totalorder %v218, 0
      %vm341 = vcmp.lt.s32.totalorder %v225, 0
      %vm342 = vcmp.lt.s32.totalorder %v232, 0
      %vm343 = vcmp.lt.s32.totalorder %v239, 0
      %vm344 = vcmp.lt.s32.totalorder %v246, 0
      %vm345 = vcmp.lt.s32.totalorder %v253, 0
      %vm346 = vcmp.lt.s32.totalorder %v260, 0
      %vm347 = vcmp.lt.s32.totalorder %v267, 0
      %vm348 = vcmp.lt.s32.totalorder %v274, 0
      %vm349 = vcmp.lt.s32.totalorder %v281, 0
      %vm350 = vcmp.lt.s32.totalorder %v288, 0
      %vm351 = vcmp.lt.s32.totalorder %v295, 0
      %vm352 = vcmp.lt.s32.totalorder %v302, 0
      %vm353 = vcmp.lt.s32.totalorder %v309, 0
      %vm354 = vcmp.lt.s32.totalorder %v316, 0
      %vm355 = vcmp.lt.s32.totalorder %v323, 0
      %vm356 = vmand %vm340, %vm324
      %vm357 = vmand %vm341, %vm325
      %vm358 = vmand %vm342, %vm326
      %vm359 = vmand %vm343, %vm327
      %vm360 = vmand %vm344, %vm328
      %vm361 = vmand %vm345, %vm329
      %vm362 = vmand %vm346, %vm330
      %vm363 = vmand %vm347, %vm331
      %vm364 = vmand %vm348, %vm332
      %vm365 = vmand %vm349, %vm333
      %vm366 = vmand %vm350, %vm334
      %vm367 = vmand %vm351, %vm335
      %vm368 = vmand %vm352, %vm336
      %vm369 = vmand %vm353, %vm337
      %vm370 = vmand %vm354, %vm338
      %vm371 = vmand %vm355, %vm339
      %v372 = vadd.s32 %v218, 16
      %v373 = vadd.s32 %v225, 16
      %v374 = vadd.s32 %v232, 16
      %v375 = vadd.s32 %v239, 16
      %v376 = vadd.s32 %v246, 16
      %v377 = vadd.s32 %v253, 16
      %v378 = vadd.s32 %v260, 16
      %v379 = vadd.s32 %v267, 16
      %v380 = vadd.s32 %v274, 16
      %v381 = vadd.s32 %v281, 16
      %v382 = vadd.s32 %v288, 16
      %v383 = vadd.s32 %v295, 16
      %v384 = vadd.s32 %v302, 16
      %v385 = vadd.s32 %v309, 16
      %v386 = vadd.s32 %v316, 16
      %v387 = vadd.s32 %v323, 16
      %v388 = vsel %vm356, %v372, %v218
      %v389 = vsel %vm357, %v373, %v225
      %v390 = vsel %vm358, %v374, %v232
      %v391 = vsel %vm359, %v375, %v239
      %v392 = vsel %vm360, %v376, %v246
      %v393 = vsel %vm361, %v377, %v253
      %v394 = vsel %vm362, %v378, %v260
      %v395 = vsel %vm363, %v379, %v267
      %v396 = vsel %vm364, %v380, %v274
      %v397 = vsel %vm365, %v381, %v281
      %v398 = vsel %vm366, %v382, %v288
      %v399 = vsel %vm367, %v383, %v295
      %v400 = vsel %vm368, %v384, %v302
      %v401 = vsel %vm369, %v385, %v309
      %v402 = vsel %vm370, %v386, %v316
      %v403 = vsel %vm371, %v387, %v323
      %v404 = vld [vmem:[%s2] sm:$0x1]
      %v406 = vperm.slane %v404, 0
      %v408 = vadd.f32 %v406, 0.0
      %s409 = sadd.s32 %s194, 1
      %s410 = smul.u32 %s409, 16
      %s411 = sadd.s32 %s410, 4294967295
      %s412 = scalar_lea.vmem %s183, %s411
      %v413 = vld [vmem:[%s412] sm:$0xff]
      %v414 = vld [vmem:[%s412 + $0x8] sm:$0xff]
      %v415 = vld [vmem:[%s412 + $0x10] sm:$0xff]
      %v416 = vld [vmem:[%s412 + $0x18] sm:$0xff]
      %v417 = vld [vmem:[%s412 + $0x20] sm:$0xff]
      %v418 = vld [vmem:[%s412 + $0x28] sm:$0xff]
      %v419 = vld [vmem:[%s412 + $0x30] sm:$0xff]
      %v420 = vld [vmem:[%s412 + $0x38] sm:$0xff]
      %v421 = vld [vmem:[%s412 + $0x40] sm:$0xff]
      %v422 = vld [vmem:[%s412 + $0x48] sm:$0xff]
      %v423 = vld [vmem:[%s412 + $0x50] sm:$0xff]
      %v424 = vld [vmem:[%s412 + $0x58] sm:$0xff]
      %v425 = vld [vmem:[%s412 + $0x60] sm:$0xff]
      %v426 = vld [vmem:[%s412 + $0x68] sm:$0xff]
      %v427 = vld [vmem:[%s412 + $0x70] sm:$0xff]
      %v428 = vld [vmem:[%s412 + $0x78] sm:$0xff]
      %vm429 = vcmp.ge.s32.totalorder %v388, 1
      %vm430 = vcmp.ge.s32.totalorder %v389, 1
      %vm431 = vcmp.ge.s32.totalorder %v390, 1
      %vm432 = vcmp.ge.s32.totalorder %v391, 1
      %vm433 = vcmp.ge.s32.totalorder %v392, 1
      %vm434 = vcmp.ge.s32.totalorder %v393, 1
      %vm435 = vcmp.ge.s32.totalorder %v394, 1
      %vm436 = vcmp.ge.s32.totalorder %v395, 1
      %vm437 = vcmp.ge.s32.totalorder %v396, 1
      %vm438 = vcmp.ge.s32.totalorder %v397, 1
      %vm439 = vcmp.ge.s32.totalorder %v398, 1
      %vm440 = vcmp.ge.s32.totalorder %v399, 1
      %vm441 = vcmp.ge.s32.totalorder %v400, 1
      %vm442 = vcmp.ge.s32.totalorder %v401, 1
      %vm443 = vcmp.ge.s32.totalorder %v402, 1
      %vm444 = vcmp.ge.s32.totalorder %v403, 1
      %vm445 = vcmp.lt.s32.totalorder %v388, 17
      %vm446 = vcmp.lt.s32.totalorder %v389, 17
      %vm447 = vcmp.lt.s32.totalorder %v390, 17
      %vm448 = vcmp.lt.s32.totalorder %v391, 17
      %vm449 = vcmp.lt.s32.totalorder %v392, 17
      %vm450 = vcmp.lt.s32.totalorder %v393, 17
      %vm451 = vcmp.lt.s32.totalorder %v394, 17
      %vm452 = vcmp.lt.s32.totalorder %v395, 17
      %vm453 = vcmp.lt.s32.totalorder %v396, 17
      %vm454 = vcmp.lt.s32.totalorder %v397, 17
      %vm455 = vcmp.lt.s32.totalorder %v398, 17
      %vm456 = vcmp.lt.s32.totalorder %v399, 17
      %vm457 = vcmp.lt.s32.totalorder %v400, 17
      %vm458 = vcmp.lt.s32.totalorder %v401, 17
      %vm459 = vcmp.lt.s32.totalorder %v402, 17
      %vm460 = vcmp.lt.s32.totalorder %v403, 17
      %vm461 = vmand %vm429, %vm445
      %vm462 = vmand %vm430, %vm446
      %vm463 = vmand %vm431, %vm447
      %vm464 = vmand %vm432, %vm448
      %vm465 = vmand %vm433, %vm449
      %vm466 = vmand %vm434, %vm450
      %vm467 = vmand %vm435, %vm451
      %vm468 = vmand %vm436, %vm452
      %vm469 = vmand %vm437, %vm453
      %vm470 = vmand %vm438, %vm454
      %vm471 = vmand %vm439, %vm455
      %vm472 = vmand %vm440, %vm456
      %vm473 = vmand %vm441, %vm457
      %vm474 = vmand %vm442, %vm458
      %vm475 = vmand %vm443, %vm459
      %vm476 = vmand %vm444, %vm460
      %v477 = vsel %vm461, 1, 0
      %v478 = vsel %vm462, 1, 0
      %v479 = vsel %vm463, 1, 0
      %v480 = vsel %vm464, 1, 0
      %v481 = vsel %vm465, 1, 0
      %v482 = vsel %vm466, 1, 0
      %v483 = vsel %vm467, 1, 0
      %v484 = vsel %vm468, 1, 0
      %v485 = vsel %vm469, 1, 0
      %v486 = vsel %vm470, 1, 0
      %v487 = vsel %vm471, 1, 0
      %v488 = vsel %vm472, 1, 0
      %v489 = vsel %vm473, 1, 0
      %v490 = vsel %vm474, 1, 0
      %v491 = vsel %vm475, 1, 0
      %v492 = vsel %vm476, 1, 0
      %vm493 = vcmp.eq.s32.totalorder %v477, 1
      %vm494 = vcmp.eq.s32.totalorder %v478, 1
      %vm495 = vcmp.eq.s32.totalorder %v479, 1
      %vm496 = vcmp.eq.s32.totalorder %v480, 1
      %vm497 = vcmp.eq.s32.totalorder %v481, 1
      %vm498 = vcmp.eq.s32.totalorder %v482, 1
      %vm499 = vcmp.eq.s32.totalorder %v483, 1
      %vm500 = vcmp.eq.s32.totalorder %v484, 1
      %vm501 = vcmp.eq.s32.totalorder %v485, 1
      %vm502 = vcmp.eq.s32.totalorder %v486, 1
      %vm503 = vcmp.eq.s32.totalorder %v487, 1
      %vm504 = vcmp.eq.s32.totalorder %v488, 1
      %vm505 = vcmp.eq.s32.totalorder %v489, 1
      %vm506 = vcmp.eq.s32.totalorder %v490, 1
      %vm507 = vcmp.eq.s32.totalorder %v491, 1
      %vm508 = vcmp.eq.s32.totalorder %v492, 1
      %v509 = vsel %vm493, %v413, 0.0
      %v510 = vsel %vm494, %v414, 0.0
      %v511 = vsel %vm495, %v415, 0.0
      %v512 = vsel %vm496, %v416, 0.0
      %v513 = vsel %vm497, %v417, 0.0
      %v514 = vsel %vm498, %v418, 0.0
      %v515 = vsel %vm499, %v419, 0.0
      %v516 = vsel %vm500, %v420, 0.0
      %v517 = vsel %vm501, %v421, 0.0
      %v518 = vsel %vm502, %v422, 0.0
      %v519 = vsel %vm503, %v423, 0.0
      %v520 = vsel %vm504, %v424, 0.0
      %v521 = vsel %vm505, %v425, 0.0
      %v522 = vsel %vm506, %v426, 0.0
      %v523 = vsel %vm507, %v427, 0.0
      %v524 = vsel %vm508, %v428, 0.0
      %v525 = vld [vmem:[%s1] sm:$0xf]
      %vm526 = vcmask 31744
      %v528 = vsel %vm526, %v509, 0
      %v531 = vsel %vm526, %v510, 0
      %v534 = vsel %vm526, %v511, 0
      %v537 = vsel %vm526, %v512, 0
      %v540 = vsel %vm526, %v513, 0
      %v543 = vsel %vm526, %v514, 0
      %v546 = vsel %vm526, %v515, 0
      %v549 = vsel %vm526, %v516, 0
      %v552 = vsel %vm526, %v517, 0
      %v555 = vsel %vm526, %v518, 0
      %v558 = vsel %vm526, %v519, 0
      %v561 = vsel %vm526, %v520, 0
      %v564 = vsel %vm526, %v521, 0
      %v567 = vsel %vm526, %v522, 0
      %v570 = vsel %vm526, %v523, 0
      %v573 = vsel %vm526, %v524, 0
      %vm575 = vcmask 1043456
      %v577 = vsel %vm575, %v525, 0
      %579 = vmatpush.msra.mxu0 0.0
      %580 = vmatpush.msra.mxu0 0.0
      %581 = vmatpush.msra.mxu0 0.0
      %582 = vmatpush.msra.mxu0 0.0
      %583 = vmatpush.msra.mxu0 0.0
      %584 = vmatpush.msra.mxu0 0.0
      %585 = vmatpush.msra.mxu0 0.0
      %586 = vmatpush.msra.mxu0 0.0
      %587 = vmatpush.msra.mxu0 0.0
      %588 = vmatpush.msra.mxu0 0.0
      %589 = vmatpush.msra.mxu0 0.0
      %590 = vmatpush.msra.mxu0 0.0
      %591 = vmatpush.msra.mxu0 0.0
      %592 = vmatpush.msra.mxu0 0.0
      %593 = vmatpush.msra.mxu0 0.0
      %594 = vmatpush.msra.mxu0 %v577
      %595 = vmatmul.f32.gmra.mxu0 %v528
      %v596 = vpop.f32.mrf.mxu0
      %v597 = vadd.f32 0.0, %v596
      %598 = vmatmul.f32.gmra.mxu0 %v531
      %v599 = vpop.f32.mrf.mxu0
      %v600 = vadd.f32 0.0, %v599
      %601 = vmatmul.f32.gmra.mxu0 %v534
      %v602 = vpop.f32.mrf.mxu0
      %v603 = vadd.f32 0.0, %v602
      %604 = vmatmul.f32.gmra.mxu0 %v537
      %v605 = vpop.f32.mrf.mxu0
      %v606 = vadd.f32 0.0, %v605
      %607 = vmatmul.f32.gmra.mxu0 %v540
      %v608 = vpop.f32.mrf.mxu0
      %v609 = vadd.f32 0.0, %v608
      %610 = vmatmul.f32.gmra.mxu0 %v543
      %v611 = vpop.f32.mrf.mxu0
      %v612 = vadd.f32 0.0, %v611
      %613 = vmatmul.f32.gmra.mxu0 %v546
      %v614 = vpop.f32.mrf.mxu0
      %v615 = vadd.f32 0.0, %v614
      %616 = vmatmul.f32.gmra.mxu0 %v549
      %v617 = vpop.f32.mrf.mxu0
      %v618 = vadd.f32 0.0, %v617
      %619 = vmatmul.f32.gmra.mxu0 %v552
      %v620 = vpop.f32.mrf.mxu0
      %v621 = vadd.f32 0.0, %v620
      %622 = vmatmul.f32.gmra.mxu0 %v555
      %v623 = vpop.f32.mrf.mxu0
      %v624 = vadd.f32 0.0, %v623
      %625 = vmatmul.f32.gmra.mxu0 %v558
      %v626 = vpop.f32.mrf.mxu0
      %v627 = vadd.f32 0.0, %v626
      %628 = vmatmul.f32.gmra.mxu0 %v561
      %v629 = vpop.f32.mrf.mxu0
      %v630 = vadd.f32 0.0, %v629
      %631 = vmatmul.f32.gmra.mxu0 %v564
      %v632 = vpop.f32.mrf.mxu0
      %v633 = vadd.f32 0.0, %v632
      %634 = vmatmul.f32.gmra.mxu0 %v567
      %v635 = vpop.f32.mrf.mxu0
      %v636 = vadd.f32 0.0, %v635
      %637 = vmatmul.f32.gmra.mxu0 %v570
      %v638 = vpop.f32.mrf.mxu0
      %v639 = vadd.f32 0.0, %v638
      %640 = vmatmul.f32.gmra.mxu0 %v573
      %v641 = vpop.f32.mrf.mxu0
      %v642 = vadd.f32 0.0, %v641
      %643 = vdwg.mxu0
      %v644 = vadd.f32 %v408, %v597
      %v645 = vadd.f32 %v408, %v600
      %v646 = vadd.f32 %v408, %v603
      %v647 = vadd.f32 %v408, %v606
      %v648 = vadd.f32 %v408, %v609
      %v649 = vadd.f32 %v408, %v612
      %v650 = vadd.f32 %v408, %v615
      %v651 = vadd.f32 %v408, %v618
      %v652 = vadd.f32 %v408, %v621
      %v653 = vadd.f32 %v408, %v624
      %v654 = vadd.f32 %v408, %v627
      %v655 = vadd.f32 %v408, %v630
      %v656 = vadd.f32 %v408, %v633
      %v657 = vadd.f32 %v408, %v636
      %v658 = vadd.f32 %v408, %v639
      %v659 = vadd.f32 %v408, %v642
      %s660 = scalar_lea.vmem %s183, %s410
      %v661 = vld [vmem:[%s660] sm:$0xff]
      %v662 = vld [vmem:[%s660 + $0x8] sm:$0xff]
      %v663 = vld [vmem:[%s660 + $0x10] sm:$0xff]
      %v664 = vld [vmem:[%s660 + $0x18] sm:$0xff]
      %v665 = vld [vmem:[%s660 + $0x20] sm:$0xff]
      %v666 = vld [vmem:[%s660 + $0x28] sm:$0xff]
      %v667 = vld [vmem:[%s660 + $0x30] sm:$0xff]
      %v668 = vld [vmem:[%s660 + $0x38] sm:$0xff]
      %v669 = vld [vmem:[%s660 + $0x40] sm:$0xff]
      %v670 = vld [vmem:[%s660 + $0x48] sm:$0xff]
      %v671 = vld [vmem:[%s660 + $0x50] sm:$0xff]
      %v672 = vld [vmem:[%s660 + $0x58] sm:$0xff]
      %v673 = vld [vmem:[%s660 + $0x60] sm:$0xff]
      %v674 = vld [vmem:[%s660 + $0x68] sm:$0xff]
      %v675 = vld [vmem:[%s660 + $0x70] sm:$0xff]
      %v676 = vld [vmem:[%s660 + $0x78] sm:$0xff]
      %s677 = scalar_lea.vmem %s1, 4
      %v678 = vld [vmem:[%s677] sm:$0xf]
      %v680 = vsel %vm526, %v661, 0
      %v683 = vsel %vm526, %v662, 0
      %v686 = vsel %vm526, %v663, 0
      %v689 = vsel %vm526, %v664, 0
      %v692 = vsel %vm526, %v665, 0
      %v695 = vsel %vm526, %v666, 0
      %v698 = vsel %vm526, %v667, 0
      %v701 = vsel %vm526, %v668, 0
      %v704 = vsel %vm526, %v669, 0
      %v707 = vsel %vm526, %v670, 0
      %v710 = vsel %vm526, %v671, 0
      %v713 = vsel %vm526, %v672, 0
      %v716 = vsel %vm526, %v673, 0
      %v719 = vsel %vm526, %v674, 0
      %v722 = vsel %vm526, %v675, 0
      %v725 = vsel %vm526, %v676, 0
      %v728 = vsel %vm575, %v678, 0
      %730 = vmatpush.msra.mxu0 0.0
      %731 = vmatpush.msra.mxu0 0.0
      %732 = vmatpush.msra.mxu0 0.0
      %733 = vmatpush.msra.mxu0 0.0
      %734 = vmatpush.msra.mxu0 0.0
      %735 = vmatpush.msra.mxu0 0.0
      %736 = vmatpush.msra.mxu0 0.0
      %737 = vmatpush.msra.mxu0 0.0
      %738 = vmatpush.msra.mxu0 0.0
      %739 = vmatpush.msra.mxu0 0.0
      %740 = vmatpush.msra.mxu0 0.0
      %741 = vmatpush.msra.mxu0 0.0
      %742 = vmatpush.msra.mxu0 0.0
      %743 = vmatpush.msra.mxu0 0.0
      %744 = vmatpush.msra.mxu0 0.0
      %745 = vmatpush.msra.mxu0 %v728
      %746 = vmatmul.f32.gmra.mxu0 %v680
      %v747 = vpop.f32.mrf.mxu0
      %v748 = vadd.f32 0.0, %v747
      %749 = vmatmul.f32.gmra.mxu0 %v683
      %v750 = vpop.f32.mrf.mxu0
      %v751 = vadd.f32 0.0, %v750
      %752 = vmatmul.f32.gmra.mxu0 %v686
      %v753 = vpop.f32.mrf.mxu0
      %v754 = vadd.f32 0.0, %v753
      %755 = vmatmul.f32.gmra.mxu0 %v689
      %v756 = vpop.f32.mrf.mxu0
      %v757 = vadd.f32 0.0, %v756
      %758 = vmatmul.f32.gmra.mxu0 %v692
      %v759 = vpop.f32.mrf.mxu0
      %v760 = vadd.f32 0.0, %v759
      %761 = vmatmul.f32.gmra.mxu0 %v695
      %v762 = vpop.f32.mrf.mxu0
      %v763 = vadd.f32 0.0, %v762
      %764 = vmatmul.f32.gmra.mxu0 %v698
      %v765 = vpop.f32.mrf.mxu0
      %v766 = vadd.f32 0.0, %v765
      %767 = vmatmul.f32.gmra.mxu0 %v701
      %v768 = vpop.f32.mrf.mxu0
      %v769 = vadd.f32 0.0, %v768
      %770 = vmatmul.f32.gmra.mxu0 %v704
      %v771 = vpop.f32.mrf.mxu0
      %v772 = vadd.f32 0.0, %v771
      %773 = vmatmul.f32.gmra.mxu0 %v707
      %v774 = vpop.f32.mrf.mxu0
      %v775 = vadd.f32 0.0, %v774
      %776 = vmatmul.f32.gmra.mxu0 %v710
      %v777 = vpop.f32.mrf.mxu0
      %v778 = vadd.f32 0.0, %v777
      %779 = vmatmul.f32.gmra.mxu0 %v713
      %v780 = vpop.f32.mrf.mxu0
      %v781 = vadd.f32 0.0, %v780
      %782 = vmatmul.f32.gmra.mxu0 %v716
      %v783 = vpop.f32.mrf.mxu0
      %v784 = vadd.f32 0.0, %v783
      %785 = vmatmul.f32.gmra.mxu0 %v719
      %v786 = vpop.f32.mrf.mxu0
      %v787 = vadd.f32 0.0, %v786
      %788 = vmatmul.f32.gmra.mxu0 %v722
      %v789 = vpop.f32.mrf.mxu0
      %v790 = vadd.f32 0.0, %v789
      %791 = vmatmul.f32.gmra.mxu0 %v725
      %v792 = vpop.f32.mrf.mxu0
      %v793 = vadd.f32 0.0, %v792
      %794 = vdwg.mxu0
      %v795 = vadd.f32 %v644, %v748
      %v796 = vadd.f32 %v645, %v751
      %v797 = vadd.f32 %v646, %v754
      %v798 = vadd.f32 %v647, %v757
      %v799 = vadd.f32 %v648, %v760
      %v800 = vadd.f32 %v649, %v763
      %v801 = vadd.f32 %v650, %v766
      %v802 = vadd.f32 %v651, %v769
      %v803 = vadd.f32 %v652, %v772
      %v804 = vadd.f32 %v653, %v775
      %v805 = vadd.f32 %v654, %v778
      %v806 = vadd.f32 %v655, %v781
      %v807 = vadd.f32 %v656, %v784
      %v808 = vadd.f32 %v657, %v787
      %v809 = vadd.f32 %v658, %v790
      %v810 = vadd.f32 %v659, %v793
      %s811 = sadd.s32 %s410, 1
      %s812 = scalar_lea.vmem %s183, %s811
      %v813 = vld [vmem:[%s812] sm:$0xff]
      %v814 = vld [vmem:[%s812 + $0x8] sm:$0xff]
      %v815 = vld [vmem:[%s812 + $0x10] sm:$0xff]
      %v816 = vld [vmem:[%s812 + $0x18] sm:$0xff]
      %v817 = vld [vmem:[%s812 + $0x20] sm:$0xff]
      %v818 = vld [vmem:[%s812 + $0x28] sm:$0xff]
      %v819 = vld [vmem:[%s812 + $0x30] sm:$0xff]
      %v820 = vld [vmem:[%s812 + $0x38] sm:$0xff]
      %v821 = vld [vmem:[%s812 + $0x40] sm:$0xff]
      %v822 = vld [vmem:[%s812 + $0x48] sm:$0xff]
      %v823 = vld [vmem:[%s812 + $0x50] sm:$0xff]
      %v824 = vld [vmem:[%s812 + $0x58] sm:$0xff]
      %v825 = vld [vmem:[%s812 + $0x60] sm:$0xff]
      %v826 = vld [vmem:[%s812 + $0x68] sm:$0xff]
      %v827 = vld [vmem:[%s812 + $0x70] sm:$0xff]
      %v828 = vld [vmem:[%s812 + $0x78] sm:$0xff]
      %vm829 = vcmp.ge.s32.totalorder %v388, 4294967295
      %vm830 = vcmp.ge.s32.totalorder %v389, 4294967295
      %vm831 = vcmp.ge.s32.totalorder %v390, 4294967295
      %vm832 = vcmp.ge.s32.totalorder %v391, 4294967295
      %vm833 = vcmp.ge.s32.totalorder %v392, 4294967295
      %vm834 = vcmp.ge.s32.totalorder %v393, 4294967295
      %vm835 = vcmp.ge.s32.totalorder %v394, 4294967295
      %vm836 = vcmp.ge.s32.totalorder %v395, 4294967295
      %vm837 = vcmp.ge.s32.totalorder %v396, 4294967295
      %vm838 = vcmp.ge.s32.totalorder %v397, 4294967295
      %vm839 = vcmp.ge.s32.totalorder %v398, 4294967295
      %vm840 = vcmp.ge.s32.totalorder %v399, 4294967295
      %vm841 = vcmp.ge.s32.totalorder %v400, 4294967295
      %vm842 = vcmp.ge.s32.totalorder %v401, 4294967295
      %vm843 = vcmp.ge.s32.totalorder %v402, 4294967295
      %vm844 = vcmp.ge.s32.totalorder %v403, 4294967295
      %vm845 = vcmp.lt.s32.totalorder %v388, 15
      %vm846 = vcmp.lt.s32.totalorder %v389, 15
      %vm847 = vcmp.lt.s32.totalorder %v390, 15
      %vm848 = vcmp.lt.s32.totalorder %v391, 15
      %vm849 = vcmp.lt.s32.totalorder %v392, 15
      %vm850 = vcmp.lt.s32.totalorder %v393, 15
      %vm851 = vcmp.lt.s32.totalorder %v394, 15
      %vm852 = vcmp.lt.s32.totalorder %v395, 15
      %vm853 = vcmp.lt.s32.totalorder %v396, 15
      %vm854 = vcmp.lt.s32.totalorder %v397, 15
      %vm855 = vcmp.lt.s32.totalorder %v398, 15
      %vm856 = vcmp.lt.s32.totalorder %v399, 15
      %vm857 = vcmp.lt.s32.totalorder %v400, 15
      %vm858 = vcmp.lt.s32.totalorder %v401, 15
      %vm859 = vcmp.lt.s32.totalorder %v402, 15
      %vm860 = vcmp.lt.s32.totalorder %v403, 15
      %vm861 = vmand %vm829, %vm845
      %vm862 = vmand %vm830, %vm846
      %vm863 = vmand %vm831, %vm847
      %vm864 = vmand %vm832, %vm848
      %vm865 = vmand %vm833, %vm849
      %vm866 = vmand %vm834, %vm850
      %vm867 = vmand %vm835, %vm851
      %vm868 = vmand %vm836, %vm852
      %vm869 = vmand %vm837, %vm853
      %vm870 = vmand %vm838, %vm854
      %vm871 = vmand %vm839, %vm855
      %vm872 = vmand %vm840, %vm856
      %vm873 = vmand %vm841, %vm857
      %vm874 = vmand %vm842, %vm858
      %vm875 = vmand %vm843, %vm859
      %vm876 = vmand %vm844, %vm860
      %v877 = vsel %vm861, 1, 0
      %v878 = vsel %vm862, 1, 0
      %v879 = vsel %vm863, 1, 0
      %v880 = vsel %vm864, 1, 0
      %v881 = vsel %vm865, 1, 0
      %v882 = vsel %vm866, 1, 0
      %v883 = vsel %vm867, 1, 0
      %v884 = vsel %vm868, 1, 0
      %v885 = vsel %vm869, 1, 0
      %v886 = vsel %vm870, 1, 0
      %v887 = vsel %vm871, 1, 0
      %v888 = vsel %vm872, 1, 0
      %v889 = vsel %vm873, 1, 0
      %v890 = vsel %vm874, 1, 0
      %v891 = vsel %vm875, 1, 0
      %v892 = vsel %vm876, 1, 0
      %vm893 = vcmp.eq.s32.totalorder %v877, 1
      %vm894 = vcmp.eq.s32.totalorder %v878, 1
      %vm895 = vcmp.eq.s32.totalorder %v879, 1
      %vm896 = vcmp.eq.s32.totalorder %v880, 1
      %vm897 = vcmp.eq.s32.totalorder %v881, 1
      %vm898 = vcmp.eq.s32.totalorder %v882, 1
      %vm899 = vcmp.eq.s32.totalorder %v883, 1
      %vm900 = vcmp.eq.s32.totalorder %v884, 1
      %vm901 = vcmp.eq.s32.totalorder %v885, 1
      %vm902 = vcmp.eq.s32.totalorder %v886, 1
      %vm903 = vcmp.eq.s32.totalorder %v887, 1
      %vm904 = vcmp.eq.s32.totalorder %v888, 1
      %vm905 = vcmp.eq.s32.totalorder %v889, 1
      %vm906 = vcmp.eq.s32.totalorder %v890, 1
      %vm907 = vcmp.eq.s32.totalorder %v891, 1
      %vm908 = vcmp.eq.s32.totalorder %v892, 1
      %v909 = vsel %vm893, %v813, 0.0
      %v910 = vsel %vm894, %v814, 0.0
      %v911 = vsel %vm895, %v815, 0.0
      %v912 = vsel %vm896, %v816, 0.0
      %v913 = vsel %vm897, %v817, 0.0
      %v914 = vsel %vm898, %v818, 0.0
      %v915 = vsel %vm899, %v819, 0.0
      %v916 = vsel %vm900, %v820, 0.0
      %v917 = vsel %vm901, %v821, 0.0
      %v918 = vsel %vm902, %v822, 0.0
      %v919 = vsel %vm903, %v823, 0.0
      %v920 = vsel %vm904, %v824, 0.0
      %v921 = vsel %vm905, %v825, 0.0
      %v922 = vsel %vm906, %v826, 0.0
      %v923 = vsel %vm907, %v827, 0.0
      %v924 = vsel %vm908, %v828, 0.0
      %s925 = scalar_lea.vmem %s1, 8
      %v926 = vld [vmem:[%s925] sm:$0xf]
      %v928 = vsel %vm526, %v909, 0
      %v931 = vsel %vm526, %v910, 0
      %v934 = vsel %vm526, %v911, 0
      %v937 = vsel %vm526, %v912, 0
      %v940 = vsel %vm526, %v913, 0
      %v943 = vsel %vm526, %v914, 0
      %v946 = vsel %vm526, %v915, 0
      %v949 = vsel %vm526, %v916, 0
      %v952 = vsel %vm526, %v917, 0
      %v955 = vsel %vm526, %v918, 0
      %v958 = vsel %vm526, %v919, 0
      %v961 = vsel %vm526, %v920, 0
      %v964 = vsel %vm526, %v921, 0
      %v967 = vsel %vm526, %v922, 0
      %v970 = vsel %vm526, %v923, 0
      %v973 = vsel %vm526, %v924, 0
      %v976 = vsel %vm575, %v926, 0
      %978 = vmatpush.msra.mxu0 0.0
      %979 = vmatpush.msra.mxu0 0.0
      %980 = vmatpush.msra.mxu0 0.0
      %981 = vmatpush.msra.mxu0 0.0
      %982 = vmatpush.msra.mxu0 0.0
      %983 = vmatpush.msra.mxu0 0.0
      %984 = vmatpush.msra.mxu0 0.0
      %985 = vmatpush.msra.mxu0 0.0
      %986 = vmatpush.msra.mxu0 0.0
      %987 = vmatpush.msra.mxu0 0.0
      %988 = vmatpush.msra.mxu0 0.0
      %989 = vmatpush.msra.mxu0 0.0
      %990 = vmatpush.msra.mxu0 0.0
      %991 = vmatpush.msra.mxu0 0.0
      %992 = vmatpush.msra.mxu0 0.0
      %993 = vmatpush.msra.mxu0 %v976
      %994 = vmatmul.f32.gmra.mxu0 %v928
      %v995 = vpop.f32.mrf.mxu0
      %v996 = vadd.f32 0.0, %v995
      %997 = vmatmul.f32.gmra.mxu0 %v931
      %v998 = vpop.f32.mrf.mxu0
      %v999 = vadd.f32 0.0, %v998
      %1000 = vmatmul.f32.gmra.mxu0 %v934
      %v1001 = vpop.f32.mrf.mxu0
      %v1002 = vadd.f32 0.0, %v1001
      %1003 = vmatmul.f32.gmra.mxu0 %v937
      %v1004 = vpop.f32.mrf.mxu0
      %v1005 = vadd.f32 0.0, %v1004
      %1006 = vmatmul.f32.gmra.mxu0 %v940
      %v1007 = vpop.f32.mrf.mxu0
      %v1008 = vadd.f32 0.0, %v1007
      %1009 = vmatmul.f32.gmra.mxu0 %v943
      %v1010 = vpop.f32.mrf.mxu0
      %v1011 = vadd.f32 0.0, %v1010
      %1012 = vmatmul.f32.gmra.mxu0 %v946
      %v1013 = vpop.f32.mrf.mxu0
      %v1014 = vadd.f32 0.0, %v1013
      %1015 = vmatmul.f32.gmra.mxu0 %v949
      %v1016 = vpop.f32.mrf.mxu0
      %v1017 = vadd.f32 0.0, %v1016
      %1018 = vmatmul.f32.gmra.mxu0 %v952
      %v1019 = vpop.f32.mrf.mxu0
      %v1020 = vadd.f32 0.0, %v1019
      %1021 = vmatmul.f32.gmra.mxu0 %v955
      %v1022 = vpop.f32.mrf.mxu0
      %v1023 = vadd.f32 0.0, %v1022
      %1024 = vmatmul.f32.gmra.mxu0 %v958
      %v1025 = vpop.f32.mrf.mxu0
      %v1026 = vadd.f32 0.0, %v1025
      %1027 = vmatmul.f32.gmra.mxu0 %v961
      %v1028 = vpop.f32.mrf.mxu0
      %v1029 = vadd.f32 0.0, %v1028
      %1030 = vmatmul.f32.gmra.mxu0 %v964
      %v1031 = vpop.f32.mrf.mxu0
      %v1032 = vadd.f32 0.0, %v1031
      %1033 = vmatmul.f32.gmra.mxu0 %v967
      %v1034 = vpop.f32.mrf.mxu0
      %v1035 = vadd.f32 0.0, %v1034
      %1036 = vmatmul.f32.gmra.mxu0 %v970
      %v1037 = vpop.f32.mrf.mxu0
      %v1038 = vadd.f32 0.0, %v1037
      %1039 = vmatmul.f32.gmra.mxu0 %v973
      %v1040 = vpop.f32.mrf.mxu0
      %v1041 = vadd.f32 0.0, %v1040
      %1042 = vdwg.mxu0
      %v1043 = vadd.f32 %v795, %v996
      %v1044 = vadd.f32 %v796, %v999
      %v1045 = vadd.f32 %v797, %v1002
      %v1046 = vadd.f32 %v798, %v1005
      %v1047 = vadd.f32 %v799, %v1008
      %v1048 = vadd.f32 %v800, %v1011
      %v1049 = vadd.f32 %v801, %v1014
      %v1050 = vadd.f32 %v802, %v1017
      %v1051 = vadd.f32 %v803, %v1020
      %v1052 = vadd.f32 %v804, %v1023
      %v1053 = vadd.f32 %v805, %v1026
      %v1054 = vadd.f32 %v806, %v1029
      %v1055 = vadd.f32 %v807, %v1032
      %v1056 = vadd.f32 %v808, %v1035
      %v1057 = vadd.f32 %v809, %v1038
      %v1058 = vadd.f32 %v810, %v1041
      %s1059 = sadd.s32 %s194, 2
      %s1060 = smul.u32 %s1059, 16
      %s1061 = sadd.s32 %s1060, 4294967295
      %s1062 = scalar_lea.vmem %s183, %s1061
      %v1063 = vld [vmem:[%s1062] sm:$0xff]
      %v1064 = vld [vmem:[%s1062 + $0x8] sm:$0xff]
      %v1065 = vld [vmem:[%s1062 + $0x10] sm:$0xff]
      %v1066 = vld [vmem:[%s1062 + $0x18] sm:$0xff]
      %v1067 = vld [vmem:[%s1062 + $0x20] sm:$0xff]
      %v1068 = vld [vmem:[%s1062 + $0x28] sm:$0xff]
      %v1069 = vld [vmem:[%s1062 + $0x30] sm:$0xff]
      %v1070 = vld [vmem:[%s1062 + $0x38] sm:$0xff]
      %v1071 = vld [vmem:[%s1062 + $0x40] sm:$0xff]
      %v1072 = vld [vmem:[%s1062 + $0x48] sm:$0xff]
      %v1073 = vld [vmem:[%s1062 + $0x50] sm:$0xff]
      %v1074 = vld [vmem:[%s1062 + $0x58] sm:$0xff]
      %v1075 = vld [vmem:[%s1062 + $0x60] sm:$0xff]
      %v1076 = vld [vmem:[%s1062 + $0x68] sm:$0xff]
      %v1077 = vld [vmem:[%s1062 + $0x70] sm:$0xff]
      %v1078 = vld [vmem:[%s1062 + $0x78] sm:$0xff]
      %v1079 = vsel %vm493, %v1063, 0.0
      %v1080 = vsel %vm494, %v1064, 0.0
      %v1081 = vsel %vm495, %v1065, 0.0
      %v1082 = vsel %vm496, %v1066, 0.0
      %v1083 = vsel %vm497, %v1067, 0.0
      %v1084 = vsel %vm498, %v1068, 0.0
      %v1085 = vsel %vm499, %v1069, 0.0
      %v1086 = vsel %vm500, %v1070, 0.0
      %v1087 = vsel %vm501, %v1071, 0.0
      %v1088 = vsel %vm502, %v1072, 0.0
      %v1089 = vsel %vm503, %v1073, 0.0
      %v1090 = vsel %vm504, %v1074, 0.0
      %v1091 = vsel %vm505, %v1075, 0.0
      %v1092 = vsel %vm506, %v1076, 0.0
      %v1093 = vsel %vm507, %v1077, 0.0
      %v1094 = vsel %vm508, %v1078, 0.0
      %s1095 = scalar_lea.vmem %s1, 12
      %v1096 = vld [vmem:[%s1095] sm:$0xf]
      %v1098 = vsel %vm526, %v1079, 0
      %v1101 = vsel %vm526, %v1080, 0
      %v1104 = vsel %vm526, %v1081, 0
      %v1107 = vsel %vm526, %v1082, 0
      %v1110 = vsel %vm526, %v1083, 0
      %v1113 = vsel %vm526, %v1084, 0
      %v1116 = vsel %vm526, %v1085, 0
      %v1119 = vsel %vm526, %v1086, 0
      %v1122 = vsel %vm526, %v1087, 0
      %v1125 = vsel %vm526, %v1088, 0
      %v1128 = vsel %vm526, %v1089, 0
      %v1131 = vsel %vm526, %v1090, 0
      %v1134 = vsel %vm526, %v1091, 0
      %v1137 = vsel %vm526, %v1092, 0
      %v1140 = vsel %vm526, %v1093, 0
      %v1143 = vsel %vm526, %v1094, 0
      %v1146 = vsel %vm575, %v1096, 0
      %1148 = vmatpush.msra.mxu0 0.0
      %1149 = vmatpush.msra.mxu0 0.0
      %1150 = vmatpush.msra.mxu0 0.0
      %1151 = vmatpush.msra.mxu0 0.0
      %1152 = vmatpush.msra.mxu0 0.0
      %1153 = vmatpush.msra.mxu0 0.0
      %1154 = vmatpush.msra.mxu0 0.0
      %1155 = vmatpush.msra.mxu0 0.0
      %1156 = vmatpush.msra.mxu0 0.0
      %1157 = vmatpush.msra.mxu0 0.0
      %1158 = vmatpush.msra.mxu0 0.0
      %1159 = vmatpush.msra.mxu0 0.0
      %1160 = vmatpush.msra.mxu0 0.0
      %1161 = vmatpush.msra.mxu0 0.0
      %1162 = vmatpush.msra.mxu0 0.0
      %1163 = vmatpush.msra.mxu0 %v1146
      %1164 = vmatmul.f32.gmra.mxu0 %v1098
      %v1165 = vpop.f32.mrf.mxu0
      %v1166 = vadd.f32 0.0, %v1165
      %1167 = vmatmul.f32.gmra.mxu0 %v1101
      %v1168 = vpop.f32.mrf.mxu0
      %v1169 = vadd.f32 0.0, %v1168
      %1170 = vmatmul.f32.gmra.mxu0 %v1104
      %v1171 = vpop.f32.mrf.mxu0
      %v1172 = vadd.f32 0.0, %v1171
      %1173 = vmatmul.f32.gmra.mxu0 %v1107
      %v1174 = vpop.f32.mrf.mxu0
      %v1175 = vadd.f32 0.0, %v1174
      %1176 = vmatmul.f32.gmra.mxu0 %v1110
      %v1177 = vpop.f32.mrf.mxu0
      %v1178 = vadd.f32 0.0, %v1177
      %1179 = vmatmul.f32.gmra.mxu0 %v1113
      %v1180 = vpop.f32.mrf.mxu0
      %v1181 = vadd.f32 0.0, %v1180
      %1182 = vmatmul.f32.gmra.mxu0 %v1116
      %v1183 = vpop.f32.mrf.mxu0
      %v1184 = vadd.f32 0.0, %v1183
      %1185 = vmatmul.f32.gmra.mxu0 %v1119
      %v1186 = vpop.f32.mrf.mxu0
      %v1187 = vadd.f32 0.0, %v1186
      %1188 = vmatmul.f32.gmra.mxu0 %v1122
      %v1189 = vpop.f32.mrf.mxu0
      %v1190 = vadd.f32 0.0, %v1189
      %1191 = vmatmul.f32.gmra.mxu0 %v1125
      %v1192 = vpop.f32.mrf.mxu0
      %v1193 = vadd.f32 0.0, %v1192
      %1194 = vmatmul.f32.gmra.mxu0 %v1128
      %v1195 = vpop.f32.mrf.mxu0
      %v1196 = vadd.f32 0.0, %v1195
      %1197 = vmatmul.f32.gmra.mxu0 %v1131
      %v1198 = vpop.f32.mrf.mxu0
      %v1199 = vadd.f32 0.0, %v1198
      %1200 = vmatmul.f32.gmra.mxu0 %v1134
      %v1201 = vpop.f32.mrf.mxu0
      %v1202 = vadd.f32 0.0, %v1201
      %1203 = vmatmul.f32.gmra.mxu0 %v1137
      %v1204 = vpop.f32.mrf.mxu0
      %v1205 = vadd.f32 0.0, %v1204
      %1206 = vmatmul.f32.gmra.mxu0 %v1140
      %v1207 = vpop.f32.mrf.mxu0
      %v1208 = vadd.f32 0.0, %v1207
      %1209 = vmatmul.f32.gmra.mxu0 %v1143
      %v1210 = vpop.f32.mrf.mxu0
      %v1211 = vadd.f32 0.0, %v1210
      %1212 = vdwg.mxu0
      %v1213 = vadd.f32 %v1043, %v1166
      %v1214 = vadd.f32 %v1044, %v1169
      %v1215 = vadd.f32 %v1045, %v1172
      %v1216 = vadd.f32 %v1046, %v1175
      %v1217 = vadd.f32 %v1047, %v1178
      %v1218 = vadd.f32 %v1048, %v1181
      %v1219 = vadd.f32 %v1049, %v1184
      %v1220 = vadd.f32 %v1050, %v1187
      %v1221 = vadd.f32 %v1051, %v1190
      %v1222 = vadd.f32 %v1052, %v1193
      %v1223 = vadd.f32 %v1053, %v1196
      %v1224 = vadd.f32 %v1054, %v1199
      %v1225 = vadd.f32 %v1055, %v1202
      %v1226 = vadd.f32 %v1056, %v1205
      %v1227 = vadd.f32 %v1057, %v1208
      %v1228 = vadd.f32 %v1058, %v1211
      %s1229 = scalar_lea.vmem %s183, %s1060
      %v1230 = vld [vmem:[%s1229] sm:$0xff]
      %v1231 = vld [vmem:[%s1229 + $0x8] sm:$0xff]
      %v1232 = vld [vmem:[%s1229 + $0x10] sm:$0xff]
      %v1233 = vld [vmem:[%s1229 + $0x18] sm:$0xff]
      %v1234 = vld [vmem:[%s1229 + $0x20] sm:$0xff]
      %v1235 = vld [vmem:[%s1229 + $0x28] sm:$0xff]
      %v1236 = vld [vmem:[%s1229 + $0x30] sm:$0xff]
      %v1237 = vld [vmem:[%s1229 + $0x38] sm:$0xff]
      %v1238 = vld [vmem:[%s1229 + $0x40] sm:$0xff]
      %v1239 = vld [vmem:[%s1229 + $0x48] sm:$0xff]
      %v1240 = vld [vmem:[%s1229 + $0x50] sm:$0xff]
      %v1241 = vld [vmem:[%s1229 + $0x58] sm:$0xff]
      %v1242 = vld [vmem:[%s1229 + $0x60] sm:$0xff]
      %v1243 = vld [vmem:[%s1229 + $0x68] sm:$0xff]
      %v1244 = vld [vmem:[%s1229 + $0x70] sm:$0xff]
      %v1245 = vld [vmem:[%s1229 + $0x78] sm:$0xff]
      %s1246 = scalar_lea.vmem %s1, 16
      %v1247 = vld [vmem:[%s1246] sm:$0xf]
      %v1249 = vsel %vm526, %v1230, 0
      %v1252 = vsel %vm526, %v1231, 0
      %v1255 = vsel %vm526, %v1232, 0
      %v1258 = vsel %vm526, %v1233, 0
      %v1261 = vsel %vm526, %v1234, 0
      %v1264 = vsel %vm526, %v1235, 0
      %v1267 = vsel %vm526, %v1236, 0
      %v1270 = vsel %vm526, %v1237, 0
      %v1273 = vsel %vm526, %v1238, 0
      %v1276 = vsel %vm526, %v1239, 0
      %v1279 = vsel %vm526, %v1240, 0
      %v1282 = vsel %vm526, %v1241, 0
      %v1285 = vsel %vm526, %v1242, 0
      %v1288 = vsel %vm526, %v1243, 0
      %v1291 = vsel %vm526, %v1244, 0
      %v1294 = vsel %vm526, %v1245, 0
      %v1297 = vsel %vm575, %v1247, 0
      %1299 = vmatpush.msra.mxu0 0.0
      %1300 = vmatpush.msra.mxu0 0.0
      %1301 = vmatpush.msra.mxu0 0.0
      %1302 = vmatpush.msra.mxu0 0.0
      %1303 = vmatpush.msra.mxu0 0.0
      %1304 = vmatpush.msra.mxu0 0.0
      %1305 = vmatpush.msra.mxu0 0.0
      %1306 = vmatpush.msra.mxu0 0.0
      %1307 = vmatpush.msra.mxu0 0.0
      %1308 = vmatpush.msra.mxu0 0.0
      %1309 = vmatpush.msra.mxu0 0.0
      %1310 = vmatpush.msra.mxu0 0.0
      %1311 = vmatpush.msra.mxu0 0.0
      %1312 = vmatpush.msra.mxu0 0.0
      %1313 = vmatpush.msra.mxu0 0.0
      %1314 = vmatpush.msra.mxu0 %v1297
      %1315 = vmatmul.f32.gmra.mxu0 %v1249
      %v1316 = vpop.f32.mrf.mxu0
      %v1317 = vadd.f32 0.0, %v1316
      %1318 = vmatmul.f32.gmra.mxu0 %v1252
      %v1319 = vpop.f32.mrf.mxu0
      %v1320 = vadd.f32 0.0, %v1319
      %1321 = vmatmul.f32.gmra.mxu0 %v1255
      %v1322 = vpop.f32.mrf.mxu0
      %v1323 = vadd.f32 0.0, %v1322
      %1324 = vmatmul.f32.gmra.mxu0 %v1258
      %v1325 = vpop.f32.mrf.mxu0
      %v1326 = vadd.f32 0.0, %v1325
      %1327 = vmatmul.f32.gmra.mxu0 %v1261
      %v1328 = vpop.f32.mrf.mxu0
      %v1329 = vadd.f32 0.0, %v1328
      %1330 = vmatmul.f32.gmra.mxu0 %v1264
      %v1331 = vpop.f32.mrf.mxu0
      %v1332 = vadd.f32 0.0, %v1331
      %1333 = vmatmul.f32.gmra.mxu0 %v1267
      %v1334 = vpop.f32.mrf.mxu0
      %v1335 = vadd.f32 0.0, %v1334
      %1336 = vmatmul.f32.gmra.mxu0 %v1270
      %v1337 = vpop.f32.mrf.mxu0
      %v1338 = vadd.f32 0.0, %v1337
      %1339 = vmatmul.f32.gmra.mxu0 %v1273
      %v1340 = vpop.f32.mrf.mxu0
      %v1341 = vadd.f32 0.0, %v1340
      %1342 = vmatmul.f32.gmra.mxu0 %v1276
      %v1343 = vpop.f32.mrf.mxu0
      %v1344 = vadd.f32 0.0, %v1343
      %1345 = vmatmul.f32.gmra.mxu0 %v1279
      %v1346 = vpop.f32.mrf.mxu0
      %v1347 = vadd.f32 0.0, %v1346
      %1348 = vmatmul.f32.gmra.mxu0 %v1282
      %v1349 = vpop.f32.mrf.mxu0
      %v1350 = vadd.f32 0.0, %v1349
      %1351 = vmatmul.f32.gmra.mxu0 %v1285
      %v1352 = vpop.f32.mrf.mxu0
      %v1353 = vadd.f32 0.0, %v1352
      %1354 = vmatmul.f32.gmra.mxu0 %v1288
      %v1355 = vpop.f32.mrf.mxu0
      %v1356 = vadd.f32 0.0, %v1355
      %1357 = vmatmul.f32.gmra.mxu0 %v1291
      %v1358 = vpop.f32.mrf.mxu0
      %v1359 = vadd.f32 0.0, %v1358
      %1360 = vmatmul.f32.gmra.mxu0 %v1294
      %v1361 = vpop.f32.mrf.mxu0
      %v1362 = vadd.f32 0.0, %v1361
      %1363 = vdwg.mxu0
      %v1364 = vadd.f32 %v1213, %v1317
      %v1365 = vadd.f32 %v1214, %v1320
      %v1366 = vadd.f32 %v1215, %v1323
      %v1367 = vadd.f32 %v1216, %v1326
      %v1368 = vadd.f32 %v1217, %v1329
      %v1369 = vadd.f32 %v1218, %v1332
      %v1370 = vadd.f32 %v1219, %v1335
      %v1371 = vadd.f32 %v1220, %v1338
      %v1372 = vadd.f32 %v1221, %v1341
      %v1373 = vadd.f32 %v1222, %v1344
      %v1374 = vadd.f32 %v1223, %v1347
      %v1375 = vadd.f32 %v1224, %v1350
      %v1376 = vadd.f32 %v1225, %v1353
      %v1377 = vadd.f32 %v1226, %v1356
      %v1378 = vadd.f32 %v1227, %v1359
      %v1379 = vadd.f32 %v1228, %v1362
      %s1380 = sadd.s32 %s1060, 1
      %s1381 = scalar_lea.vmem %s183, %s1380
      %v1382 = vld [vmem:[%s1381] sm:$0xff]
      %v1383 = vld [vmem:[%s1381 + $0x8] sm:$0xff]
      %v1384 = vld [vmem:[%s1381 + $0x10] sm:$0xff]
      %v1385 = vld [vmem:[%s1381 + $0x18] sm:$0xff]
      %v1386 = vld [vmem:[%s1381 + $0x20] sm:$0xff]
      %v1387 = vld [vmem:[%s1381 + $0x28] sm:$0xff]
      %v1388 = vld [vmem:[%s1381 + $0x30] sm:$0xff]
      %v1389 = vld [vmem:[%s1381 + $0x38] sm:$0xff]
      %v1390 = vld [vmem:[%s1381 + $0x40] sm:$0xff]
      %v1391 = vld [vmem:[%s1381 + $0x48] sm:$0xff]
      %v1392 = vld [vmem:[%s1381 + $0x50] sm:$0xff]
      %v1393 = vld [vmem:[%s1381 + $0x58] sm:$0xff]
      %v1394 = vld [vmem:[%s1381 + $0x60] sm:$0xff]
      %v1395 = vld [vmem:[%s1381 + $0x68] sm:$0xff]
      %v1396 = vld [vmem:[%s1381 + $0x70] sm:$0xff]
      %v1397 = vld [vmem:[%s1381 + $0x78] sm:$0xff]
      %v1398 = vsel %vm893, %v1382, 0.0
      %v1399 = vsel %vm894, %v1383, 0.0
      %v1400 = vsel %vm895, %v1384, 0.0
      %v1401 = vsel %vm896, %v1385, 0.0
      %v1402 = vsel %vm897, %v1386, 0.0
      %v1403 = vsel %vm898, %v1387, 0.0
      %v1404 = vsel %vm899, %v1388, 0.0
      %v1405 = vsel %vm900, %v1389, 0.0
      %v1406 = vsel %vm901, %v1390, 0.0
      %v1407 = vsel %vm902, %v1391, 0.0
      %v1408 = vsel %vm903, %v1392, 0.0
      %v1409 = vsel %vm904, %v1393, 0.0
      %v1410 = vsel %vm905, %v1394, 0.0
      %v1411 = vsel %vm906, %v1395, 0.0
      %v1412 = vsel %vm907, %v1396, 0.0
      %v1413 = vsel %vm908, %v1397, 0.0
      %s1414 = scalar_lea.vmem %s1, 20
      %v1415 = vld [vmem:[%s1414] sm:$0xf]
      %v1417 = vsel %vm526, %v1398, 0
      %v1420 = vsel %vm526, %v1399, 0
      %v1423 = vsel %vm526, %v1400, 0
      %v1426 = vsel %vm526, %v1401, 0
      %v1429 = vsel %vm526, %v1402, 0
      %v1432 = vsel %vm526, %v1403, 0
      %v1435 = vsel %vm526, %v1404, 0
      %v1438 = vsel %vm526, %v1405, 0
      %v1441 = vsel %vm526, %v1406, 0
      %v1444 = vsel %vm526, %v1407, 0
      %v1447 = vsel %vm526, %v1408, 0
      %v1450 = vsel %vm526, %v1409, 0
      %v1453 = vsel %vm526, %v1410, 0
      %v1456 = vsel %vm526, %v1411, 0
      %v1459 = vsel %vm526, %v1412, 0
      %v1462 = vsel %vm526, %v1413, 0
      %v1465 = vsel %vm575, %v1415, 0
      %1467 = vmatpush.msra.mxu0 0.0
      %1468 = vmatpush.msra.mxu0 0.0
      %1469 = vmatpush.msra.mxu0 0.0
      %1470 = vmatpush.msra.mxu0 0.0
      %1471 = vmatpush.msra.mxu0 0.0
      %1472 = vmatpush.msra.mxu0 0.0
      %1473 = vmatpush.msra.mxu0 0.0
      %1474 = vmatpush.msra.mxu0 0.0
      %1475 = vmatpush.msra.mxu0 0.0
      %1476 = vmatpush.msra.mxu0 0.0
      %1477 = vmatpush.msra.mxu0 0.0
      %1478 = vmatpush.msra.mxu0 0.0
      %1479 = vmatpush.msra.mxu0 0.0
      %1480 = vmatpush.msra.mxu0 0.0
      %1481 = vmatpush.msra.mxu0 0.0
      %1482 = vmatpush.msra.mxu0 %v1465
      %1483 = vmatmul.f32.gmra.mxu0 %v1417
      %v1484 = vpop.f32.mrf.mxu0
      %v1485 = vadd.f32 0.0, %v1484
      %1486 = vmatmul.f32.gmra.mxu0 %v1420
      %v1487 = vpop.f32.mrf.mxu0
      %v1488 = vadd.f32 0.0, %v1487
      %1489 = vmatmul.f32.gmra.mxu0 %v1423
      %v1490 = vpop.f32.mrf.mxu0
      %v1491 = vadd.f32 0.0, %v1490
      %1492 = vmatmul.f32.gmra.mxu0 %v1426
      %v1493 = vpop.f32.mrf.mxu0
      %v1494 = vadd.f32 0.0, %v1493
      %1495 = vmatmul.f32.gmra.mxu0 %v1429
      %v1496 = vpop.f32.mrf.mxu0
      %v1497 = vadd.f32 0.0, %v1496
      %1498 = vmatmul.f32.gmra.mxu0 %v1432
      %v1499 = vpop.f32.mrf.mxu0
      %v1500 = vadd.f32 0.0, %v1499
      %1501 = vmatmul.f32.gmra.mxu0 %v1435
      %v1502 = vpop.f32.mrf.mxu0
      %v1503 = vadd.f32 0.0, %v1502
      %1504 = vmatmul.f32.gmra.mxu0 %v1438
      %v1505 = vpop.f32.mrf.mxu0
      %v1506 = vadd.f32 0.0, %v1505
      %1507 = vmatmul.f32.gmra.mxu0 %v1441
      %v1508 = vpop.f32.mrf.mxu0
      %v1509 = vadd.f32 0.0, %v1508
      %1510 = vmatmul.f32.gmra.mxu0 %v1444
      %v1511 = vpop.f32.mrf.mxu0
      %v1512 = vadd.f32 0.0, %v1511
      %1513 = vmatmul.f32.gmra.mxu0 %v1447
      %v1514 = vpop.f32.mrf.mxu0
      %v1515 = vadd.f32 0.0, %v1514
      %1516 = vmatmul.f32.gmra.mxu0 %v1450
      %v1517 = vpop.f32.mrf.mxu0
      %v1518 = vadd.f32 0.0, %v1517
      %1519 = vmatmul.f32.gmra.mxu0 %v1453
      %v1520 = vpop.f32.mrf.mxu0
      %v1521 = vadd.f32 0.0, %v1520
      %1522 = vmatmul.f32.gmra.mxu0 %v1456
      %v1523 = vpop.f32.mrf.mxu0
      %v1524 = vadd.f32 0.0, %v1523
      %1525 = vmatmul.f32.gmra.mxu0 %v1459
      %v1526 = vpop.f32.mrf.mxu0
      %v1527 = vadd.f32 0.0, %v1526
      %1528 = vmatmul.f32.gmra.mxu0 %v1462
      %v1529 = vpop.f32.mrf.mxu0
      %v1530 = vadd.f32 0.0, %v1529
      %1531 = vdwg.mxu0
      %v1532 = vadd.f32 %v1364, %v1485
      %v1533 = vadd.f32 %v1365, %v1488
      %v1534 = vadd.f32 %v1366, %v1491
      %v1535 = vadd.f32 %v1367, %v1494
      %v1536 = vadd.f32 %v1368, %v1497
      %v1537 = vadd.f32 %v1369, %v1500
      %v1538 = vadd.f32 %v1370, %v1503
      %v1539 = vadd.f32 %v1371, %v1506
      %v1540 = vadd.f32 %v1372, %v1509
      %v1541 = vadd.f32 %v1373, %v1512
      %v1542 = vadd.f32 %v1374, %v1515
      %v1543 = vadd.f32 %v1375, %v1518
      %v1544 = vadd.f32 %v1376, %v1521
      %v1545 = vadd.f32 %v1377, %v1524
      %v1546 = vadd.f32 %v1378, %v1527
      %v1547 = vadd.f32 %v1379, %v1530
      %s1548 = sadd.s32 %s194, 3
      %s1549 = smul.u32 %s1548, 16
      %s1550 = sadd.s32 %s1549, 4294967295
      %s1551 = scalar_lea.vmem %s183, %s1550
      %v1552 = vld [vmem:[%s1551] sm:$0xff]
      %v1553 = vld [vmem:[%s1551 + $0x8] sm:$0xff]
      %v1554 = vld [vmem:[%s1551 + $0x10] sm:$0xff]
      %v1555 = vld [vmem:[%s1551 + $0x18] sm:$0xff]
      %v1556 = vld [vmem:[%s1551 + $0x20] sm:$0xff]
      %v1557 = vld [vmem:[%s1551 + $0x28] sm:$0xff]
      %v1558 = vld [vmem:[%s1551 + $0x30] sm:$0xff]
      %v1559 = vld [vmem:[%s1551 + $0x38] sm:$0xff]
      %v1560 = vld [vmem:[%s1551 + $0x40] sm:$0xff]
      %v1561 = vld [vmem:[%s1551 + $0x48] sm:$0xff]
      %v1562 = vld [vmem:[%s1551 + $0x50] sm:$0xff]
      %v1563 = vld [vmem:[%s1551 + $0x58] sm:$0xff]
      %v1564 = vld [vmem:[%s1551 + $0x60] sm:$0xff]
      %v1565 = vld [vmem:[%s1551 + $0x68] sm:$0xff]
      %v1566 = vld [vmem:[%s1551 + $0x70] sm:$0xff]
      %v1567 = vld [vmem:[%s1551 + $0x78] sm:$0xff]
      %v1568 = vsel %vm493, %v1552, 0.0
      %v1569 = vsel %vm494, %v1553, 0.0
      %v1570 = vsel %vm495, %v1554, 0.0
      %v1571 = vsel %vm496, %v1555, 0.0
      %v1572 = vsel %vm497, %v1556, 0.0
      %v1573 = vsel %vm498, %v1557, 0.0
      %v1574 = vsel %vm499, %v1558, 0.0
      %v1575 = vsel %vm500, %v1559, 0.0
      %v1576 = vsel %vm501, %v1560, 0.0
      %v1577 = vsel %vm502, %v1561, 0.0
      %v1578 = vsel %vm503, %v1562, 0.0
      %v1579 = vsel %vm504, %v1563, 0.0
      %v1580 = vsel %vm505, %v1564, 0.0
      %v1581 = vsel %vm506, %v1565, 0.0
      %v1582 = vsel %vm507, %v1566, 0.0
      %v1583 = vsel %vm508, %v1567, 0.0
      %s1584 = scalar_lea.vmem %s1, 24
      %v1585 = vld [vmem:[%s1584] sm:$0xf]
      %v1587 = vsel %vm526, %v1568, 0
      %v1590 = vsel %vm526, %v1569, 0
      %v1593 = vsel %vm526, %v1570, 0
      %v1596 = vsel %vm526, %v1571, 0
      %v1599 = vsel %vm526, %v1572, 0
      %v1602 = vsel %vm526, %v1573, 0
      %v1605 = vsel %vm526, %v1574, 0
      %v1608 = vsel %vm526, %v1575, 0
      %v1611 = vsel %vm526, %v1576, 0
      %v1614 = vsel %vm526, %v1577, 0
      %v1617 = vsel %vm526, %v1578, 0
      %v1620 = vsel %vm526, %v1579, 0
      %v1623 = vsel %vm526, %v1580, 0
      %v1626 = vsel %vm526, %v1581, 0
      %v1629 = vsel %vm526, %v1582, 0
      %v1632 = vsel %vm526, %v1583, 0
      %v1635 = vsel %vm575, %v1585, 0
      %1637 = vmatpush.msra.mxu0 0.0
      %1638 = vmatpush.msra.mxu0 0.0
      %1639 = vmatpush.msra.mxu0 0.0
      %1640 = vmatpush.msra.mxu0 0.0
      %1641 = vmatpush.msra.mxu0 0.0
      %1642 = vmatpush.msra.mxu0 0.0
      %1643 = vmatpush.msra.mxu0 0.0
      %1644 = vmatpush.msra.mxu0 0.0
      %1645 = vmatpush.msra.mxu0 0.0
      %1646 = vmatpush.msra.mxu0 0.0
      %1647 = vmatpush.msra.mxu0 0.0
      %1648 = vmatpush.msra.mxu0 0.0
      %1649 = vmatpush.msra.mxu0 0.0
      %1650 = vmatpush.msra.mxu0 0.0
      %1651 = vmatpush.msra.mxu0 0.0
      %1652 = vmatpush.msra.mxu0 %v1635
      %1653 = vmatmul.f32.gmra.mxu0 %v1587
      %v1654 = vpop.f32.mrf.mxu0
      %v1655 = vadd.f32 0.0, %v1654
      %1656 = vmatmul.f32.gmra.mxu0 %v1590
      %v1657 = vpop.f32.mrf.mxu0
      %v1658 = vadd.f32 0.0, %v1657
      %1659 = vmatmul.f32.gmra.mxu0 %v1593
      %v1660 = vpop.f32.mrf.mxu0
      %v1661 = vadd.f32 0.0, %v1660
      %1662 = vmatmul.f32.gmra.mxu0 %v1596
      %v1663 = vpop.f32.mrf.mxu0
      %v1664 = vadd.f32 0.0, %v1663
      %1665 = vmatmul.f32.gmra.mxu0 %v1599
      %v1666 = vpop.f32.mrf.mxu0
      %v1667 = vadd.f32 0.0, %v1666
      %1668 = vmatmul.f32.gmra.mxu0 %v1602
      %v1669 = vpop.f32.mrf.mxu0
      %v1670 = vadd.f32 0.0, %v1669
      %1671 = vmatmul.f32.gmra.mxu0 %v1605
      %v1672 = vpop.f32.mrf.mxu0
      %v1673 = vadd.f32 0.0, %v1672
      %1674 = vmatmul.f32.gmra.mxu0 %v1608
      %v1675 = vpop.f32.mrf.mxu0
      %v1676 = vadd.f32 0.0, %v1675
      %1677 = vmatmul.f32.gmra.mxu0 %v1611
      %v1678 = vpop.f32.mrf.mxu0
      %v1679 = vadd.f32 0.0, %v1678
      %1680 = vmatmul.f32.gmra.mxu0 %v1614
      %v1681 = vpop.f32.mrf.mxu0
      %v1682 = vadd.f32 0.0, %v1681
      %1683 = vmatmul.f32.gmra.mxu0 %v1617
      %v1684 = vpop.f32.mrf.mxu0
      %v1685 = vadd.f32 0.0, %v1684
      %1686 = vmatmul.f32.gmra.mxu0 %v1620
      %v1687 = vpop.f32.mrf.mxu0
      %v1688 = vadd.f32 0.0, %v1687
      %1689 = vmatmul.f32.gmra.mxu0 %v1623
      %v1690 = vpop.f32.mrf.mxu0
      %v1691 = vadd.f32 0.0, %v1690
      %1692 = vmatmul.f32.gmra.mxu0 %v1626
      %v1693 = vpop.f32.mrf.mxu0
      %v1694 = vadd.f32 0.0, %v1693
      %1695 = vmatmul.f32.gmra.mxu0 %v1629
      %v1696 = vpop.f32.mrf.mxu0
      %v1697 = vadd.f32 0.0, %v1696
      %1698 = vmatmul.f32.gmra.mxu0 %v1632
      %v1699 = vpop.f32.mrf.mxu0
      %v1700 = vadd.f32 0.0, %v1699
      %1701 = vdwg.mxu0
      %v1702 = vadd.f32 %v1532, %v1655
      %v1703 = vadd.f32 %v1533, %v1658
      %v1704 = vadd.f32 %v1534, %v1661
      %v1705 = vadd.f32 %v1535, %v1664
      %v1706 = vadd.f32 %v1536, %v1667
      %v1707 = vadd.f32 %v1537, %v1670
      %v1708 = vadd.f32 %v1538, %v1673
      %v1709 = vadd.f32 %v1539, %v1676
      %v1710 = vadd.f32 %v1540, %v1679
      %v1711 = vadd.f32 %v1541, %v1682
      %v1712 = vadd.f32 %v1542, %v1685
      %v1713 = vadd.f32 %v1543, %v1688
      %v1714 = vadd.f32 %v1544, %v1691
      %v1715 = vadd.f32 %v1545, %v1694
      %v1716 = vadd.f32 %v1546, %v1697
      %v1717 = vadd.f32 %v1547, %v1700
      %s1718 = scalar_lea.vmem %s183, %s1549
      %v1719 = vld [vmem:[%s1718] sm:$0xff]
      %v1720 = vld [vmem:[%s1718 + $0x8] sm:$0xff]
      %v1721 = vld [vmem:[%s1718 + $0x10] sm:$0xff]
      %v1722 = vld [vmem:[%s1718 + $0x18] sm:$0xff]
      %v1723 = vld [vmem:[%s1718 + $0x20] sm:$0xff]
      %v1724 = vld [vmem:[%s1718 + $0x28] sm:$0xff]
      %v1725 = vld [vmem:[%s1718 + $0x30] sm:$0xff]
      %v1726 = vld [vmem:[%s1718 + $0x38] sm:$0xff]
      %v1727 = vld [vmem:[%s1718 + $0x40] sm:$0xff]
      %v1728 = vld [vmem:[%s1718 + $0x48] sm:$0xff]
      %v1729 = vld [vmem:[%s1718 + $0x50] sm:$0xff]
      %v1730 = vld [vmem:[%s1718 + $0x58] sm:$0xff]
      %v1731 = vld [vmem:[%s1718 + $0x60] sm:$0xff]
      %v1732 = vld [vmem:[%s1718 + $0x68] sm:$0xff]
      %v1733 = vld [vmem:[%s1718 + $0x70] sm:$0xff]
      %v1734 = vld [vmem:[%s1718 + $0x78] sm:$0xff]
      %s1735 = scalar_lea.vmem %s1, 28
      %v1736 = vld [vmem:[%s1735] sm:$0xf]
      %v1738 = vsel %vm526, %v1719, 0
      %v1741 = vsel %vm526, %v1720, 0
      %v1744 = vsel %vm526, %v1721, 0
      %v1747 = vsel %vm526, %v1722, 0
      %v1750 = vsel %vm526, %v1723, 0
      %v1753 = vsel %vm526, %v1724, 0
      %v1756 = vsel %vm526, %v1725, 0
      %v1759 = vsel %vm526, %v1726, 0
      %v1762 = vsel %vm526, %v1727, 0
      %v1765 = vsel %vm526, %v1728, 0
      %v1768 = vsel %vm526, %v1729, 0
      %v1771 = vsel %vm526, %v1730, 0
      %v1774 = vsel %vm526, %v1731, 0
      %v1777 = vsel %vm526, %v1732, 0
      %v1780 = vsel %vm526, %v1733, 0
      %v1783 = vsel %vm526, %v1734, 0
      %v1786 = vsel %vm575, %v1736, 0
      %1788 = vmatpush.msra.mxu0 0.0
      %1789 = vmatpush.msra.mxu0 0.0
      %1790 = vmatpush.msra.mxu0 0.0
      %1791 = vmatpush.msra.mxu0 0.0
      %1792 = vmatpush.msra.mxu0 0.0
      %1793 = vmatpush.msra.mxu0 0.0
      %1794 = vmatpush.msra.mxu0 0.0
      %1795 = vmatpush.msra.mxu0 0.0
      %1796 = vmatpush.msra.mxu0 0.0
      %1797 = vmatpush.msra.mxu0 0.0
      %1798 = vmatpush.msra.mxu0 0.0
      %1799 = vmatpush.msra.mxu0 0.0
      %1800 = vmatpush.msra.mxu0 0.0
      %1801 = vmatpush.msra.mxu0 0.0
      %1802 = vmatpush.msra.mxu0 0.0
      %1803 = vmatpush.msra.mxu0 %v1786
      %1804 = vmatmul.f32.gmra.mxu0 %v1738
      %v1805 = vpop.f32.mrf.mxu0
      %v1806 = vadd.f32 0.0, %v1805
      %1807 = vmatmul.f32.gmra.mxu0 %v1741
      %v1808 = vpop.f32.mrf.mxu0
      %v1809 = vadd.f32 0.0, %v1808
      %1810 = vmatmul.f32.gmra.mxu0 %v1744
      %v1811 = vpop.f32.mrf.mxu0
      %v1812 = vadd.f32 0.0, %v1811
      %1813 = vmatmul.f32.gmra.mxu0 %v1747
      %v1814 = vpop.f32.mrf.mxu0
      %v1815 = vadd.f32 0.0, %v1814
      %1816 = vmatmul.f32.gmra.mxu0 %v1750
      %v1817 = vpop.f32.mrf.mxu0
      %v1818 = vadd.f32 0.0, %v1817
      %1819 = vmatmul.f32.gmra.mxu0 %v1753
      %v1820 = vpop.f32.mrf.mxu0
      %v1821 = vadd.f32 0.0, %v1820
      %1822 = vmatmul.f32.gmra.mxu0 %v1756
      %v1823 = vpop.f32.mrf.mxu0
      %v1824 = vadd.f32 0.0, %v1823
      %1825 = vmatmul.f32.gmra.mxu0 %v1759
      %v1826 = vpop.f32.mrf.mxu0
      %v1827 = vadd.f32 0.0, %v1826
      %1828 = vmatmul.f32.gmra.mxu0 %v1762
      %v1829 = vpop.f32.mrf.mxu0
      %v1830 = vadd.f32 0.0, %v1829
      %1831 = vmatmul.f32.gmra.mxu0 %v1765
      %v1832 = vpop.f32.mrf.mxu0
      %v1833 = vadd.f32 0.0, %v1832
      %1834 = vmatmul.f32.gmra.mxu0 %v1768
      %v1835 = vpop.f32.mrf.mxu0
      %v1836 = vadd.f32 0.0, %v1835
      %1837 = vmatmul.f32.gmra.mxu0 %v1771
      %v1838 = vpop.f32.mrf.mxu0
      %v1839 = vadd.f32 0.0, %v1838
      %1840 = vmatmul.f32.gmra.mxu0 %v1774
      %v1841 = vpop.f32.mrf.mxu0
      %v1842 = vadd.f32 0.0, %v1841
      %1843 = vmatmul.f32.gmra.mxu0 %v1777
      %v1844 = vpop.f32.mrf.mxu0
      %v1845 = vadd.f32 0.0, %v1844
      %1846 = vmatmul.f32.gmra.mxu0 %v1780
      %v1847 = vpop.f32.mrf.mxu0
      %v1848 = vadd.f32 0.0, %v1847
      %1849 = vmatmul.f32.gmra.mxu0 %v1783
      %v1850 = vpop.f32.mrf.mxu0
      %v1851 = vadd.f32 0.0, %v1850
      %1852 = vdwg.mxu0
      %v1853 = vadd.f32 %v1702, %v1806
      %v1854 = vadd.f32 %v1703, %v1809
      %v1855 = vadd.f32 %v1704, %v1812
      %v1856 = vadd.f32 %v1705, %v1815
      %v1857 = vadd.f32 %v1706, %v1818
      %v1858 = vadd.f32 %v1707, %v1821
      %v1859 = vadd.f32 %v1708, %v1824
      %v1860 = vadd.f32 %v1709, %v1827
      %v1861 = vadd.f32 %v1710, %v1830
      %v1862 = vadd.f32 %v1711, %v1833
      %v1863 = vadd.f32 %v1712, %v1836
      %v1864 = vadd.f32 %v1713, %v1839
      %v1865 = vadd.f32 %v1714, %v1842
      %v1866 = vadd.f32 %v1715, %v1845
      %v1867 = vadd.f32 %v1716, %v1848
      %v1868 = vadd.f32 %v1717, %v1851
      %s1869 = sadd.s32 %s1549, 1
      %s1870 = scalar_lea.vmem %s183, %s1869
      %v1871 = vld [vmem:[%s1870] sm:$0xff]
      %v1872 = vld [vmem:[%s1870 + $0x8] sm:$0xff]
      %v1873 = vld [vmem:[%s1870 + $0x10] sm:$0xff]
      %v1874 = vld [vmem:[%s1870 + $0x18] sm:$0xff]
      %v1875 = vld [vmem:[%s1870 + $0x20] sm:$0xff]
      %v1876 = vld [vmem:[%s1870 + $0x28] sm:$0xff]
      %v1877 = vld [vmem:[%s1870 + $0x30] sm:$0xff]
      %v1878 = vld [vmem:[%s1870 + $0x38] sm:$0xff]
      %v1879 = vld [vmem:[%s1870 + $0x40] sm:$0xff]
      %v1880 = vld [vmem:[%s1870 + $0x48] sm:$0xff]
      %v1881 = vld [vmem:[%s1870 + $0x50] sm:$0xff]
      %v1882 = vld [vmem:[%s1870 + $0x58] sm:$0xff]
      %v1883 = vld [vmem:[%s1870 + $0x60] sm:$0xff]
      %v1884 = vld [vmem:[%s1870 + $0x68] sm:$0xff]
      %v1885 = vld [vmem:[%s1870 + $0x70] sm:$0xff]
      %v1886 = vld [vmem:[%s1870 + $0x78] sm:$0xff]
      %v1887 = vsel %vm893, %v1871, 0.0
      %v1888 = vsel %vm894, %v1872, 0.0
      %v1889 = vsel %vm895, %v1873, 0.0
      %v1890 = vsel %vm896, %v1874, 0.0
      %v1891 = vsel %vm897, %v1875, 0.0
      %v1892 = vsel %vm898, %v1876, 0.0
      %v1893 = vsel %vm899, %v1877, 0.0
      %v1894 = vsel %vm900, %v1878, 0.0
      %v1895 = vsel %vm901, %v1879, 0.0
      %v1896 = vsel %vm902, %v1880, 0.0
      %v1897 = vsel %vm903, %v1881, 0.0
      %v1898 = vsel %vm904, %v1882, 0.0
      %v1899 = vsel %vm905, %v1883, 0.0
      %v1900 = vsel %vm906, %v1884, 0.0
      %v1901 = vsel %vm907, %v1885, 0.0
      %v1902 = vsel %vm908, %v1886, 0.0
      %s1903 = scalar_lea.vmem %s1, 32
      %v1904 = vld [vmem:[%s1903] sm:$0xf]
      %v1906 = vsel %vm526, %v1887, 0
      %v1909 = vsel %vm526, %v1888, 0
      %v1912 = vsel %vm526, %v1889, 0
      %v1915 = vsel %vm526, %v1890, 0
      %v1918 = vsel %vm526, %v1891, 0
      %v1921 = vsel %vm526, %v1892, 0
      %v1924 = vsel %vm526, %v1893, 0
      %v1927 = vsel %vm526, %v1894, 0
      %v1930 = vsel %vm526, %v1895, 0
      %v1933 = vsel %vm526, %v1896, 0
      %v1936 = vsel %vm526, %v1897, 0
      %v1939 = vsel %vm526, %v1898, 0
      %v1942 = vsel %vm526, %v1899, 0
      %v1945 = vsel %vm526, %v1900, 0
      %v1948 = vsel %vm526, %v1901, 0
      %v1951 = vsel %vm526, %v1902, 0
      %v1954 = vsel %vm575, %v1904, 0
      %1956 = vmatpush.msra.mxu0 0.0
      %1957 = vmatpush.msra.mxu0 0.0
      %1958 = vmatpush.msra.mxu0 0.0
      %1959 = vmatpush.msra.mxu0 0.0
      %1960 = vmatpush.msra.mxu0 0.0
      %1961 = vmatpush.msra.mxu0 0.0
      %1962 = vmatpush.msra.mxu0 0.0
      %1963 = vmatpush.msra.mxu0 0.0
      %1964 = vmatpush.msra.mxu0 0.0
      %1965 = vmatpush.msra.mxu0 0.0
      %1966 = vmatpush.msra.mxu0 0.0
      %1967 = vmatpush.msra.mxu0 0.0
      %1968 = vmatpush.msra.mxu0 0.0
      %1969 = vmatpush.msra.mxu0 0.0
      %1970 = vmatpush.msra.mxu0 0.0
      %1971 = vmatpush.msra.mxu0 %v1954
      %1972 = vmatmul.f32.gmra.mxu0 %v1906
      %v1973 = vpop.f32.mrf.mxu0
      %v1974 = vadd.f32 0.0, %v1973
      %1975 = vmatmul.f32.gmra.mxu0 %v1909
      %v1976 = vpop.f32.mrf.mxu0
      %v1977 = vadd.f32 0.0, %v1976
      %1978 = vmatmul.f32.gmra.mxu0 %v1912
      %v1979 = vpop.f32.mrf.mxu0
      %v1980 = vadd.f32 0.0, %v1979
      %1981 = vmatmul.f32.gmra.mxu0 %v1915
      %v1982 = vpop.f32.mrf.mxu0
      %v1983 = vadd.f32 0.0, %v1982
      %1984 = vmatmul.f32.gmra.mxu0 %v1918
      %v1985 = vpop.f32.mrf.mxu0
      %v1986 = vadd.f32 0.0, %v1985
      %1987 = vmatmul.f32.gmra.mxu0 %v1921
      %v1988 = vpop.f32.mrf.mxu0
      %v1989 = vadd.f32 0.0, %v1988
      %1990 = vmatmul.f32.gmra.mxu0 %v1924
      %v1991 = vpop.f32.mrf.mxu0
      %v1992 = vadd.f32 0.0, %v1991
      %1993 = vmatmul.f32.gmra.mxu0 %v1927
      %v1994 = vpop.f32.mrf.mxu0
      %v1995 = vadd.f32 0.0, %v1994
      %1996 = vmatmul.f32.gmra.mxu0 %v1930
      %v1997 = vpop.f32.mrf.mxu0
      %v1998 = vadd.f32 0.0, %v1997
      %1999 = vmatmul.f32.gmra.mxu0 %v1933
      %v2000 = vpop.f32.mrf.mxu0
      %v2001 = vadd.f32 0.0, %v2000
      %2002 = vmatmul.f32.gmra.mxu0 %v1936
      %v2003 = vpop.f32.mrf.mxu0
      %v2004 = vadd.f32 0.0, %v2003
      %2005 = vmatmul.f32.gmra.mxu0 %v1939
      %v2006 = vpop.f32.mrf.mxu0
      %v2007 = vadd.f32 0.0, %v2006
      %2008 = vmatmul.f32.gmra.mxu0 %v1942
      %v2009 = vpop.f32.mrf.mxu0
      %v2010 = vadd.f32 0.0, %v2009
      %2011 = vmatmul.f32.gmra.mxu0 %v1945
      %v2012 = vpop.f32.mrf.mxu0
      %v2013 = vadd.f32 0.0, %v2012
      %2014 = vmatmul.f32.gmra.mxu0 %v1948
      %v2015 = vpop.f32.mrf.mxu0
      %v2016 = vadd.f32 0.0, %v2015
      %2017 = vmatmul.f32.gmra.mxu0 %v1951
      %v2018 = vpop.f32.mrf.mxu0
      %v2019 = vadd.f32 0.0, %v2018
      %2020 = vdwg.mxu0
      %v2021 = vadd.f32 %v1853, %v1974
      %v2022 = vadd.f32 %v1854, %v1977
      %v2023 = vadd.f32 %v1855, %v1980
      %v2024 = vadd.f32 %v1856, %v1983
      %v2025 = vadd.f32 %v1857, %v1986
      %v2026 = vadd.f32 %v1858, %v1989
      %v2027 = vadd.f32 %v1859, %v1992
      %v2028 = vadd.f32 %v1860, %v1995
      %v2029 = vadd.f32 %v1861, %v1998
      %v2030 = vadd.f32 %v1862, %v2001
      %v2031 = vadd.f32 %v1863, %v2004
      %v2032 = vadd.f32 %v1864, %v2007
      %v2033 = vadd.f32 %v1865, %v2010
      %v2034 = vadd.f32 %v1866, %v2013
      %v2035 = vadd.f32 %v1867, %v2016
      %v2036 = vadd.f32 %v1868, %v2019
      %vm2037 = vcmask 130048
      %2038 = vst.msk [vmem:[%s192] sm:$0xff] %vm2037, %v2021
      %2039 = vst.msk [vmem:[%s192 + $0x8] sm:$0xff] %vm2037, %v2022
      %2040 = vst.msk [vmem:[%s192 + $0x10] sm:$0xff] %vm2037, %v2023
      %2041 = vst.msk [vmem:[%s192 + $0x18] sm:$0xff] %vm2037, %v2024
      %2042 = vst.msk [vmem:[%s192 + $0x20] sm:$0xff] %vm2037, %v2025
      %2043 = vst.msk [vmem:[%s192 + $0x28] sm:$0xff] %vm2037, %v2026
      %2044 = vst.msk [vmem:[%s192 + $0x30] sm:$0xff] %vm2037, %v2027
      %2045 = vst.msk [vmem:[%s192 + $0x38] sm:$0xff] %vm2037, %v2028
      %2046 = vst.msk [vmem:[%s192 + $0x40] sm:$0xff] %vm2037, %v2029
      %2047 = vst.msk [vmem:[%s192 + $0x48] sm:$0xff] %vm2037, %v2030
      %2048 = vst.msk [vmem:[%s192 + $0x50] sm:$0xff] %vm2037, %v2031
      %2049 = vst.msk [vmem:[%s192 + $0x58] sm:$0xff] %vm2037, %v2032
      %2050 = vst.msk [vmem:[%s192 + $0x60] sm:$0xff] %vm2037, %v2033
      %2051 = vst.msk [vmem:[%s192 + $0x68] sm:$0xff] %vm2037, %v2034
      %2052 = vst.msk [vmem:[%s192 + $0x70] sm:$0xff] %vm2037, %v2035
      %2053 = vst.msk [vmem:[%s192 + $0x78] sm:$0xff] %vm2037, %v2036
      %s2054 = smul.u32 16, %s19
      %p2055 = scmp.lt.s32.totalorder %s18, 1
      %s2056 = scalar_select %p2055, %s18, 1
      %p2057 = scmp.lt.s32.totalorder %s2054, 31
      %s2058 = scalar_select %p2057, %s2054, 31
      %s2059 = smul.addr %s2056, 32
      %s2060 = sadd.s32 %s2058, %s2059
      %s2061 = smul.addr %s2060, 8
      %s2062 = scalar_lea.vmem %s3, %s2061
      // Predicated region
      $region33: #{scconv_forward.4} parent=31 // pred_check
        %p2063 = pneg %p114
      $region34: #{scconv_forward.4} parent=31 // pred_check_branch
        %2065 = sbr.rel (%p2063) target = $region36
      $region35: #{scconv_forward.4} parent=31 // pred_region
        %s2066 = smul.u32 16, %s19
      $region36: #{scconv_forward.4} parent=31 // pred_fallthru
        _
    $region32: #{scconv_forward.4} parent=5 // pred_fallthru
      _
    %p2067 = scmp.le.s32.totalorder 2, %s9
    // Predicated region
    $region37: #{scconv_forward.4} parent=5 // pred_check
      %p2068 = pneg %p2067
    $region38: #{scconv_forward.4} parent=5 // pred_check_branch
      %2070 = sbr.rel (%p2068) target = $region40
    $region39: #{scconv_forward.4} parent=5 // pred_region
      %s2071 = ssub.s32 %s9, 2
      // Predicated region
      $region41: #{scconv_forward.4} parent=39 // pred_check
        %p2072 = pneg %p120
      $region42: #{scconv_forward.4} parent=39 // pred_check_branch
        %2074 = sbr.rel (%p2072) target = $region44
      $region43: #{scconv_forward.4} parent=39 // pred_region
        %s2075 = smul.u32 16, %s21
        %p2076 = scmp.lt.s32.totalorder %s20, 1
        %s2077 = scalar_select %p2076, %s20, 1
        %p2078 = scmp.lt.s32.totalorder %s2075, 31
        %s2079 = scalar_select %p2078, %s2075, 31
        %s2080 = smul.addr %s2077, 32
        %s2081 = sadd.s32 %s2079, %s2080
        %s2082 = smul.addr %s2081, 8
        %s2083 = scalar_lea.vmem %s3, %s2082
      $region44: #{scconv_forward.4} parent=39 // pred_fallthru
        _
    $region40: #{scconv_forward.4} parent=5 // pred_fallthru
      _
  $region6: #{scconv_forward.4} parent=0 // loop_footer
    %s13 = sadd.s32 1, %s9
  $region7: #{scconv_forward.4} parent=0 // loop_footer_branch
    %8 = sbr.rel target = $region3
  $region8: #{scconv_forward.4} parent=0 // loop_exit
    _

</llo_original>
